<compile_context>
chip_gen: v6e
topology: v6e:2x2x1
jax: 0.10.0
libtpu: 0.0.40
codegen_flags: <defaults>
</compile_context>

<pallas_src>
import jax
import jax.numpy as jnp
from jax.experimental import pallas as pl
from jax.experimental.pallas import tpu as pltpu

D_IN = 768          # sentence-bert embedding dim
D_HID = 768 * 4     # 3072
D_OUT = 5           # number of task classes
TK = 1536           # hidden-dim chunk streamed per grid step
N_PARALLEL = 2      # leading parallel grid axis (uses both TCs on v7x)


def _head_kernel(x_ref, w1_ref, b1_ref, w2_ref, o_ref):
    """One grid step: o += relu(x @ W1[:, chunk] + b1[chunk]) @ W2[chunk, :]."""
    k = pl.program_id(1)
    tk = w1_ref.shape[1]

    @pl.when(k == 0)
    def _():
        o_ref[...] = jnp.zeros_like(o_ref)

    # First matmul on the MXU in the weight dtype (bf16 weights halve the HBM
    # traffic that dominates this kernel); accumulate in f32.
    h = jnp.dot(x_ref[...].astype(w1_ref.dtype), w1_ref[...],
                preferred_element_type=jnp.float32)
    h = jnp.maximum(h + b1_ref[...], 0.0)          # bias + ReLU in f32 (v5e-safe)

    # Second matmul reduces over this hidden chunk; W2 is fully resident, so
    # just take the matching row window (sublane-dim dynamic slice).
    chunk = pl.program_id(0) * pl.num_programs(1) + k
    row0 = pl.multiple_of(chunk * tk, 8)
    o_ref[...] += jnp.dot(h, w2_ref[pl.ds(row0, tk), :],
                          preferred_element_type=jnp.float32)


def task_router_head(x_embed, w1, b1, w2, b2, *, tk=TK, n_parallel=N_PARALLEL):
    """x_embed: (B, 768); w1: (768, 3072); b1: (1, 3072); w2: (3072, 5);
    b2: (1, 5).  Returns logits (B, 5) f32."""
    B = x_embed.shape[0]
    assert D_HID % (n_parallel * tk) == 0
    nk = D_HID // (n_parallel * tk)

    partials = pl.pallas_call(
        _head_kernel,
        out_shape=jax.ShapeDtypeStruct((n_parallel, B, D_OUT), jnp.float32),
        grid_spec=pltpu.PrefetchScalarGridSpec(
            num_scalar_prefetch=0,
            grid=(n_parallel, nk),
            in_specs=[
                pl.BlockSpec((B, D_IN), lambda p, k: (0, 0)),            # x: resident
                pl.BlockSpec((D_IN, tk), lambda p, k: (0, p * nk + k)),  # W1 chunk (streamed)
                pl.BlockSpec((1, tk), lambda p, k: (0, p * nk + k)),     # b1 chunk
                pl.BlockSpec((D_HID, D_OUT), lambda p, k: (0, 0)),       # W2: resident
            ],
            out_specs=pl.BlockSpec((None, B, D_OUT), lambda p, k: (p, 0, 0)),
        ),
        compiler_params=pltpu.CompilerParams(
            dimension_semantics=("parallel", "arbitrary"),
            vmem_limit_bytes=24 * 1024 * 1024,
        ),
    )(x_embed, w1, b1, w2)

    # Tiny epilogue in plain JAX: sum per-slot partials and add the final bias.
    return partials.sum(axis=0) + b2


def task_router_head_ref(x_embed, w1, b1, w2, b2):
    h = jnp.dot(x_embed.astype(w1.dtype), w1, preferred_element_type=jnp.float32)
    h = jnp.maximum(h + b1, 0.0)
    return jnp.dot(h, w2, preferred_element_type=jnp.float32) + b2


if __name__ == "__main__":
    key = jax.random.PRNGKey(0)
    k_x, k_w1, k_b1, k_w2, k_b2 = jax.random.split(key, 5)

    B = 8  # small batch of "sentences" (pre-embedded)
    # Stand-in for SentenceTransformer embeddings: (B, 768)
    x_embed = jax.random.normal(k_x, (B, D_IN), dtype=jnp.float32)

    # Deterministic synthetic head parameters (nn.Linear-like scale).
    w1 = jax.random.normal(k_w1, (D_IN, D_HID), dtype=jnp.float32) * (1.0 / D_IN) ** 0.5
    b1 = jax.random.normal(k_b1, (1, D_HID), dtype=jnp.float32) * 0.02
    w2 = jax.random.normal(k_w2, (D_HID, D_OUT), dtype=jnp.float32) * (1.0 / D_HID) ** 0.5
    b2 = jax.random.normal(k_b2, (1, D_OUT), dtype=jnp.float32) * 0.02

    # --- exact f32 path (original PyTorch semantics) ---
    logits_f32 = jax.block_until_ready(task_router_head(x_embed, w1, b1, w2, b2))
    ref_f32 = task_router_head_ref(x_embed, w1, b1, w2, b2)
    assert logits_f32.shape == (B, D_OUT)
    assert jnp.allclose(logits_f32, ref_f32, atol=1e-4, rtol=1e-4), (
        f"f32 max abs err = {jnp.max(jnp.abs(logits_f32 - ref_f32))}"
    )

    # --- optimized path: bf16 storage for the big streamed W1 (halves HBM traffic) ---
    w1_bf16 = w1.astype(jnp.bfloat16)
    logits = jax.block_until_ready(task_router_head(x_embed, w1_bf16, b1, w2, b2))
    ref = task_router_head_ref(x_embed, w1_bf16, b1, w2, b2)
    assert logits.shape == (B, D_OUT)
    assert jnp.allclose(logits, ref, atol=1e-2, rtol=1e-2), (
        f"bf16 max abs err = {jnp.max(jnp.abs(logits - ref))}"
    )

    # router(): argmax over logits (glue, plain JAX)
    _routes = jax.block_until_ready(jnp.argmax(logits, axis=-1))

    print("KERNEL_OK")
</pallas_src>

<mosaic_0001>
module attributes {stable_mosaic.version = 11 : i64} {
  func.func @_head_kernel(%arg0: i32, %arg1: i32, %arg2: memref<8x768xf32, #tpu.memory_space<vmem>>, %arg3: memref<768x1536xf32, #tpu.memory_space<vmem>>, %arg4: memref<1x1536xf32, #tpu.memory_space<vmem>>, %arg5: memref<3072x5xf32, #tpu.memory_space<vmem>>, %arg6: memref<1x8x5xf32, #tpu.memory_space<vmem>>) attributes {dimension_semantics = [#tpu.dimension_semantics<parallel>, #tpu.dimension_semantics<arbitrary>], iteration_bounds = array<i64: 2, 1>, scalar_prefetch = 0 : i64, scratch_operands = 0 : i64, tpu.core_type = #tpu.core_type<tc>, window_params = [{pipeline_mode = #tpu.pipeline_mode<synchronous>, transform_indices = @transform_0, window_bounds = array<i64: 8, 768>}, {transform_indices = @transform_1, window_bounds = array<i64: 768, 1536>}, {transform_indices = @transform_2, window_bounds = array<i64: 1, 1536>}, {pipeline_mode = #tpu.pipeline_mode<synchronous>, transform_indices = @transform_3, window_bounds = array<i64: 3072, 5>}, {transform_indices = @transform_4, window_bounds = array<i64: 1, 8, 5>}]} {
    %c0_i32 = arith.constant 0 : i32
    %0 = arith.cmpi eq, %arg1, %c0_i32 : i32
    %1 = arith.extui %0 : i1 to i32
    %c0_i32_0 = arith.constant 0 : i32
    %2 = arith.cmpi ne, %1, %c0_i32_0 : i32
    scf.if %2 {
      %cst_15 = arith.constant 0.000000e+00 : f32
      %24 = vector.broadcast %cst_15 : f32 to vector<8x5xf32>
      %c0_16 = arith.constant 0 : index
      %c0_17 = arith.constant 0 : index
      %c0_18 = arith.constant 0 : index
      %25 = vector.load %arg6[%c0_16, %c0_17, %c0_18] : memref<1x8x5xf32, #tpu.memory_space<vmem>>, vector<1x8x5xf32>
      %26 = vector.shape_cast %25 : vector<1x8x5xf32> to vector<8x5xf32>
      %27 = vector.shape_cast %24 : vector<8x5xf32> to vector<1x8x5xf32>
      tpu.vector_store %arg6[%c0_16, %c0_17, %c0_18], %27 {strides = array<i32>} : memref<1x8x5xf32, #tpu.memory_space<vmem>>, vector<1x8x5xf32>,
    } else {
    }
    %c0 = arith.constant 0 : index
    %c0_1 = arith.constant 0 : index
    %3 = vector.load %arg2[%c0, %c0_1] : memref<8x768xf32, #tpu.memory_space<vmem>>, vector<8x768xf32>
    %c0_2 = arith.constant 0 : index
    %c0_3 = arith.constant 0 : index
    %4 = vector.load %arg3[%c0_2, %c0_3] : memref<768x1536xf32, #tpu.memory_space<vmem>>, vector<768x1536xf32>
    %cst = arith.constant dense<0.000000e+00> : vector<8x1536xf32>
    %5 = tpu.matmul %3, %4, %cst {dimension_numbers = #tpu.dot_dimension_numbers<[1], [0], [0], [1], [0, 0, 1, 1], [], []>} : vector<8x768xf32>, vector<768x1536xf32>, vector<8x1536xf32> -> vector<8x1536xf32>
    %c0_4 = arith.constant 0 : index
    %c0_5 = arith.constant 0 : index
    %6 = vector.load %arg4[%c0_4, %c0_5] : memref<1x1536xf32, #tpu.memory_space<vmem>>, vector<1x1536xf32>
    %7 = vector.broadcast %6 : vector<1x1536xf32> to vector<8x1536xf32>
    %8 = arith.addf %5, %7 : vector<8x1536xf32>
    %cst_6 = arith.constant 0.000000e+00 : f32
    %9 = vector.broadcast %cst_6 : f32 to vector<8x1536xf32>
    %10 = arith.maximumf %8, %9 : vector<8x1536xf32>
    %c1_i32 = arith.constant 1 : i32
    %11 = arith.muli %arg0, %c1_i32 : i32
    %12 = arith.addi %11, %arg1 : i32
    %c1536_i32 = arith.constant 1536 : i32
    %13 = arith.muli %12, %c1536_i32 : i32
    %14 = tpu.assume_multiple %13, 8 : i32
    %c0_7 = arith.constant 0 : index
    %c0_8 = arith.constant 0 : index
    %c0_9 = arith.constant 0 : index
    %15 = vector.load %arg6[%c0_7, %c0_8, %c0_9] : memref<1x8x5xf32, #tpu.memory_space<vmem>>, vector<1x8x5xf32>
    %16 = vector.shape_cast %15 : vector<1x8x5xf32> to vector<8x5xf32>
    %17 = arith.index_cast %14 : i32 to index
    %c0_10 = arith.constant 0 : index
    %18 = vector.load %arg5[%17, %c0_10] : memref<3072x5xf32, #tpu.memory_space<vmem>>, vector<1536x5xf32>
    %cst_11 = arith.constant dense<0.000000e+00> : vector<8x5xf32>
    %19 = tpu.matmul %10, %18, %cst_11 {dimension_numbers = #tpu.dot_dimension_numbers<[1], [0], [0], [1], [0, 0, 1, 1], [], []>} : vector<8x1536xf32>, vector<1536x5xf32>, vector<8x5xf32> -> vector<8x5xf32>
    %20 = arith.addf %16, %19 : vector<8x5xf32>
    %c0_12 = arith.constant 0 : index
    %c0_13 = arith.constant 0 : index
    %c0_14 = arith.constant 0 : index
    %21 = vector.load %arg6[%c0_12, %c0_13, %c0_14] : memref<1x8x5xf32, #tpu.memory_space<vmem>>, vector<1x8x5xf32>
    %22 = vector.shape_cast %21 : vector<1x8x5xf32> to vector<8x5xf32>
    %23 = vector.shape_cast %20 : vector<8x5xf32> to vector<1x8x5xf32>
    tpu.vector_store %arg6[%c0_12, %c0_13, %c0_14], %23 {strides = array<i32>} : memref<1x8x5xf32, #tpu.memory_space<vmem>>, vector<1x8x5xf32>,
    return
  }
  func.func @transform_0(%arg0: i32, %arg1: i32) -> (i32, i32) {
    %c0_i32 = arith.constant 0 : i32
    %c0_i32_0 = arith.constant 0 : i32
    %c0_i32_1 = arith.constant 0 : i32
    return %c0_i32, %c0_i32_0 : i32, i32
  }
  func.func @transform_1(%arg0: i32, %arg1: i32) -> (i32, i32) {
    %c1_i32 = arith.constant 1 : i32
    %0 = arith.muli %arg0, %c1_i32 : i32
    %1 = arith.addi %0, %arg1 : i32
    %c0_i32 = arith.constant 0 : i32
    %c0_i32_0 = arith.constant 0 : i32
    return %c0_i32, %1 : i32, i32
  }
  func.func @transform_2(%arg0: i32, %arg1: i32) -> (i32, i32) {
    %c1_i32 = arith.constant 1 : i32
    %0 = arith.muli %arg0, %c1_i32 : i32
    %1 = arith.addi %0, %arg1 : i32
    %c0_i32 = arith.constant 0 : i32
    %c0_i32_0 = arith.constant 0 : i32
    return %c0_i32, %1 : i32, i32
  }
  func.func @transform_3(%arg0: i32, %arg1: i32) -> (i32, i32) {
    %c0_i32 = arith.constant 0 : i32
    %c0_i32_0 = arith.constant 0 : i32
    %c0_i32_1 = arith.constant 0 : i32
    return %c0_i32, %c0_i32_0 : i32, i32
  }
  func.func @transform_4(%arg0: i32, %arg1: i32) -> (i32, i32, i32) {
    %c0_i32 = arith.constant 0 : i32
    %c0_i32_0 = arith.constant 0 : i32
    %c0_i32_1 = arith.constant 0 : i32
    return %arg0, %c0_i32, %c0_i32_0 : i32, i32, i32
  }
}

</mosaic_0001>

<llo_original>
// kernel: tpu_custom_call.1
$region0: #{tpu_custom_call.1}
  #allocation0 [shape = 'u32[]', space=smem, size = 0x4, offset = 0x4, fixed_abs, tag = 'smem constant byte address 0x4 - core index']
  #allocation1 [shape = 'u32[144,128]{1,0:T(1,128)}', space=vmem, size = 0x12000, scoped, tag = 'internal scratch']
  %s0 = inlined_call_operand.hbm [shape: f32[8,768], index: 0, kind: input, shape index: {}]
  %s1 = inlined_call_operand.hbm [shape: f32[768,3072], index: 1, kind: input, shape index: {}]
  %s2 = inlined_call_operand.hbm [shape: f32[1,3072], index: 2, kind: input, shape index: {}]
  %s3 = inlined_call_operand.vmem [shape: f32[3072,5], index: 3, kind: input, shape index: {}]
  %s4 = inlined_call_operand.vmem [shape: f32[2,8,5], index: 4, kind: output, shape index: {}]
  %s5 = sld [smem:[#allocation0]]
  $region65: #{tpu_custom_call.1} parent=0
    _
  %s7 = ssub.s32 1, %s5
  %s8 = scalar_select 0, %s7, %s5
  $region1: #{tpu_custom_call.1} parent=0
    #allocation2 [shape = 'u8[24576]{0}', space=vmem, size = 0x6000, scoped, tag = 'input window, operand 0, single buffered']
    #allocation3 [shape = 's32[2]{0}', space=sflag, size = 0x8, scoped, tag = 'scoped memory for tpu_custom_call.1']
    #allocation4 [shape = 'u8[9437184]{0}', space=vmem, size = 0x900000, scoped, tag = 'input window, operand 1']
    #allocation5 [shape = 's32[2]{0}', space=sflag, size = 0x8, scoped, tag = 'scoped memory for tpu_custom_call.1']
    #allocation6 [shape = 'u8[12288]{0}', space=vmem, size = 0x3000, scoped, tag = 'input window, operand 2']
    %9 = vsyncpa [#allocation3], 0
    %10 = vsyncpa [#allocation5], 0
    %s11 = scalar_lea.sflag [#allocation5], 1
    %12 = vsyncpa %s11, 0
    loop: start=0, step=1, limit=4
    $region2: #{tpu_custom_call.1} parent=1 // loop_pre_header
      _
    $region3: #{tpu_custom_call.1} parent=1 // loop_header
      %s14 = sphi 0, %s18
      %p15 = scmp.ge.s32.totalorder %s14, 4
      %s21 = sphi 0, %s33
      %s22 = sphi 0, %s29
      %s23 = sphi 0, %s21
      %s24 = sphi 0, %s22
      %s25 = sphi 0, %s23
      %s26 = sphi 0, %s24
      %s34 = sphi 0, %s34
      %s36 = sphi 0, %s34
      %s37 = sphi 0, %s36
      %s51 = sphi 0, %s37
      %s59 = sphi 0, %s61
      %s62 = sphi 0, %s59
      %s63 = sphi 0, %s62
      %s79 = sphi 0, %s63
      %s87 = sphi 0, %s89
      %s90 = sphi 0, %s87
      %s91 = sphi 0, %s90
      %s107 = sphi 0, %s91
      %s111 = sphi 0, %s111
      %s113 = sphi 0, %s111
      %s114 = sphi 0, %s113
      %s128 = sphi 0, %s114
      %s134 = sphi 0, %s136
      %s137 = sphi 0, %s134
      %s138 = sphi 0, %s137
      %s154 = sphi 0, %s138
    $region4: #{tpu_custom_call.1} parent=1 // loop_header_branch
      %17 = sbr.rel (%p15) target = $region8
    $region5: #{tpu_custom_call.1} parent=1 // loop_body
      %s19 = ssub.s32 %s14, 1
      %s20 = ssub.s32 %s14, 2
      %s27 = sadd.s32 1, %s22
      %p28 = scmp.ge.s32.totalorder %s27, 1
      %s29 = scalar_select %p28, 0, %s27
      %s30 = sadd.s32 1, %s21
      %s31 = scalar_select %p28, %s30, %s21
      %p32 = scmp.ge.s32.totalorder %s31, 2
      %s33 = scalar_select %p32, 0, %s31
      %s35 = sadd.s32 %s34, 1
      %p38 = scmp.eq.s32.totalorder %s14, 1
      %p39 = scmp.ne.s32.totalorder %s34, %s36
      %p40 = scmp.eq.s32.totalorder %s14, 0
      %p41 = por %p39, %p40
      %p42 = scmp.ne.s32.totalorder %s34, %s36
      %p43 = scmp.eq.s32.totalorder %s19, 1
      %p44 = por %p42, %p43
      %p45 = scmp.ne.s32.totalorder %s36, %s37
      %p46 = scmp.eq.s32.totalorder %s19, 0
      %p47 = por %p45, %p46
      %p48 = scmp.ne.s32.totalorder %s36, %s37
      %p49 = scmp.eq.s32.totalorder %s20, 1
      %p50 = por %p48, %p49
      %p52 = scmp.ne.s32.totalorder %s37, %s51
      %p53 = scmp.eq.s32.totalorder %s20, 0
      %p54 = por %p52, %p53
      %s55 = sadd.s32 %s21, %s22
      %s56 = sadd.s32 %s33, %s29
      %s57 = ssub.s32 %s55, %s56
      %p58 = scmp.eq.s32.totalorder %s57, 0
      %s60 = sadd.s32 %s59, 1
      %s61 = scalar_select %p58, %s59, %s60
      %p64 = pneg %p58
      %p65 = scmp.eq.s32.totalorder %s14, 1
      %p66 = por %p64, %p65
      %p67 = scmp.ne.s32.totalorder %s59, %s62
      %p68 = scmp.eq.s32.totalorder %s14, 0
      %p69 = por %p67, %p68
      %p70 = scmp.ne.s32.totalorder %s59, %s62
      %p71 = scmp.eq.s32.totalorder %s19, 1
      %p72 = por %p70, %p71
      %p73 = scmp.ne.s32.totalorder %s62, %s63
      %p74 = scmp.eq.s32.totalorder %s19, 0
      %p75 = por %p73, %p74
      %p76 = scmp.ne.s32.totalorder %s62, %s63
      %p77 = scmp.eq.s32.totalorder %s20, 1
      %p78 = por %p76, %p77
      %p80 = scmp.ne.s32.totalorder %s63, %s79
      %p81 = scmp.eq.s32.totalorder %s20, 0
      %p82 = por %p80, %p81
      %s83 = sadd.s32 %s21, %s22
      %s84 = sadd.s32 %s33, %s29
      %s85 = ssub.s32 %s83, %s84
      %p86 = scmp.eq.s32.totalorder %s85, 0
      %s88 = sadd.s32 %s87, 1
      %s89 = scalar_select %p86, %s87, %s88
      %p92 = pneg %p86
      %p93 = scmp.eq.s32.totalorder %s14, 1
      %p94 = por %p92, %p93
      %p95 = scmp.ne.s32.totalorder %s87, %s90
      %p96 = scmp.eq.s32.totalorder %s14, 0
      %p97 = por %p95, %p96
      %p98 = scmp.ne.s32.totalorder %s87, %s90
      %p99 = scmp.eq.s32.totalorder %s19, 1
      %p100 = por %p98, %p99
      %p101 = scmp.ne.s32.totalorder %s90, %s91
      %p102 = scmp.eq.s32.totalorder %s19, 0
      %p103 = por %p101, %p102
      %p104 = scmp.ne.s32.totalorder %s90, %s91
      %p105 = scmp.eq.s32.totalorder %s20, 1
      %p106 = por %p104, %p105
      %p108 = scmp.ne.s32.totalorder %s91, %s107
      %p109 = scmp.eq.s32.totalorder %s20, 0
      %p110 = por %p108, %p109
      %s112 = sadd.s32 %s111, 1
      %p115 = scmp.eq.s32.totalorder %s14, 1
      %p116 = scmp.ne.s32.totalorder %s111, %s113
      %p117 = scmp.eq.s32.totalorder %s14, 0
      %p118 = por %p116, %p117
      %p119 = scmp.ne.s32.totalorder %s111, %s113
      %p120 = scmp.eq.s32.totalorder %s19, 1
      %p121 = por %p119, %p120
      %p122 = scmp.ne.s32.totalorder %s113, %s114
      %p123 = scmp.eq.s32.totalorder %s19, 0
      %p124 = por %p122, %p123
      %p125 = scmp.ne.s32.totalorder %s113, %s114
      %p126 = scmp.eq.s32.totalorder %s20, 1
      %p127 = por %p125, %p126
      %p129 = scmp.ne.s32.totalorder %s114, %s128
      %p130 = scmp.eq.s32.totalorder %s20, 0
      %p131 = por %p129, %p130
      %s132 = ssub.s32 %s21, %s33
      %p133 = scmp.eq.s32.totalorder %s132, 0
      %s135 = sadd.s32 %s134, 1
      %s136 = scalar_select %p133, %s134, %s135
      %p139 = pneg %p133
      %p140 = scmp.eq.s32.totalorder %s14, 1
      %p141 = por %p139, %p140
      %p142 = scmp.ne.s32.totalorder %s134, %s137
      %p143 = scmp.eq.s32.totalorder %s14, 0
      %p144 = por %p142, %p143
      %p145 = scmp.ne.s32.totalorder %s134, %s137
      %p146 = scmp.eq.s32.totalorder %s19, 1
      %p147 = por %p145, %p146
      %p148 = scmp.ne.s32.totalorder %s137, %s138
      %p149 = scmp.eq.s32.totalorder %s19, 0
      %p150 = por %p148, %p149
      %p151 = scmp.ne.s32.totalorder %s137, %s138
      %p152 = scmp.eq.s32.totalorder %s20, 1
      %p153 = por %p151, %p152
      %p155 = scmp.ne.s32.totalorder %s138, %s154
      %p156 = scmp.eq.s32.totalorder %s20, 0
      %p157 = por %p155, %p156
      %p158 = scmp.le.s32.totalorder 1, %s14
      %p159 = scmp.lt.s32.totalorder %s14, 3
      %p160 = pnand %p158, %p159
      %p161 = pneg %p160
      // Predicated region
      $region9: #{tpu_custom_call.1} parent=5 // pred_check
        _
      $region10: #{tpu_custom_call.1} parent=5 // pred_check_branch
        %163 = sbr.rel (%p160) target = $region12
      $region11: #{tpu_custom_call.1} parent=5 // pred_region
        %s164 = ssub.s32 %s14, 1
        // Predicated region
        $region13: #{tpu_custom_call.1} parent=11 // pred_check
          %p165 = pneg %p47
        $region14: #{tpu_custom_call.1} parent=11 // pred_check_branch
          %167 = sbr.rel (%p165) target = $region16
        $region15: #{tpu_custom_call.1} parent=11 // pred_region
          %s169 = ssub.s32 768, 768
          %170 = vsyncadd [#allocation3], %s169
          %s172 = sshll.u32 [#allocation2], 4
          %s173 = int_to_ptr.vmem [resolvable:$true] %s172
          %175 = dma.hbm_to_vmem [thread:$0]  %s0, 768, %s173, [#allocation3]
        $region16: #{tpu_custom_call.1} parent=11 // pred_fallthru
          _
        // Predicated region
        $region17: #{tpu_custom_call.1} parent=11 // pred_check
          %p176 = pneg %p124
        $region18: #{tpu_custom_call.1} parent=11 // pred_check_branch
          %178 = sbr.rel (%p176) target = $region20
        $region19: #{tpu_custom_call.1} parent=11 // pred_region
          _
        $region20: #{tpu_custom_call.1} parent=11 // pred_fallthru
          _
      $region12: #{tpu_custom_call.1} parent=5 // pred_fallthru
        _
      %p179 = scmp.lt.s32.totalorder %s14, 2
      // Predicated region
      $region21: #{tpu_custom_call.1} parent=5 // pred_check
        %p180 = pneg %p179
      $region22: #{tpu_custom_call.1} parent=5 // pred_check_branch
        %182 = sbr.rel (%p180) target = $region24
      $region23: #{tpu_custom_call.1} parent=5 // pred_region
        // Predicated region
        $region25: #{tpu_custom_call.1} parent=23 // pred_check
          %p183 = pneg %p69
        $region26: #{tpu_custom_call.1} parent=23 // pred_check_branch
          %185 = sbr.rel (%p183) target = $region28
        $region27: #{tpu_custom_call.1} parent=23 // pred_region
          %s186 = sand.u32 %s14, 1
          %s187 = scalar_lea.sflag [#allocation5], %s186
          %s188 = sand.u32 %s59, 1
          %s189 = smul.addr %s188, 9216
          %s190 = scalar_lea.vmem [#allocation4], %s189
          %s191 = sadd.s32 %s21, %s22
          %s192 = smul.u32 12, %s191
          %s194 = ssub.s32 147456, 147456
          %195 = vsyncadd %s187, %s194
          %s196 = smul.addr %s192, 128
          %s197 = scalar_lea.hbm %s1, %s196
          %s198 = sshll.u32 %s190, 4
          %s199 = int_to_ptr.vmem [resolvable:$true] %s198
          %204 = dma.hbm_to_vmem [thread:$0]  %s197, 147456, %s199, %s187, 3072, 1536, 96
        $region28: #{tpu_custom_call.1} parent=23 // pred_fallthru
          _
        // Predicated region
        $region29: #{tpu_custom_call.1} parent=23 // pred_check
          %p205 = pneg %p97
        $region30: #{tpu_custom_call.1} parent=23 // pred_check_branch
          %207 = sbr.rel (%p205) target = $region32
        $region31: #{tpu_custom_call.1} parent=23 // pred_region
          %s208 = sand.u32 %s14, 1
          %s209 = scalar_lea.sflag [#allocation5], %s208
          %s210 = sand.u32 %s87, 1
          %s211 = smul.addr %s210, 12
          %s212 = scalar_lea.vmem [#allocation6], %s211
          %s213 = sadd.s32 %s21, %s22
          %s214 = smul.u32 12, %s213
          %s216 = ssub.s32 192, 192
          %217 = vsyncadd %s209, %s216
          %s218 = smul.addr %s214, 16
          %s219 = scalar_lea.hbm %s2, %s218
          %s221 = sshll.u32 %s212, 4
          %s222 = int_to_ptr.vmem [resolvable:$true] %s221
          %224 = dma.hbm_to_vmem [thread:$0]  %s219, 192, %s222, %s209
        $region32: #{tpu_custom_call.1} parent=23 // pred_fallthru
          _
      $region24: #{tpu_custom_call.1} parent=5 // pred_fallthru
        _
      %p225 = scmp.le.s32.totalorder 1, %s14
      %p226 = scmp.lt.s32.totalorder %s14, 3
      %p227 = pnand %p225, %p226
      %p228 = pneg %p227
      // Predicated region
      $region33: #{tpu_custom_call.1} parent=5 // pred_check
        _
      $region34: #{tpu_custom_call.1} parent=5 // pred_check_branch
        %230 = sbr.rel (%p227) target = $region36
      $region35: #{tpu_custom_call.1} parent=5 // pred_region
        %s231 = ssub.s32 %s14, 1
        // Predicated region
        $region37: #{tpu_custom_call.1} parent=35 // pred_check
          %p232 = pneg %p47
        $region38: #{tpu_custom_call.1} parent=35 // pred_check_branch
          %234 = sbr.rel (%p232) target = $region40
        $region39: #{tpu_custom_call.1} parent=35 // pred_region
          %235 = dma.done [#allocation3], 768
        $region40: #{tpu_custom_call.1} parent=35 // pred_fallthru
          _
        %s236 = sand.u32 %s19, 1
        %s237 = scalar_lea.sflag [#allocation5], %s236
        %s238 = sand.u32 %s62, 1
        %s239 = smul.addr %s238, 9216
        %s240 = scalar_lea.vmem [#allocation4], %s239
        // Predicated region
        $region41: #{tpu_custom_call.1} parent=35 // pred_check
          %p241 = pneg %p75
        $region42: #{tpu_custom_call.1} parent=35 // pred_check_branch
          %243 = sbr.rel (%p241) target = $region44
        $region43: #{tpu_custom_call.1} parent=35 // pred_region
          %244 = dma.done %s237, 147456
        $region44: #{tpu_custom_call.1} parent=35 // pred_fallthru
          _
        %s245 = sand.u32 %s19, 1
        %s246 = scalar_lea.sflag [#allocation5], %s245
        %s247 = sand.u32 %s90, 1
        %s248 = smul.addr %s247, 12
        %s249 = scalar_lea.vmem [#allocation6], %s248
        // Predicated region
        $region45: #{tpu_custom_call.1} parent=35 // pred_check
          %p250 = pneg %p103
        $region46: #{tpu_custom_call.1} parent=35 // pred_check_branch
          %252 = sbr.rel (%p250) target = $region48
        $region47: #{tpu_custom_call.1} parent=35 // pred_region
          %253 = dma.done %s246, 192
        $region48: #{tpu_custom_call.1} parent=35 // pred_fallthru
          _
        %p254 = pneg %p47
        %p255 = pneg %p44
        %s256 = sand.u32 %s19, 1
        %s257 = scalar_lea.sflag [#allocation5], %s256
        %s258 = sand.u32 %s62, 1
        %s259 = smul.addr %s258, 9216
        %s260 = scalar_lea.vmem [#allocation4], %s259
        %p261 = pneg %p75
        %p262 = pneg %p72
        %s263 = sand.u32 %s19, 1
        %s264 = scalar_lea.sflag [#allocation5], %s263
        %s265 = sand.u32 %s90, 1
        %s266 = smul.addr %s265, 12
        %s267 = scalar_lea.vmem [#allocation6], %s266
        %p268 = pneg %p103
        %p269 = pneg %p100
        %p270 = pneg %p124
        %p271 = pneg %p121
        %p272 = pneg %p150
        %p273 = pneg %p147
        %p274 = scmp.lt.s32.totalorder %s23, 1
        %s275 = scalar_select %p274, %s23, 1
        %s276 = smul.addr %s275, 8
        %s277 = scalar_lea.vmem %s4, %s276
        %s278 = sadd.s32 %s23, %s24
        %s279 = smul.u32 12, %s278
        %s280 = sadd.s32 %s23, %s24
        %s281 = smul.u32 12, %s280
        %p282 = scmp.lt.s32.totalorder %s23, 1
        %s283 = scalar_select %p282, %s23, 1
        %s284 = smul.addr %s283, 8
        %s285 = scalar_lea.vmem %s4, %s284
        %p286 = scmp.eq.s32.totalorder %s24, 0
        // Predicated region
        $region49: #{tpu_custom_call.1} parent=35 // pred_check
          %p287 = pneg %p286
        $region50: #{tpu_custom_call.1} parent=35 // pred_check_branch
          %289 = sbr.rel (%p287) target = $region52
        $region51: #{tpu_custom_call.1} parent=35 // pred_region
          %vm290 = vcmask 39936
          %291 = vst.msk [vmem:[%s285] sm:$0xff] %vm290, 0.0
        $region52: #{tpu_custom_call.1} parent=35 // pred_fallthru
          _
        %v292 = vld [vmem:[#allocation2] sm:$0xff]
        %v293 = vld [vmem:[#allocation2 + $0x8] sm:$0xff]
        %v294 = vld [vmem:[#allocation2 + $0x10] sm:$0xff]
        %v295 = vld [vmem:[#allocation2 + $0x18] sm:$0xff]
        %v296 = vld [vmem:[#allocation2 + $0x20] sm:$0xff]
        %v297 = vld [vmem:[#allocation2 + $0x28] sm:$0xff]
        %v298 = vld [vmem:[%s240] sm:$0xff]
        %v299 = vld [vmem:[%s240 + $0x8] sm:$0xff]
        %v300 = vld [vmem:[%s240 + $0x10] sm:$0xff]
        %v301 = vld [vmem:[%s240 + $0x18] sm:$0xff]
        %v302 = vld [vmem:[%s240 + $0x20] sm:$0xff]
        %v303 = vld [vmem:[%s240 + $0x28] sm:$0xff]
        %v304 = vld [vmem:[%s240 + $0x30] sm:$0xff]
        %v305 = vld [vmem:[%s240 + $0x38] sm:$0xff]
        %v306 = vld [vmem:[%s240 + $0x40] sm:$0xff]
        %v307 = vld [vmem:[%s240 + $0x48] sm:$0xff]
        %v308 = vld [vmem:[%s240 + $0x50] sm:$0xff]
        %v309 = vld [vmem:[%s240 + $0x58] sm:$0xff]
        %v310 = vld [vmem:[%s240 + $0x60] sm:$0xff]
        %v311 = vld [vmem:[%s240 + $0x68] sm:$0xff]
        %v312 = vld [vmem:[%s240 + $0x70] sm:$0xff]
        %v313 = vld [vmem:[%s240 + $0x78] sm:$0xff]
        %v314 = vld [vmem:[%s240 + $0x80] sm:$0xff]
        %v315 = vld [vmem:[%s240 + $0x88] sm:$0xff]
        %v316 = vld [vmem:[%s240 + $0x90] sm:$0xff]
        %v317 = vld [vmem:[%s240 + $0x98] sm:$0xff]
        %v318 = vld [vmem:[%s240 + $0xa0] sm:$0xff]
        %v319 = vld [vmem:[%s240 + $0xa8] sm:$0xff]
        %v320 = vld [vmem:[%s240 + $0xb0] sm:$0xff]
        %v321 = vld [vmem:[%s240 + $0xb8] sm:$0xff]
        %v322 = vld [vmem:[%s240 + $0xc0] sm:$0xff]
        %v323 = vld [vmem:[%s240 + $0xc8] sm:$0xff]
        %v324 = vld [vmem:[%s240 + $0xd0] sm:$0xff]
        %v325 = vld [vmem:[%s240 + $0xd8] sm:$0xff]
        %v326 = vld [vmem:[%s240 + $0xe0] sm:$0xff]
        %v327 = vld [vmem:[%s240 + $0xe8] sm:$0xff]
        %v328 = vld [vmem:[%s240 + $0xf0] sm:$0xff]
        %v329 = vld [vmem:[%s240 + $0xf8] sm:$0xff]
        %v330 = vld [vmem:[%s240 + $0x100] sm:$0xff]
        %v331 = vld [vmem:[%s240 + $0x108] sm:$0xff]
        %v332 = vld [vmem:[%s240 + $0x110] sm:$0xff]
        %v333 = vld [vmem:[%s240 + $0x118] sm:$0xff]
        %v334 = vld [vmem:[%s240 + $0x120] sm:$0xff]
        %v335 = vld [vmem:[%s240 + $0x128] sm:$0xff]
        %v336 = vld [vmem:[%s240 + $0x130] sm:$0xff]
        %v337 = vld [vmem:[%s240 + $0x138] sm:$0xff]
        %v338 = vld [vmem:[%s240 + $0x140] sm:$0xff]
        %v339 = vld [vmem:[%s240 + $0x148] sm:$0xff]
        %v340 = vld [vmem:[%s240 + $0x150] sm:$0xff]
        %v341 = vld [vmem:[%s240 + $0x158] sm:$0xff]
        %v342 = vld [vmem:[%s240 + $0x160] sm:$0xff]
        %v343 = vld [vmem:[%s240 + $0x168] sm:$0xff]
        %v344 = vld [vmem:[%s240 + $0x170] sm:$0xff]
        %v345 = vld [vmem:[%s240 + $0x178] sm:$0xff]
        %v346 = vld [vmem:[%s240 + $0x180] sm:$0xff]
        %v347 = vld [vmem:[%s240 + $0x188] sm:$0xff]
        %v348 = vld [vmem:[%s240 + $0x190] sm:$0xff]
        %v349 = vld [vmem:[%s240 + $0x198] sm:$0xff]
        %v350 = vld [vmem:[%s240 + $0x1a0] sm:$0xff]
        %v351 = vld [vmem:[%s240 + $0x1a8] sm:$0xff]
        %v352 = vld [vmem:[%s240 + $0x1b0] sm:$0xff]
        %v353 = vld [vmem:[%s240 + $0x1b8] sm:$0xff]
        %v354 = vld [vmem:[%s240 + $0x1c0] sm:$0xff]
        %v355 = vld [vmem:[%s240 + $0x1c8] sm:$0xff]
        %v356 = vld [vmem:[%s240 + $0x1d0] sm:$0xff]
        %v357 = vld [vmem:[%s240 + $0x1d8] sm:$0xff]
        %v358 = vld [vmem:[%s240 + $0x1e0] sm:$0xff]
        %v359 = vld [vmem:[%s240 + $0x1e8] sm:$0xff]
        %v360 = vld [vmem:[%s240 + $0x1f0] sm:$0xff]
        %v361 = vld [vmem:[%s240 + $0x1f8] sm:$0xff]
        %v362 = vld [vmem:[%s240 + $0x200] sm:$0xff]
        %v363 = vld [vmem:[%s240 + $0x208] sm:$0xff]
        %v364 = vld [vmem:[%s240 + $0x210] sm:$0xff]
        %v365 = vld [vmem:[%s240 + $0x218] sm:$0xff]
        %v366 = vld [vmem:[%s240 + $0x220] sm:$0xff]
        %v367 = vld [vmem:[%s240 + $0x228] sm:$0xff]
        %v368 = vld [vmem:[%s240 + $0x230] sm:$0xff]
        %v369 = vld [vmem:[%s240 + $0x238] sm:$0xff]
        %v370 = vld [vmem:[%s240 + $0x240] sm:$0xff]
        %v371 = vld [vmem:[%s240 + $0x248] sm:$0xff]
        %v372 = vld [vmem:[%s240 + $0x250] sm:$0xff]
        %v373 = vld [vmem:[%s240 + $0x258] sm:$0xff]
        %v374 = vld [vmem:[%s240 + $0x260] sm:$0xff]
        %v375 = vld [vmem:[%s240 + $0x268] sm:$0xff]
        %v376 = vld [vmem:[%s240 + $0x270] sm:$0xff]
        %v377 = vld [vmem:[%s240 + $0x278] sm:$0xff]
        %v378 = vld [vmem:[%s240 + $0x280] sm:$0xff]
        %v379 = vld [vmem:[%s240 + $0x288] sm:$0xff]
        %v380 = vld [vmem:[%s240 + $0x290] sm:$0xff]
        %v381 = vld [vmem:[%s240 + $0x298] sm:$0xff]
        %v382 = vld [vmem:[%s240 + $0x2a0] sm:$0xff]
        %v383 = vld [vmem:[%s240 + $0x2a8] sm:$0xff]
        %v384 = vld [vmem:[%s240 + $0x2b0] sm:$0xff]
        %v385 = vld [vmem:[%s240 + $0x2b8] sm:$0xff]
        %v386 = vld [vmem:[%s240 + $0x2c0] sm:$0xff]
        %v387 = vld [vmem:[%s240 + $0x2c8] sm:$0xff]
        %v388 = vld [vmem:[%s240 + $0x2d0] sm:$0xff]
        %v389 = vld [vmem:[%s240 + $0x2d8] sm:$0xff]
        %v390 = vld [vmem:[%s240 + $0x2e0] sm:$0xff]
        %v391 = vld [vmem:[%s240 + $0x2e8] sm:$0xff]
        %v392 = vld [vmem:[%s240 + $0x2f0] sm:$0xff]
        %v393 = vld [vmem:[%s240 + $0x2f8] sm:$0xff]
        %v394 = vld [vmem:[%s240 + $0x300] sm:$0xff]
        %v395 = vld [vmem:[%s240 + $0x308] sm:$0xff]
        %v396 = vld [vmem:[%s240 + $0x310] sm:$0xff]
        %v397 = vld [vmem:[%s240 + $0x318] sm:$0xff]
        %v398 = vld [vmem:[%s240 + $0x320] sm:$0xff]
        %v399 = vld [vmem:[%s240 + $0x328] sm:$0xff]
        %v400 = vld [vmem:[%s240 + $0x330] sm:$0xff]
        %v401 = vld [vmem:[%s240 + $0x338] sm:$0xff]
        %v402 = vld [vmem:[%s240 + $0x340] sm:$0xff]
        %v403 = vld [vmem:[%s240 + $0x348] sm:$0xff]
        %v404 = vld [vmem:[%s240 + $0x350] sm:$0xff]
        %v405 = vld [vmem:[%s240 + $0x358] sm:$0xff]
        %v406 = vld [vmem:[%s240 + $0x360] sm:$0xff]
        %v407 = vld [vmem:[%s240 + $0x368] sm:$0xff]
        %v408 = vld [vmem:[%s240 + $0x370] sm:$0xff]
        %v409 = vld [vmem:[%s240 + $0x378] sm:$0xff]
        %v410 = vld [vmem:[%s240 + $0x380] sm:$0xff]
        %v411 = vld [vmem:[%s240 + $0x388] sm:$0xff]
        %v412 = vld [vmem:[%s240 + $0x390] sm:$0xff]
        %v413 = vld [vmem:[%s240 + $0x398] sm:$0xff]
        %v414 = vld [vmem:[%s240 + $0x3a0] sm:$0xff]
        %v415 = vld [vmem:[%s240 + $0x3a8] sm:$0xff]
        %v416 = vld [vmem:[%s240 + $0x3b0] sm:$0xff]
        %v417 = vld [vmem:[%s240 + $0x3b8] sm:$0xff]
        %v418 = vld [vmem:[%s240 + $0x3c0] sm:$0xff]
        %v419 = vld [vmem:[%s240 + $0x3c8] sm:$0xff]
        %v420 = vld [vmem:[%s240 + $0x3d0] sm:$0xff]
        %v421 = vld [vmem:[%s240 + $0x3d8] sm:$0xff]
        %v422 = vld [vmem:[%s240 + $0x3e0] sm:$0xff]
        %v423 = vld [vmem:[%s240 + $0x3e8] sm:$0xff]
        %v424 = vld [vmem:[%s240 + $0x3f0] sm:$0xff]
        %v425 = vld [vmem:[%s240 + $0x3f8] sm:$0xff]
        %v426 = vld [vmem:[%s240 + $0x400] sm:$0xff]
        %v427 = vld [vmem:[%s240 + $0x408] sm:$0xff]
        %v428 = vld [vmem:[%s240 + $0x410] sm:$0xff]
        %v429 = vld [vmem:[%s240 + $0x418] sm:$0xff]
        %v430 = vld [vmem:[%s240 + $0x420] sm:$0xff]
        %v431 = vld [vmem:[%s240 + $0x428] sm:$0xff]
        %v432 = vld [vmem:[%s240 + $0x430] sm:$0xff]
        %v433 = vld [vmem:[%s240 + $0x438] sm:$0xff]
        %v434 = vld [vmem:[%s240 + $0x440] sm:$0xff]
        %v435 = vld [vmem:[%s240 + $0x448] sm:$0xff]
        %v436 = vld [vmem:[%s240 + $0x450] sm:$0xff]
        %v437 = vld [vmem:[%s240 + $0x458] sm:$0xff]
        %v438 = vld [vmem:[%s240 + $0x460] sm:$0xff]
        %v439 = vld [vmem:[%s240 + $0x468] sm:$0xff]
        %v440 = vld [vmem:[%s240 + $0x470] sm:$0xff]
        %v441 = vld [vmem:[%s240 + $0x478] sm:$0xff]
        %v442 = vld [vmem:[%s240 + $0x480] sm:$0xff]
        %v443 = vld [vmem:[%s240 + $0x488] sm:$0xff]
        %v444 = vld [vmem:[%s240 + $0x490] sm:$0xff]
        %v445 = vld [vmem:[%s240 + $0x498] sm:$0xff]
        %v446 = vld [vmem:[%s240 + $0x4a0] sm:$0xff]
        %v447 = vld [vmem:[%s240 + $0x4a8] sm:$0xff]
        %v448 = vld [vmem:[%s240 + $0x4b0] sm:$0xff]
        %v449 = vld [vmem:[%s240 + $0x4b8] sm:$0xff]
        %v450 = vld [vmem:[%s240 + $0x4c0] sm:$0xff]
        %v451 = vld [vmem:[%s240 + $0x4c8] sm:$0xff]
        %v452 = vld [vmem:[%s240 + $0x4d0] sm:$0xff]
        %v453 = vld [vmem:[%s240 + $0x4d8] sm:$0xff]
        %v454 = vld [vmem:[%s240 + $0x4e0] sm:$0xff]
        %v455 = vld [vmem:[%s240 + $0x4e8] sm:$0xff]
        %v456 = vld [vmem:[%s240 + $0x4f0] sm:$0xff]
        %v457 = vld [vmem:[%s240 + $0x4f8] sm:$0xff]
        %v458 = vld [vmem:[%s240 + $0x500] sm:$0xff]
        %v459 = vld [vmem:[%s240 + $0x508] sm:$0xff]
        %v460 = vld [vmem:[%s240 + $0x510] sm:$0xff]
        %v461 = vld [vmem:[%s240 + $0x518] sm:$0xff]
        %v462 = vld [vmem:[%s240 + $0x520] sm:$0xff]
        %v463 = vld [vmem:[%s240 + $0x528] sm:$0xff]
        %v464 = vld [vmem:[%s240 + $0x530] sm:$0xff]
        %v465 = vld [vmem:[%s240 + $0x538] sm:$0xff]
        %v466 = vld [vmem:[%s240 + $0x540] sm:$0xff]
        %v467 = vld [vmem:[%s240 + $0x548] sm:$0xff]
        %v468 = vld [vmem:[%s240 + $0x550] sm:$0xff]
        %v469 = vld [vmem:[%s240 + $0x558] sm:$0xff]
        %v470 = vld [vmem:[%s240 + $0x560] sm:$0xff]
        %v471 = vld [vmem:[%s240 + $0x568] sm:$0xff]
        %v472 = vld [vmem:[%s240 + $0x570] sm:$0xff]
        %v473 = vld [vmem:[%s240 + $0x578] sm:$0xff]
        %v474 = vld [vmem:[%s240 + $0x580] sm:$0xff]
        %v475 = vld [vmem:[%s240 + $0x588] sm:$0xff]
        %v476 = vld [vmem:[%s240 + $0x590] sm:$0xff]
        %v477 = vld [vmem:[%s240 + $0x598] sm:$0xff]
        %v478 = vld [vmem:[%s240 + $0x5a0] sm:$0xff]
        %v479 = vld [vmem:[%s240 + $0x5a8] sm:$0xff]
        %v480 = vld [vmem:[%s240 + $0x5b0] sm:$0xff]
        %v481 = vld [vmem:[%s240 + $0x5b8] sm:$0xff]
        %v482 = vld [vmem:[%s240 + $0x5c0] sm:$0xff]
        %v483 = vld [vmem:[%s240 + $0x5c8] sm:$0xff]
        %v484 = vld [vmem:[%s240 + $0x5d0] sm:$0xff]
        %v485 = vld [vmem:[%s240 + $0x5d8] sm:$0xff]
        %v486 = vld [vmem:[%s240 + $0x5e0] sm:$0xff]
        %v487 = vld [vmem:[%s240 + $0x5e8] sm:$0xff]
        %v488 = vld [vmem:[%s240 + $0x5f0] sm:$0xff]
        %v489 = vld [vmem:[%s240 + $0x5f8] sm:$0xff]
        %v490 = vld [vmem:[%s240 + $0x600] sm:$0xff]
        %v491 = vld [vmem:[%s240 + $0x608] sm:$0xff]
        %v492 = vld [vmem:[%s240 + $0x610] sm:$0xff]
        %v493 = vld [vmem:[%s240 + $0x618] sm:$0xff]
        %v494 = vld [vmem:[%s240 + $0x620] sm:$0xff]
        %v495 = vld [vmem:[%s240 + $0x628] sm:$0xff]
        %v496 = vld [vmem:[%s240 + $0x630] sm:$0xff]
        %v497 = vld [vmem:[%s240 + $0x638] sm:$0xff]
        %v498 = vld [vmem:[%s240 + $0x640] sm:$0xff]
        %v499 = vld [vmem:[%s240 + $0x648] sm:$0xff]
        %v500 = vld [vmem:[%s240 + $0x650] sm:$0xff]
        %v501 = vld [vmem:[%s240 + $0x658] sm:$0xff]
        %v502 = vld [vmem:[%s240 + $0x660] sm:$0xff]
        %v503 = vld [vmem:[%s240 + $0x668] sm:$0xff]
        %v504 = vld [vmem:[%s240 + $0x670] sm:$0xff]
        %v505 = vld [vmem:[%s240 + $0x678] sm:$0xff]
        %v506 = vld [vmem:[%s240 + $0x680] sm:$0xff]
        %v507 = vld [vmem:[%s240 + $0x688] sm:$0xff]
        %v508 = vld [vmem:[%s240 + $0x690] sm:$0xff]
        %v509 = vld [vmem:[%s240 + $0x698] sm:$0xff]
        %v510 = vld [vmem:[%s240 + $0x6a0] sm:$0xff]
        %v511 = vld [vmem:[%s240 + $0x6a8] sm:$0xff]
        %v512 = vld [vmem:[%s240 + $0x6b0] sm:$0xff]
        %v513 = vld [vmem:[%s240 + $0x6b8] sm:$0xff]
        %v514 = vld [vmem:[%s240 + $0x6c0] sm:$0xff]
        %v515 = vld [vmem:[%s240 + $0x6c8] sm:$0xff]
        %v516 = vld [vmem:[%s240 + $0x6d0] sm:$0xff]
        %v517 = vld [vmem:[%s240 + $0x6d8] sm:$0xff]
        %v518 = vld [vmem:[%s240 + $0x6e0] sm:$0xff]
        %v519 = vld [vmem:[%s240 + $0x6e8] sm:$0xff]
        %v520 = vld [vmem:[%s240 + $0x6f0] sm:$0xff]
        %v521 = vld [vmem:[%s240 + $0x6f8] sm:$0xff]
        %v522 = vld [vmem:[%s240 + $0x700] sm:$0xff]
        %v523 = vld [vmem:[%s240 + $0x708] sm:$0xff]
        %v524 = vld [vmem:[%s240 + $0x710] sm:$0xff]
        %v525 = vld [vmem:[%s240 + $0x718] sm:$0xff]
        %v526 = vld [vmem:[%s240 + $0x720] sm:$0xff]
        %v527 = vld [vmem:[%s240 + $0x728] sm:$0xff]
        %v528 = vld [vmem:[%s240 + $0x730] sm:$0xff]
        %v529 = vld [vmem:[%s240 + $0x738] sm:$0xff]
        %v530 = vld [vmem:[%s240 + $0x740] sm:$0xff]
        %v531 = vld [vmem:[%s240 + $0x748] sm:$0xff]
        %v532 = vld [vmem:[%s240 + $0x750] sm:$0xff]
        %v533 = vld [vmem:[%s240 + $0x758] sm:$0xff]
        %v534 = vld [vmem:[%s240 + $0x760] sm:$0xff]
        %v535 = vld [vmem:[%s240 + $0x768] sm:$0xff]
        %v536 = vld [vmem:[%s240 + $0x770] sm:$0xff]
        %v537 = vld [vmem:[%s240 + $0x778] sm:$0xff]
        %v538 = vld [vmem:[%s240 + $0x780] sm:$0xff]
        %v539 = vld [vmem:[%s240 + $0x788] sm:$0xff]
        %v540 = vld [vmem:[%s240 + $0x790] sm:$0xff]
        %v541 = vld [vmem:[%s240 + $0x798] sm:$0xff]
        %v542 = vld [vmem:[%s240 + $0x7a0] sm:$0xff]
        %v543 = vld [vmem:[%s240 + $0x7a8] sm:$0xff]
        %v544 = vld [vmem:[%s240 + $0x7b0] sm:$0xff]
        %v545 = vld [vmem:[%s240 + $0x7b8] sm:$0xff]
        %v546 = vld [vmem:[%s240 + $0x7c0] sm:$0xff]
        %v547 = vld [vmem:[%s240 + $0x7c8] sm:$0xff]
        %v548 = vld [vmem:[%s240 + $0x7d0] sm:$0xff]
        %v549 = vld [vmem:[%s240 + $0x7d8] sm:$0xff]
        %v550 = vld [vmem:[%s240 + $0x7e0] sm:$0xff]
        %v551 = vld [vmem:[%s240 + $0x7e8] sm:$0xff]
        %v552 = vld [vmem:[%s240 + $0x7f0] sm:$0xff]
        %v553 = vld [vmem:[%s240 + $0x7f8] sm:$0xff]
        %v554 = vld [vmem:[%s240 + $0x800] sm:$0xff]
        %v555 = vld [vmem:[%s240 + $0x808] sm:$0xff]
        %v556 = vld [vmem:[%s240 + $0x810] sm:$0xff]
        %v557 = vld [vmem:[%s240 + $0x818] sm:$0xff]
        %v558 = vld [vmem:[%s240 + $0x820] sm:$0xff]
        %v559 = vld [vmem:[%s240 + $0x828] sm:$0xff]
        %v560 = vld [vmem:[%s240 + $0x830] sm:$0xff]
        %v561 = vld [vmem:[%s240 + $0x838] sm:$0xff]
        %v562 = vld [vmem:[%s240 + $0x840] sm:$0xff]
        %v563 = vld [vmem:[%s240 + $0x848] sm:$0xff]
        %v564 = vld [vmem:[%s240 + $0x850] sm:$0xff]
        %v565 = vld [vmem:[%s240 + $0x858] sm:$0xff]
        %v566 = vld [vmem:[%s240 + $0x860] sm:$0xff]
        %v567 = vld [vmem:[%s240 + $0x868] sm:$0xff]
        %v568 = vld [vmem:[%s240 + $0x870] sm:$0xff]
        %v569 = vld [vmem:[%s240 + $0x878] sm:$0xff]
        %v570 = vld [vmem:[%s240 + $0x880] sm:$0xff]
        %v571 = vld [vmem:[%s240 + $0x888] sm:$0xff]
        %v572 = vld [vmem:[%s240 + $0x890] sm:$0xff]
        %v573 = vld [vmem:[%s240 + $0x898] sm:$0xff]
        %v574 = vld [vmem:[%s240 + $0x8a0] sm:$0xff]
        %v575 = vld [vmem:[%s240 + $0x8a8] sm:$0xff]
        %v576 = vld [vmem:[%s240 + $0x8b0] sm:$0xff]
        %v577 = vld [vmem:[%s240 + $0x8b8] sm:$0xff]
        %v578 = vld [vmem:[%s240 + $0x8c0] sm:$0xff]
        %v579 = vld [vmem:[%s240 + $0x8c8] sm:$0xff]
        %v580 = vld [vmem:[%s240 + $0x8d0] sm:$0xff]
        %v581 = vld [vmem:[%s240 + $0x8d8] sm:$0xff]
        %v582 = vld [vmem:[%s240 + $0x8e0] sm:$0xff]
        %v583 = vld [vmem:[%s240 + $0x8e8] sm:$0xff]
        %v584 = vld [vmem:[%s240 + $0x8f0] sm:$0xff]
        %v585 = vld [vmem:[%s240 + $0x8f8] sm:$0xff]
        %v586 = vld [vmem:[%s240 + $0x900] sm:$0xff]
        %v587 = vld [vmem:[%s240 + $0x908] sm:$0xff]
        %v588 = vld [vmem:[%s240 + $0x910] sm:$0xff]
        %v589 = vld [vmem:[%s240 + $0x918] sm:$0xff]
        %v590 = vld [vmem:[%s240 + $0x920] sm:$0xff]
        %v591 = vld [vmem:[%s240 + $0x928] sm:$0xff]
        %v592 = vld [vmem:[%s240 + $0x930] sm:$0xff]
        %v593 = vld [vmem:[%s240 + $0x938] sm:$0xff]
        %v594 = vld [vmem:[%s240 + $0x940] sm:$0xff]
        %v595 = vld [vmem:[%s240 + $0x948] sm:$0xff]
        %v596 = vld [vmem:[%s240 + $0x950] sm:$0xff]
        %v597 = vld [vmem:[%s240 + $0x958] sm:$0xff]
        %v598 = vld [vmem:[%s240 + $0x960] sm:$0xff]
        %v599 = vld [vmem:[%s240 + $0x968] sm:$0xff]
        %v600 = vld [vmem:[%s240 + $0x970] sm:$0xff]
        %v601 = vld [vmem:[%s240 + $0x978] sm:$0xff]
        %v602 = vld [vmem:[%s240 + $0x980] sm:$0xff]
        %v603 = vld [vmem:[%s240 + $0x988] sm:$0xff]
        %v604 = vld [vmem:[%s240 + $0x990] sm:$0xff]
        %v605 = vld [vmem:[%s240 + $0x998] sm:$0xff]
        %v606 = vld [vmem:[%s240 + $0x9a0] sm:$0xff]
        %v607 = vld [vmem:[%s240 + $0x9a8] sm:$0xff]
        %v608 = vld [vmem:[%s240 + $0x9b0] sm:$0xff]
        %v609 = vld [vmem:[%s240 + $0x9b8] sm:$0xff]
        %v610 = vld [vmem:[%s240 + $0x9c0] sm:$0xff]
        %v611 = vld [vmem:[%s240 + $0x9c8] sm:$0xff]
        %v612 = vld [vmem:[%s240 + $0x9d0] sm:$0xff]
        %v613 = vld [vmem:[%s240 + $0x9d8] sm:$0xff]
        %v614 = vld [vmem:[%s240 + $0x9e0] sm:$0xff]
        %v615 = vld [vmem:[%s240 + $0x9e8] sm:$0xff]
        %v616 = vld [vmem:[%s240 + $0x9f0] sm:$0xff]
        %v617 = vld [vmem:[%s240 + $0x9f8] sm:$0xff]
        %v618 = vld [vmem:[%s240 + $0xa00] sm:$0xff]
        %v619 = vld [vmem:[%s240 + $0xa08] sm:$0xff]
        %v620 = vld [vmem:[%s240 + $0xa10] sm:$0xff]
        %v621 = vld [vmem:[%s240 + $0xa18] sm:$0xff]
        %v622 = vld [vmem:[%s240 + $0xa20] sm:$0xff]
        %v623 = vld [vmem:[%s240 + $0xa28] sm:$0xff]
        %v624 = vld [vmem:[%s240 + $0xa30] sm:$0xff]
        %v625 = vld [vmem:[%s240 + $0xa38] sm:$0xff]
        %v626 = vld [vmem:[%s240 + $0xa40] sm:$0xff]
        %v627 = vld [vmem:[%s240 + $0xa48] sm:$0xff]
        %v628 = vld [vmem:[%s240 + $0xa50] sm:$0xff]
        %v629 = vld [vmem:[%s240 + $0xa58] sm:$0xff]
        %v630 = vld [vmem:[%s240 + $0xa60] sm:$0xff]
        %v631 = vld [vmem:[%s240 + $0xa68] sm:$0xff]
        %v632 = vld [vmem:[%s240 + $0xa70] sm:$0xff]
        %v633 = vld [vmem:[%s240 + $0xa78] sm:$0xff]
        %v634 = vld [vmem:[%s240 + $0xa80] sm:$0xff]
        %v635 = vld [vmem:[%s240 + $0xa88] sm:$0xff]
        %v636 = vld [vmem:[%s240 + $0xa90] sm:$0xff]
        %v637 = vld [vmem:[%s240 + $0xa98] sm:$0xff]
        %v638 = vld [vmem:[%s240 + $0xaa0] sm:$0xff]
        %v639 = vld [vmem:[%s240 + $0xaa8] sm:$0xff]
        %v640 = vld [vmem:[%s240 + $0xab0] sm:$0xff]
        %v641 = vld [vmem:[%s240 + $0xab8] sm:$0xff]
        %v642 = vld [vmem:[%s240 + $0xac0] sm:$0xff]
        %v643 = vld [vmem:[%s240 + $0xac8] sm:$0xff]
        %v644 = vld [vmem:[%s240 + $0xad0] sm:$0xff]
        %v645 = vld [vmem:[%s240 + $0xad8] sm:$0xff]
        %v646 = vld [vmem:[%s240 + $0xae0] sm:$0xff]
        %v647 = vld [vmem:[%s240 + $0xae8] sm:$0xff]
        %v648 = vld [vmem:[%s240 + $0xaf0] sm:$0xff]
        %v649 = vld [vmem:[%s240 + $0xaf8] sm:$0xff]
        %v650 = vld [vmem:[%s240 + $0xb00] sm:$0xff]
        %v651 = vld [vmem:[%s240 + $0xb08] sm:$0xff]
        %v652 = vld [vmem:[%s240 + $0xb10] sm:$0xff]
        %v653 = vld [vmem:[%s240 + $0xb18] sm:$0xff]
        %v654 = vld [vmem:[%s240 + $0xb20] sm:$0xff]
        %v655 = vld [vmem:[%s240 + $0xb28] sm:$0xff]
        %v656 = vld [vmem:[%s240 + $0xb30] sm:$0xff]
        %v657 = vld [vmem:[%s240 + $0xb38] sm:$0xff]
        %v658 = vld [vmem:[%s240 + $0xb40] sm:$0xff]
        %v659 = vld [vmem:[%s240 + $0xb48] sm:$0xff]
        %v660 = vld [vmem:[%s240 + $0xb50] sm:$0xff]
        %v661 = vld [vmem:[%s240 + $0xb58] sm:$0xff]
        %v662 = vld [vmem:[%s240 + $0xb60] sm:$0xff]
        %v663 = vld [vmem:[%s240 + $0xb68] sm:$0xff]
        %v664 = vld [vmem:[%s240 + $0xb70] sm:$0xff]
        %v665 = vld [vmem:[%s240 + $0xb78] sm:$0xff]
        %v666 = vld [vmem:[%s240 + $0xb80] sm:$0xff]
        %v667 = vld [vmem:[%s240 + $0xb88] sm:$0xff]
        %v668 = vld [vmem:[%s240 + $0xb90] sm:$0xff]
        %v669 = vld [vmem:[%s240 + $0xb98] sm:$0xff]
        %v670 = vld [vmem:[%s240 + $0xba0] sm:$0xff]
        %v671 = vld [vmem:[%s240 + $0xba8] sm:$0xff]
        %v672 = vld [vmem:[%s240 + $0xbb0] sm:$0xff]
        %v673 = vld [vmem:[%s240 + $0xbb8] sm:$0xff]
        %v674 = vld [vmem:[%s240 + $0xbc0] sm:$0xff]
        %v675 = vld [vmem:[%s240 + $0xbc8] sm:$0xff]
        %v676 = vld [vmem:[%s240 + $0xbd0] sm:$0xff]
        %v677 = vld [vmem:[%s240 + $0xbd8] sm:$0xff]
        %v678 = vld [vmem:[%s240 + $0xbe0] sm:$0xff]
        %v679 = vld [vmem:[%s240 + $0xbe8] sm:$0xff]
        %v680 = vld [vmem:[%s240 + $0xbf0] sm:$0xff]
        %v681 = vld [vmem:[%s240 + $0xbf8] sm:$0xff]
        %v682 = vld [vmem:[%s240 + $0xc00] sm:$0xff]
        %v683 = vld [vmem:[%s240 + $0xc08] sm:$0xff]
        %v684 = vld [vmem:[%s240 + $0xc10] sm:$0xff]
        %v685 = vld [vmem:[%s240 + $0xc18] sm:$0xff]
        %v686 = vld [vmem:[%s240 + $0xc20] sm:$0xff]
        %v687 = vld [vmem:[%s240 + $0xc28] sm:$0xff]
        %v688 = vld [vmem:[%s240 + $0xc30] sm:$0xff]
        %v689 = vld [vmem:[%s240 + $0xc38] sm:$0xff]
        %v690 = vld [vmem:[%s240 + $0xc40] sm:$0xff]
        %v691 = vld [vmem:[%s240 + $0xc48] sm:$0xff]
        %v692 = vld [vmem:[%s240 + $0xc50] sm:$0xff]
        %v693 = vld [vmem:[%s240 + $0xc58] sm:$0xff]
        %v694 = vld [vmem:[%s240 + $0xc60] sm:$0xff]
        %v695 = vld [vmem:[%s240 + $0xc68] sm:$0xff]
        %v696 = vld [vmem:[%s240 + $0xc70] sm:$0xff]
        %v697 = vld [vmem:[%s240 + $0xc78] sm:$0xff]
        %v698 = vld [vmem:[%s240 + $0xc80] sm:$0xff]
        %v699 = vld [vmem:[%s240 + $0xc88] sm:$0xff]
        %v700 = vld [vmem:[%s240 + $0xc90] sm:$0xff]
        %v701 = vld [vmem:[%s240 + $0xc98] sm:$0xff]
        %v702 = vld [vmem:[%s240 + $0xca0] sm:$0xff]
        %v703 = vld [vmem:[%s240 + $0xca8] sm:$0xff]
        %v704 = vld [vmem:[%s240 + $0xcb0] sm:$0xff]
        %v705 = vld [vmem:[%s240 + $0xcb8] sm:$0xff]
        %v706 = vld [vmem:[%s240 + $0xcc0] sm:$0xff]
        %v707 = vld [vmem:[%s240 + $0xcc8] sm:$0xff]
        %v708 = vld [vmem:[%s240 + $0xcd0] sm:$0xff]
        %v709 = vld [vmem:[%s240 + $0xcd8] sm:$0xff]
        %v710 = vld [vmem:[%s240 + $0xce0] sm:$0xff]
        %v711 = vld [vmem:[%s240 + $0xce8] sm:$0xff]
        %v712 = vld [vmem:[%s240 + $0xcf0] sm:$0xff]
        %v713 = vld [vmem:[%s240 + $0xcf8] sm:$0xff]
        %v714 = vld [vmem:[%s240 + $0xd00] sm:$0xff]
        %v715 = vld [vmem:[%s240 + $0xd08] sm:$0xff]
        %v716 = vld [vmem:[%s240 + $0xd10] sm:$0xff]
        %v717 = vld [vmem:[%s240 + $0xd18] sm:$0xff]
        %v718 = vld [vmem:[%s240 + $0xd20] sm:$0xff]
        %v719 = vld [vmem:[%s240 + $0xd28] sm:$0xff]
        %v720 = vld [vmem:[%s240 + $0xd30] sm:$0xff]
        %v721 = vld [vmem:[%s240 + $0xd38] sm:$0xff]
        %v722 = vld [vmem:[%s240 + $0xd40] sm:$0xff]
        %v723 = vld [vmem:[%s240 + $0xd48] sm:$0xff]
        %v724 = vld [vmem:[%s240 + $0xd50] sm:$0xff]
        %v725 = vld [vmem:[%s240 + $0xd58] sm:$0xff]
        %v726 = vld [vmem:[%s240 + $0xd60] sm:$0xff]
        %v727 = vld [vmem:[%s240 + $0xd68] sm:$0xff]
        %v728 = vld [vmem:[%s240 + $0xd70] sm:$0xff]
        %v729 = vld [vmem:[%s240 + $0xd78] sm:$0xff]
        %v730 = vld [vmem:[%s240 + $0xd80] sm:$0xff]
        %v731 = vld [vmem:[%s240 + $0xd88] sm:$0xff]
        %v732 = vld [vmem:[%s240 + $0xd90] sm:$0xff]
        %v733 = vld [vmem:[%s240 + $0xd98] sm:$0xff]
        %v734 = vld [vmem:[%s240 + $0xda0] sm:$0xff]
        %v735 = vld [vmem:[%s240 + $0xda8] sm:$0xff]
        %v736 = vld [vmem:[%s240 + $0xdb0] sm:$0xff]
        %v737 = vld [vmem:[%s240 + $0xdb8] sm:$0xff]
        %v738 = vld [vmem:[%s240 + $0xdc0] sm:$0xff]
        %v739 = vld [vmem:[%s240 + $0xdc8] sm:$0xff]
        %v740 = vld [vmem:[%s240 + $0xdd0] sm:$0xff]
        %v741 = vld [vmem:[%s240 + $0xdd8] sm:$0xff]
        %v742 = vld [vmem:[%s240 + $0xde0] sm:$0xff]
        %v743 = vld [vmem:[%s240 + $0xde8] sm:$0xff]
        %v744 = vld [vmem:[%s240 + $0xdf0] sm:$0xff]
        %v745 = vld [vmem:[%s240 + $0xdf8] sm:$0xff]
        %v746 = vld [vmem:[%s240 + $0xe00] sm:$0xff]
        %v747 = vld [vmem:[%s240 + $0xe08] sm:$0xff]
        %v748 = vld [vmem:[%s240 + $0xe10] sm:$0xff]
        %v749 = vld [vmem:[%s240 + $0xe18] sm:$0xff]
        %v750 = vld [vmem:[%s240 + $0xe20] sm:$0xff]
        %v751 = vld [vmem:[%s240 + $0xe28] sm:$0xff]
        %v752 = vld [vmem:[%s240 + $0xe30] sm:$0xff]
        %v753 = vld [vmem:[%s240 + $0xe38] sm:$0xff]
        %v754 = vld [vmem:[%s240 + $0xe40] sm:$0xff]
        %v755 = vld [vmem:[%s240 + $0xe48] sm:$0xff]
        %v756 = vld [vmem:[%s240 + $0xe50] sm:$0xff]
        %v757 = vld [vmem:[%s240 + $0xe58] sm:$0xff]
        %v758 = vld [vmem:[%s240 + $0xe60] sm:$0xff]
        %v759 = vld [vmem:[%s240 + $0xe68] sm:$0xff]
        %v760 = vld [vmem:[%s240 + $0xe70] sm:$0xff]
        %v761 = vld [vmem:[%s240 + $0xe78] sm:$0xff]
        %v762 = vld [vmem:[%s240 + $0xe80] sm:$0xff]
        %v763 = vld [vmem:[%s240 + $0xe88] sm:$0xff]
        %v764 = vld [vmem:[%s240 + $0xe90] sm:$0xff]
        %v765 = vld [vmem:[%s240 + $0xe98] sm:$0xff]
        %v766 = vld [vmem:[%s240 + $0xea0] sm:$0xff]
        %v767 = vld [vmem:[%s240 + $0xea8] sm:$0xff]
        %v768 = vld [vmem:[%s240 + $0xeb0] sm:$0xff]
        %v769 = vld [vmem:[%s240 + $0xeb8] sm:$0xff]
        %v770 = vld [vmem:[%s240 + $0xec0] sm:$0xff]
        %v771 = vld [vmem:[%s240 + $0xec8] sm:$0xff]
        %v772 = vld [vmem:[%s240 + $0xed0] sm:$0xff]
        %v773 = vld [vmem:[%s240 + $0xed8] sm:$0xff]
        %v774 = vld [vmem:[%s240 + $0xee0] sm:$0xff]
        %v775 = vld [vmem:[%s240 + $0xee8] sm:$0xff]
        %v776 = vld [vmem:[%s240 + $0xef0] sm:$0xff]
        %v777 = vld [vmem:[%s240 + $0xef8] sm:$0xff]
        %v778 = vld [vmem:[%s240 + $0xf00] sm:$0xff]
        %v779 = vld [vmem:[%s240 + $0xf08] sm:$0xff]
        %v780 = vld [vmem:[%s240 + $0xf10] sm:$0xff]
        %v781 = vld [vmem:[%s240 + $0xf18] sm:$0xff]
        %v782 = vld [vmem:[%s240 + $0xf20] sm:$0xff]
        %v783 = vld [vmem:[%s240 + $0xf28] sm:$0xff]
        %v784 = vld [vmem:[%s240 + $0xf30] sm:$0xff]
        %v785 = vld [vmem:[%s240 + $0xf38] sm:$0xff]
        %v786 = vld [vmem:[%s240 + $0xf40] sm:$0xff]
        %v787 = vld [vmem:[%s240 + $0xf48] sm:$0xff]
        %v788 = vld [vmem:[%s240 + $0xf50] sm:$0xff]
        %v789 = vld [vmem:[%s240 + $0xf58] sm:$0xff]
        %v790 = vld [vmem:[%s240 + $0xf60] sm:$0xff]
        %v791 = vld [vmem:[%s240 + $0xf68] sm:$0xff]
        %v792 = vld [vmem:[%s240 + $0xf70] sm:$0xff]
        %v793 = vld [vmem:[%s240 + $0xf78] sm:$0xff]
        %v794 = vld [vmem:[%s240 + $0xf80] sm:$0xff]
        %v795 = vld [vmem:[%s240 + $0xf88] sm:$0xff]
        %v796 = vld [vmem:[%s240 + $0xf90] sm:$0xff]
        %v797 = vld [vmem:[%s240 + $0xf98] sm:$0xff]
        %v798 = vld [vmem:[%s240 + $0xfa0] sm:$0xff]
        %v799 = vld [vmem:[%s240 + $0xfa8] sm:$0xff]
        %v800 = vld [vmem:[%s240 + $0xfb0] sm:$0xff]
        %v801 = vld [vmem:[%s240 + $0xfb8] sm:$0xff]
        %v802 = vld [vmem:[%s240 + $0xfc0] sm:$0xff]
        %v803 = vld [vmem:[%s240 + $0xfc8] sm:$0xff]
        %v804 = vld [vmem:[%s240 + $0xfd0] sm:$0xff]
        %v805 = vld [vmem:[%s240 + $0xfd8] sm:$0xff]
        %v806 = vld [vmem:[%s240 + $0xfe0] sm:$0xff]
        %v807 = vld [vmem:[%s240 + $0xfe8] sm:$0xff]
        %v808 = vld [vmem:[%s240 + $0xff0] sm:$0xff]
        %v809 = vld [vmem:[%s240 + $0xff8] sm:$0xff]
        %v810 = vld [vmem:[%s240 + $0x1000] sm:$0xff]
        %v811 = vld [vmem:[%s240 + $0x1008] sm:$0xff]
        %v812 = vld [vmem:[%s240 + $0x1010] sm:$0xff]
        %v813 = vld [vmem:[%s240 + $0x1018] sm:$0xff]
        %v814 = vld [vmem:[%s240 + $0x1020] sm:$0xff]
        %v815 = vld [vmem:[%s240 + $0x1028] sm:$0xff]
        %v816 = vld [vmem:[%s240 + $0x1030] sm:$0xff]
        %v817 = vld [vmem:[%s240 + $0x1038] sm:$0xff]
        %v818 = vld [vmem:[%s240 + $0x1040] sm:$0xff]
        %v819 = vld [vmem:[%s240 + $0x1048] sm:$0xff]
        %v820 = vld [vmem:[%s240 + $0x1050] sm:$0xff]
        %v821 = vld [vmem:[%s240 + $0x1058] sm:$0xff]
        %v822 = vld [vmem:[%s240 + $0x1060] sm:$0xff]
        %v823 = vld [vmem:[%s240 + $0x1068] sm:$0xff]
        %v824 = vld [vmem:[%s240 + $0x1070] sm:$0xff]
        %v825 = vld [vmem:[%s240 + $0x1078] sm:$0xff]
        %v826 = vld [vmem:[%s240 + $0x1080] sm:$0xff]
        %v827 = vld [vmem:[%s240 + $0x1088] sm:$0xff]
        %v828 = vld [vmem:[%s240 + $0x1090] sm:$0xff]
        %v829 = vld [vmem:[%s240 + $0x1098] sm:$0xff]
        %v830 = vld [vmem:[%s240 + $0x10a0] sm:$0xff]
        %v831 = vld [vmem:[%s240 + $0x10a8] sm:$0xff]
        %v832 = vld [vmem:[%s240 + $0x10b0] sm:$0xff]
        %v833 = vld [vmem:[%s240 + $0x10b8] sm:$0xff]
        %v834 = vld [vmem:[%s240 + $0x10c0] sm:$0xff]
        %v835 = vld [vmem:[%s240 + $0x10c8] sm:$0xff]
        %v836 = vld [vmem:[%s240 + $0x10d0] sm:$0xff]
        %v837 = vld [vmem:[%s240 + $0x10d8] sm:$0xff]
        %v838 = vld [vmem:[%s240 + $0x10e0] sm:$0xff]
        %v839 = vld [vmem:[%s240 + $0x10e8] sm:$0xff]
        %v840 = vld [vmem:[%s240 + $0x10f0] sm:$0xff]
        %v841 = vld [vmem:[%s240 + $0x10f8] sm:$0xff]
        %v842 = vld [vmem:[%s240 + $0x1100] sm:$0xff]
        %v843 = vld [vmem:[%s240 + $0x1108] sm:$0xff]
        %v844 = vld [vmem:[%s240 + $0x1110] sm:$0xff]
        %v845 = vld [vmem:[%s240 + $0x1118] sm:$0xff]
        %v846 = vld [vmem:[%s240 + $0x1120] sm:$0xff]
        %v847 = vld [vmem:[%s240 + $0x1128] sm:$0xff]
        %v848 = vld [vmem:[%s240 + $0x1130] sm:$0xff]
        %v849 = vld [vmem:[%s240 + $0x1138] sm:$0xff]
        %v850 = vld [vmem:[%s240 + $0x1140] sm:$0xff]
        %v851 = vld [vmem:[%s240 + $0x1148] sm:$0xff]
        %v852 = vld [vmem:[%s240 + $0x1150] sm:$0xff]
        %v853 = vld [vmem:[%s240 + $0x1158] sm:$0xff]
        %v854 = vld [vmem:[%s240 + $0x1160] sm:$0xff]
        %v855 = vld [vmem:[%s240 + $0x1168] sm:$0xff]
        %v856 = vld [vmem:[%s240 + $0x1170] sm:$0xff]
        %v857 = vld [vmem:[%s240 + $0x1178] sm:$0xff]
        %v858 = vld [vmem:[%s240 + $0x1180] sm:$0xff]
        %v859 = vld [vmem:[%s240 + $0x1188] sm:$0xff]
        %v860 = vld [vmem:[%s240 + $0x1190] sm:$0xff]
        %v861 = vld [vmem:[%s240 + $0x1198] sm:$0xff]
        %v862 = vld [vmem:[%s240 + $0x11a0] sm:$0xff]
        %v863 = vld [vmem:[%s240 + $0x11a8] sm:$0xff]
        %v864 = vld [vmem:[%s240 + $0x11b0] sm:$0xff]
        %v865 = vld [vmem:[%s240 + $0x11b8] sm:$0xff]
        %v866 = vld [vmem:[%s240 + $0x11c0] sm:$0xff]
        %v867 = vld [vmem:[%s240 + $0x11c8] sm:$0xff]
        %v868 = vld [vmem:[%s240 + $0x11d0] sm:$0xff]
        %v869 = vld [vmem:[%s240 + $0x11d8] sm:$0xff]
        %v870 = vld [vmem:[%s240 + $0x11e0] sm:$0xff]
        %v871 = vld [vmem:[%s240 + $0x11e8] sm:$0xff]
        %v872 = vld [vmem:[%s240 + $0x11f0] sm:$0xff]
        %v873 = vld [vmem:[%s240 + $0x11f8] sm:$0xff]
        %v874 = vld [vmem:[%s240 + $0x1200] sm:$0xff]
        %v875 = vld [vmem:[%s240 + $0x1208] sm:$0xff]
        %v876 = vld [vmem:[%s240 + $0x1210] sm:$0xff]
        %v877 = vld [vmem:[%s240 + $0x1218] sm:$0xff]
        %v878 = vld [vmem:[%s240 + $0x1220] sm:$0xff]
        %v879 = vld [vmem:[%s240 + $0x1228] sm:$0xff]
        %v880 = vld [vmem:[%s240 + $0x1230] sm:$0xff]
        %v881 = vld [vmem:[%s240 + $0x1238] sm:$0xff]
        %v882 = vld [vmem:[%s240 + $0x1240] sm:$0xff]
        %v883 = vld [vmem:[%s240 + $0x1248] sm:$0xff]
        %v884 = vld [vmem:[%s240 + $0x1250] sm:$0xff]
        %v885 = vld [vmem:[%s240 + $0x1258] sm:$0xff]
        %v886 = vld [vmem:[%s240 + $0x1260] sm:$0xff]
        %v887 = vld [vmem:[%s240 + $0x1268] sm:$0xff]
        %v888 = vld [vmem:[%s240 + $0x1270] sm:$0xff]
        %v889 = vld [vmem:[%s240 + $0x1278] sm:$0xff]
        %v890 = vld [vmem:[%s240 + $0x1280] sm:$0xff]
        %v891 = vld [vmem:[%s240 + $0x1288] sm:$0xff]
        %v892 = vld [vmem:[%s240 + $0x1290] sm:$0xff]
        %v893 = vld [vmem:[%s240 + $0x1298] sm:$0xff]
        %v894 = vld [vmem:[%s240 + $0x12a0] sm:$0xff]
        %v895 = vld [vmem:[%s240 + $0x12a8] sm:$0xff]
        %v896 = vld [vmem:[%s240 + $0x12b0] sm:$0xff]
        %v897 = vld [vmem:[%s240 + $0x12b8] sm:$0xff]
        %v898 = vld [vmem:[%s240 + $0x12c0] sm:$0xff]
        %v899 = vld [vmem:[%s240 + $0x12c8] sm:$0xff]
        %v900 = vld [vmem:[%s240 + $0x12d0] sm:$0xff]
        %v901 = vld [vmem:[%s240 + $0x12d8] sm:$0xff]
        %v902 = vld [vmem:[%s240 + $0x12e0] sm:$0xff]
        %v903 = vld [vmem:[%s240 + $0x12e8] sm:$0xff]
        %v904 = vld [vmem:[%s240 + $0x12f0] sm:$0xff]
        %v905 = vld [vmem:[%s240 + $0x12f8] sm:$0xff]
        %v906 = vld [vmem:[%s240 + $0x1300] sm:$0xff]
        %v907 = vld [vmem:[%s240 + $0x1308] sm:$0xff]
        %v908 = vld [vmem:[%s240 + $0x1310] sm:$0xff]
        %v909 = vld [vmem:[%s240 + $0x1318] sm:$0xff]
        %v910 = vld [vmem:[%s240 + $0x1320] sm:$0xff]
        %v911 = vld [vmem:[%s240 + $0x1328] sm:$0xff]
        %v912 = vld [vmem:[%s240 + $0x1330] sm:$0xff]
        %v913 = vld [vmem:[%s240 + $0x1338] sm:$0xff]
        %v914 = vld [vmem:[%s240 + $0x1340] sm:$0xff]
        %v915 = vld [vmem:[%s240 + $0x1348] sm:$0xff]
        %v916 = vld [vmem:[%s240 + $0x1350] sm:$0xff]
        %v917 = vld [vmem:[%s240 + $0x1358] sm:$0xff]
        %v918 = vld [vmem:[%s240 + $0x1360] sm:$0xff]
        %v919 = vld [vmem:[%s240 + $0x1368] sm:$0xff]
        %v920 = vld [vmem:[%s240 + $0x1370] sm:$0xff]
        %v921 = vld [vmem:[%s240 + $0x1378] sm:$0xff]
        %v922 = vld [vmem:[%s240 + $0x1380] sm:$0xff]
        %v923 = vld [vmem:[%s240 + $0x1388] sm:$0xff]
        %v924 = vld [vmem:[%s240 + $0x1390] sm:$0xff]
        %v925 = vld [vmem:[%s240 + $0x1398] sm:$0xff]
        %v926 = vld [vmem:[%s240 + $0x13a0] sm:$0xff]
        %v927 = vld [vmem:[%s240 + $0x13a8] sm:$0xff]
        %v928 = vld [vmem:[%s240 + $0x13b0] sm:$0xff]
        %v929 = vld [vmem:[%s240 + $0x13b8] sm:$0xff]
        %v930 = vld [vmem:[%s240 + $0x13c0] sm:$0xff]
        %v931 = vld [vmem:[%s240 + $0x13c8] sm:$0xff]
        %v932 = vld [vmem:[%s240 + $0x13d0] sm:$0xff]
        %v933 = vld [vmem:[%s240 + $0x13d8] sm:$0xff]
        %v934 = vld [vmem:[%s240 + $0x13e0] sm:$0xff]
        %v935 = vld [vmem:[%s240 + $0x13e8] sm:$0xff]
        %v936 = vld [vmem:[%s240 + $0x13f0] sm:$0xff]
        %v937 = vld [vmem:[%s240 + $0x13f8] sm:$0xff]
        %v938 = vld [vmem:[%s240 + $0x1400] sm:$0xff]
        %v939 = vld [vmem:[%s240 + $0x1408] sm:$0xff]
        %v940 = vld [vmem:[%s240 + $0x1410] sm:$0xff]
        %v941 = vld [vmem:[%s240 + $0x1418] sm:$0xff]
        %v942 = vld [vmem:[%s240 + $0x1420] sm:$0xff]
        %v943 = vld [vmem:[%s240 + $0x1428] sm:$0xff]
        %v944 = vld [vmem:[%s240 + $0x1430] sm:$0xff]
        %v945 = vld [vmem:[%s240 + $0x1438] sm:$0xff]
        %v946 = vld [vmem:[%s240 + $0x1440] sm:$0xff]
        %v947 = vld [vmem:[%s240 + $0x1448] sm:$0xff]
        %v948 = vld [vmem:[%s240 + $0x1450] sm:$0xff]
        %v949 = vld [vmem:[%s240 + $0x1458] sm:$0xff]
        %v950 = vld [vmem:[%s240 + $0x1460] sm:$0xff]
        %v951 = vld [vmem:[%s240 + $0x1468] sm:$0xff]
        %v952 = vld [vmem:[%s240 + $0x1470] sm:$0xff]
        %v953 = vld [vmem:[%s240 + $0x1478] sm:$0xff]
        %v954 = vld [vmem:[%s240 + $0x1480] sm:$0xff]
        %v955 = vld [vmem:[%s240 + $0x1488] sm:$0xff]
        %v956 = vld [vmem:[%s240 + $0x1490] sm:$0xff]
        %v957 = vld [vmem:[%s240 + $0x1498] sm:$0xff]
        %v958 = vld [vmem:[%s240 + $0x14a0] sm:$0xff]
        %v959 = vld [vmem:[%s240 + $0x14a8] sm:$0xff]
        %v960 = vld [vmem:[%s240 + $0x14b0] sm:$0xff]
        %v961 = vld [vmem:[%s240 + $0x14b8] sm:$0xff]
        %v962 = vld [vmem:[%s240 + $0x14c0] sm:$0xff]
        %v963 = vld [vmem:[%s240 + $0x14c8] sm:$0xff]
        %v964 = vld [vmem:[%s240 + $0x14d0] sm:$0xff]
        %v965 = vld [vmem:[%s240 + $0x14d8] sm:$0xff]
        %v966 = vld [vmem:[%s240 + $0x14e0] sm:$0xff]
        %v967 = vld [vmem:[%s240 + $0x14e8] sm:$0xff]
        %v968 = vld [vmem:[%s240 + $0x14f0] sm:$0xff]
        %v969 = vld [vmem:[%s240 + $0x14f8] sm:$0xff]
        %v970 = vld [vmem:[%s240 + $0x1500] sm:$0xff]
        %v971 = vld [vmem:[%s240 + $0x1508] sm:$0xff]
        %v972 = vld [vmem:[%s240 + $0x1510] sm:$0xff]
        %v973 = vld [vmem:[%s240 + $0x1518] sm:$0xff]
        %v974 = vld [vmem:[%s240 + $0x1520] sm:$0xff]
        %v975 = vld [vmem:[%s240 + $0x1528] sm:$0xff]
        %v976 = vld [vmem:[%s240 + $0x1530] sm:$0xff]
        %v977 = vld [vmem:[%s240 + $0x1538] sm:$0xff]
        %v978 = vld [vmem:[%s240 + $0x1540] sm:$0xff]
        %v979 = vld [vmem:[%s240 + $0x1548] sm:$0xff]
        %v980 = vld [vmem:[%s240 + $0x1550] sm:$0xff]
        %v981 = vld [vmem:[%s240 + $0x1558] sm:$0xff]
        %v982 = vld [vmem:[%s240 + $0x1560] sm:$0xff]
        %v983 = vld [vmem:[%s240 + $0x1568] sm:$0xff]
        %v984 = vld [vmem:[%s240 + $0x1570] sm:$0xff]
        %v985 = vld [vmem:[%s240 + $0x1578] sm:$0xff]
        %v986 = vld [vmem:[%s240 + $0x1580] sm:$0xff]
        %v987 = vld [vmem:[%s240 + $0x1588] sm:$0xff]
        %v988 = vld [vmem:[%s240 + $0x1590] sm:$0xff]
        %v989 = vld [vmem:[%s240 + $0x1598] sm:$0xff]
        %v990 = vld [vmem:[%s240 + $0x15a0] sm:$0xff]
        %v991 = vld [vmem:[%s240 + $0x15a8] sm:$0xff]
        %v992 = vld [vmem:[%s240 + $0x15b0] sm:$0xff]
        %v993 = vld [vmem:[%s240 + $0x15b8] sm:$0xff]
        %v994 = vld [vmem:[%s240 + $0x15c0] sm:$0xff]
        %v995 = vld [vmem:[%s240 + $0x15c8] sm:$0xff]
        %v996 = vld [vmem:[%s240 + $0x15d0] sm:$0xff]
        %v997 = vld [vmem:[%s240 + $0x15d8] sm:$0xff]
        %v998 = vld [vmem:[%s240 + $0x15e0] sm:$0xff]
        %v999 = vld [vmem:[%s240 + $0x15e8] sm:$0xff]
        %v1000 = vld [vmem:[%s240 + $0x15f0] sm:$0xff]
        %v1001 = vld [vmem:[%s240 + $0x15f8] sm:$0xff]
        %v1002 = vld [vmem:[%s240 + $0x1600] sm:$0xff]
        %v1003 = vld [vmem:[%s240 + $0x1608] sm:$0xff]
        %v1004 = vld [vmem:[%s240 + $0x1610] sm:$0xff]
        %v1005 = vld [vmem:[%s240 + $0x1618] sm:$0xff]
        %v1006 = vld [vmem:[%s240 + $0x1620] sm:$0xff]
        %v1007 = vld [vmem:[%s240 + $0x1628] sm:$0xff]
        %v1008 = vld [vmem:[%s240 + $0x1630] sm:$0xff]
        %v1009 = vld [vmem:[%s240 + $0x1638] sm:$0xff]
        %v1010 = vld [vmem:[%s240 + $0x1640] sm:$0xff]
        %v1011 = vld [vmem:[%s240 + $0x1648] sm:$0xff]
        %v1012 = vld [vmem:[%s240 + $0x1650] sm:$0xff]
        %v1013 = vld [vmem:[%s240 + $0x1658] sm:$0xff]
        %v1014 = vld [vmem:[%s240 + $0x1660] sm:$0xff]
        %v1015 = vld [vmem:[%s240 + $0x1668] sm:$0xff]
        %v1016 = vld [vmem:[%s240 + $0x1670] sm:$0xff]
        %v1017 = vld [vmem:[%s240 + $0x1678] sm:$0xff]
        %v1018 = vld [vmem:[%s240 + $0x1680] sm:$0xff]
        %v1019 = vld [vmem:[%s240 + $0x1688] sm:$0xff]
        %v1020 = vld [vmem:[%s240 + $0x1690] sm:$0xff]
        %v1021 = vld [vmem:[%s240 + $0x1698] sm:$0xff]
        %v1022 = vld [vmem:[%s240 + $0x16a0] sm:$0xff]
        %v1023 = vld [vmem:[%s240 + $0x16a8] sm:$0xff]
        %v1024 = vld [vmem:[%s240 + $0x16b0] sm:$0xff]
        %v1025 = vld [vmem:[%s240 + $0x16b8] sm:$0xff]
        %v1026 = vld [vmem:[%s240 + $0x16c0] sm:$0xff]
        %v1027 = vld [vmem:[%s240 + $0x16c8] sm:$0xff]
        %v1028 = vld [vmem:[%s240 + $0x16d0] sm:$0xff]
        %v1029 = vld [vmem:[%s240 + $0x16d8] sm:$0xff]
        %v1030 = vld [vmem:[%s240 + $0x16e0] sm:$0xff]
        %v1031 = vld [vmem:[%s240 + $0x16e8] sm:$0xff]
        %v1032 = vld [vmem:[%s240 + $0x16f0] sm:$0xff]
        %v1033 = vld [vmem:[%s240 + $0x16f8] sm:$0xff]
        %v1034 = vld [vmem:[%s240 + $0x1700] sm:$0xff]
        %v1035 = vld [vmem:[%s240 + $0x1708] sm:$0xff]
        %v1036 = vld [vmem:[%s240 + $0x1710] sm:$0xff]
        %v1037 = vld [vmem:[%s240 + $0x1718] sm:$0xff]
        %v1038 = vld [vmem:[%s240 + $0x1720] sm:$0xff]
        %v1039 = vld [vmem:[%s240 + $0x1728] sm:$0xff]
        %v1040 = vld [vmem:[%s240 + $0x1730] sm:$0xff]
        %v1041 = vld [vmem:[%s240 + $0x1738] sm:$0xff]
        %v1042 = vld [vmem:[%s240 + $0x1740] sm:$0xff]
        %v1043 = vld [vmem:[%s240 + $0x1748] sm:$0xff]
        %v1044 = vld [vmem:[%s240 + $0x1750] sm:$0xff]
        %v1045 = vld [vmem:[%s240 + $0x1758] sm:$0xff]
        %v1046 = vld [vmem:[%s240 + $0x1760] sm:$0xff]
        %v1047 = vld [vmem:[%s240 + $0x1768] sm:$0xff]
        %v1048 = vld [vmem:[%s240 + $0x1770] sm:$0xff]
        %v1049 = vld [vmem:[%s240 + $0x1778] sm:$0xff]
        %v1050 = vld [vmem:[%s240 + $0x1780] sm:$0xff]
        %v1051 = vld [vmem:[%s240 + $0x1788] sm:$0xff]
        %v1052 = vld [vmem:[%s240 + $0x1790] sm:$0xff]
        %v1053 = vld [vmem:[%s240 + $0x1798] sm:$0xff]
        %v1054 = vld [vmem:[%s240 + $0x17a0] sm:$0xff]
        %v1055 = vld [vmem:[%s240 + $0x17a8] sm:$0xff]
        %v1056 = vld [vmem:[%s240 + $0x17b0] sm:$0xff]
        %v1057 = vld [vmem:[%s240 + $0x17b8] sm:$0xff]
        %v1058 = vld [vmem:[%s240 + $0x17c0] sm:$0xff]
        %v1059 = vld [vmem:[%s240 + $0x17c8] sm:$0xff]
        %v1060 = vld [vmem:[%s240 + $0x17d0] sm:$0xff]
        %v1061 = vld [vmem:[%s240 + $0x17d8] sm:$0xff]
        %v1062 = vld [vmem:[%s240 + $0x17e0] sm:$0xff]
        %v1063 = vld [vmem:[%s240 + $0x17e8] sm:$0xff]
        %v1064 = vld [vmem:[%s240 + $0x17f0] sm:$0xff]
        %v1065 = vld [vmem:[%s240 + $0x17f8] sm:$0xff]
        %v1066 = vld [vmem:[%s240 + $0x1800] sm:$0xff]
        %v1067 = vld [vmem:[%s240 + $0x1808] sm:$0xff]
        %v1068 = vld [vmem:[%s240 + $0x1810] sm:$0xff]
        %v1069 = vld [vmem:[%s240 + $0x1818] sm:$0xff]
        %v1070 = vld [vmem:[%s240 + $0x1820] sm:$0xff]
        %v1071 = vld [vmem:[%s240 + $0x1828] sm:$0xff]
        %v1072 = vld [vmem:[%s240 + $0x1830] sm:$0xff]
        %v1073 = vld [vmem:[%s240 + $0x1838] sm:$0xff]
        %v1074 = vld [vmem:[%s240 + $0x1840] sm:$0xff]
        %v1075 = vld [vmem:[%s240 + $0x1848] sm:$0xff]
        %v1076 = vld [vmem:[%s240 + $0x1850] sm:$0xff]
        %v1077 = vld [vmem:[%s240 + $0x1858] sm:$0xff]
        %v1078 = vld [vmem:[%s240 + $0x1860] sm:$0xff]
        %v1079 = vld [vmem:[%s240 + $0x1868] sm:$0xff]
        %v1080 = vld [vmem:[%s240 + $0x1870] sm:$0xff]
        %v1081 = vld [vmem:[%s240 + $0x1878] sm:$0xff]
        %v1082 = vld [vmem:[%s240 + $0x1880] sm:$0xff]
        %v1083 = vld [vmem:[%s240 + $0x1888] sm:$0xff]
        %v1084 = vld [vmem:[%s240 + $0x1890] sm:$0xff]
        %v1085 = vld [vmem:[%s240 + $0x1898] sm:$0xff]
        %v1086 = vld [vmem:[%s240 + $0x18a0] sm:$0xff]
        %v1087 = vld [vmem:[%s240 + $0x18a8] sm:$0xff]
        %v1088 = vld [vmem:[%s240 + $0x18b0] sm:$0xff]
        %v1089 = vld [vmem:[%s240 + $0x18b8] sm:$0xff]
        %v1090 = vld [vmem:[%s240 + $0x18c0] sm:$0xff]
        %v1091 = vld [vmem:[%s240 + $0x18c8] sm:$0xff]
        %v1092 = vld [vmem:[%s240 + $0x18d0] sm:$0xff]
        %v1093 = vld [vmem:[%s240 + $0x18d8] sm:$0xff]
        %v1094 = vld [vmem:[%s240 + $0x18e0] sm:$0xff]
        %v1095 = vld [vmem:[%s240 + $0x18e8] sm:$0xff]
        %v1096 = vld [vmem:[%s240 + $0x18f0] sm:$0xff]
        %v1097 = vld [vmem:[%s240 + $0x18f8] sm:$0xff]
        %v1098 = vld [vmem:[%s240 + $0x1900] sm:$0xff]
        %v1099 = vld [vmem:[%s240 + $0x1908] sm:$0xff]
        %v1100 = vld [vmem:[%s240 + $0x1910] sm:$0xff]
        %v1101 = vld [vmem:[%s240 + $0x1918] sm:$0xff]
        %v1102 = vld [vmem:[%s240 + $0x1920] sm:$0xff]
        %v1103 = vld [vmem:[%s240 + $0x1928] sm:$0xff]
        %v1104 = vld [vmem:[%s240 + $0x1930] sm:$0xff]
        %v1105 = vld [vmem:[%s240 + $0x1938] sm:$0xff]
        %v1106 = vld [vmem:[%s240 + $0x1940] sm:$0xff]
        %v1107 = vld [vmem:[%s240 + $0x1948] sm:$0xff]
        %v1108 = vld [vmem:[%s240 + $0x1950] sm:$0xff]
        %v1109 = vld [vmem:[%s240 + $0x1958] sm:$0xff]
        %v1110 = vld [vmem:[%s240 + $0x1960] sm:$0xff]
        %v1111 = vld [vmem:[%s240 + $0x1968] sm:$0xff]
        %v1112 = vld [vmem:[%s240 + $0x1970] sm:$0xff]
        %v1113 = vld [vmem:[%s240 + $0x1978] sm:$0xff]
        %v1114 = vld [vmem:[%s240 + $0x1980] sm:$0xff]
        %v1115 = vld [vmem:[%s240 + $0x1988] sm:$0xff]
        %v1116 = vld [vmem:[%s240 + $0x1990] sm:$0xff]
        %v1117 = vld [vmem:[%s240 + $0x1998] sm:$0xff]
        %v1118 = vld [vmem:[%s240 + $0x19a0] sm:$0xff]
        %v1119 = vld [vmem:[%s240 + $0x19a8] sm:$0xff]
        %v1120 = vld [vmem:[%s240 + $0x19b0] sm:$0xff]
        %v1121 = vld [vmem:[%s240 + $0x19b8] sm:$0xff]
        %v1122 = vld [vmem:[%s240 + $0x19c0] sm:$0xff]
        %v1123 = vld [vmem:[%s240 + $0x19c8] sm:$0xff]
        %v1124 = vld [vmem:[%s240 + $0x19d0] sm:$0xff]
        %v1125 = vld [vmem:[%s240 + $0x19d8] sm:$0xff]
        %v1126 = vld [vmem:[%s240 + $0x19e0] sm:$0xff]
        %v1127 = vld [vmem:[%s240 + $0x19e8] sm:$0xff]
        %v1128 = vld [vmem:[%s240 + $0x19f0] sm:$0xff]
        %v1129 = vld [vmem:[%s240 + $0x19f8] sm:$0xff]
        %v1130 = vld [vmem:[%s240 + $0x1a00] sm:$0xff]
        %v1131 = vld [vmem:[%s240 + $0x1a08] sm:$0xff]
        %v1132 = vld [vmem:[%s240 + $0x1a10] sm:$0xff]
        %v1133 = vld [vmem:[%s240 + $0x1a18] sm:$0xff]
        %v1134 = vld [vmem:[%s240 + $0x1a20] sm:$0xff]
        %v1135 = vld [vmem:[%s240 + $0x1a28] sm:$0xff]
        %v1136 = vld [vmem:[%s240 + $0x1a30] sm:$0xff]
        %v1137 = vld [vmem:[%s240 + $0x1a38] sm:$0xff]
        %v1138 = vld [vmem:[%s240 + $0x1a40] sm:$0xff]
        %v1139 = vld [vmem:[%s240 + $0x1a48] sm:$0xff]
        %v1140 = vld [vmem:[%s240 + $0x1a50] sm:$0xff]
        %v1141 = vld [vmem:[%s240 + $0x1a58] sm:$0xff]
        %v1142 = vld [vmem:[%s240 + $0x1a60] sm:$0xff]
        %v1143 = vld [vmem:[%s240 + $0x1a68] sm:$0xff]
        %v1144 = vld [vmem:[%s240 + $0x1a70] sm:$0xff]
        %v1145 = vld [vmem:[%s240 + $0x1a78] sm:$0xff]
        %v1146 = vld [vmem:[%s240 + $0x1a80] sm:$0xff]
        %v1147 = vld [vmem:[%s240 + $0x1a88] sm:$0xff]
        %v1148 = vld [vmem:[%s240 + $0x1a90] sm:$0xff]
        %v1149 = vld [vmem:[%s240 + $0x1a98] sm:$0xff]
        %v1150 = vld [vmem:[%s240 + $0x1aa0] sm:$0xff]
        %v1151 = vld [vmem:[%s240 + $0x1aa8] sm:$0xff]
        %v1152 = vld [vmem:[%s240 + $0x1ab0] sm:$0xff]
        %v1153 = vld [vmem:[%s240 + $0x1ab8] sm:$0xff]
        %v1154 = vld [vmem:[%s240 + $0x1ac0] sm:$0xff]
        %v1155 = vld [vmem:[%s240 + $0x1ac8] sm:$0xff]
        %v1156 = vld [vmem:[%s240 + $0x1ad0] sm:$0xff]
        %v1157 = vld [vmem:[%s240 + $0x1ad8] sm:$0xff]
        %v1158 = vld [vmem:[%s240 + $0x1ae0] sm:$0xff]
        %v1159 = vld [vmem:[%s240 + $0x1ae8] sm:$0xff]
        %v1160 = vld [vmem:[%s240 + $0x1af0] sm:$0xff]
        %v1161 = vld [vmem:[%s240 + $0x1af8] sm:$0xff]
        %v1162 = vld [vmem:[%s240 + $0x1b00] sm:$0xff]
        %v1163 = vld [vmem:[%s240 + $0x1b08] sm:$0xff]
        %v1164 = vld [vmem:[%s240 + $0x1b10] sm:$0xff]
        %v1165 = vld [vmem:[%s240 + $0x1b18] sm:$0xff]
        %v1166 = vld [vmem:[%s240 + $0x1b20] sm:$0xff]
        %v1167 = vld [vmem:[%s240 + $0x1b28] sm:$0xff]
        %v1168 = vld [vmem:[%s240 + $0x1b30] sm:$0xff]
        %v1169 = vld [vmem:[%s240 + $0x1b38] sm:$0xff]
        %v1170 = vld [vmem:[%s240 + $0x1b40] sm:$0xff]
        %v1171 = vld [vmem:[%s240 + $0x1b48] sm:$0xff]
        %v1172 = vld [vmem:[%s240 + $0x1b50] sm:$0xff]
        %v1173 = vld [vmem:[%s240 + $0x1b58] sm:$0xff]
        %v1174 = vld [vmem:[%s240 + $0x1b60] sm:$0xff]
        %v1175 = vld [vmem:[%s240 + $0x1b68] sm:$0xff]
        %v1176 = vld [vmem:[%s240 + $0x1b70] sm:$0xff]
        %v1177 = vld [vmem:[%s240 + $0x1b78] sm:$0xff]
        %v1178 = vld [vmem:[%s240 + $0x1b80] sm:$0xff]
        %v1179 = vld [vmem:[%s240 + $0x1b88] sm:$0xff]
        %v1180 = vld [vmem:[%s240 + $0x1b90] sm:$0xff]
        %v1181 = vld [vmem:[%s240 + $0x1b98] sm:$0xff]
        %v1182 = vld [vmem:[%s240 + $0x1ba0] sm:$0xff]
        %v1183 = vld [vmem:[%s240 + $0x1ba8] sm:$0xff]
        %v1184 = vld [vmem:[%s240 + $0x1bb0] sm:$0xff]
        %v1185 = vld [vmem:[%s240 + $0x1bb8] sm:$0xff]
        %v1186 = vld [vmem:[%s240 + $0x1bc0] sm:$0xff]
        %v1187 = vld [vmem:[%s240 + $0x1bc8] sm:$0xff]
        %v1188 = vld [vmem:[%s240 + $0x1bd0] sm:$0xff]
        %v1189 = vld [vmem:[%s240 + $0x1bd8] sm:$0xff]
        %v1190 = vld [vmem:[%s240 + $0x1be0] sm:$0xff]
        %v1191 = vld [vmem:[%s240 + $0x1be8] sm:$0xff]
        %v1192 = vld [vmem:[%s240 + $0x1bf0] sm:$0xff]
        %v1193 = vld [vmem:[%s240 + $0x1bf8] sm:$0xff]
        %v1194 = vld [vmem:[%s240 + $0x1c00] sm:$0xff]
        %v1195 = vld [vmem:[%s240 + $0x1c08] sm:$0xff]
        %v1196 = vld [vmem:[%s240 + $0x1c10] sm:$0xff]
        %v1197 = vld [vmem:[%s240 + $0x1c18] sm:$0xff]
        %v1198 = vld [vmem:[%s240 + $0x1c20] sm:$0xff]
        %v1199 = vld [vmem:[%s240 + $0x1c28] sm:$0xff]
        %v1200 = vld [vmem:[%s240 + $0x1c30] sm:$0xff]
        %v1201 = vld [vmem:[%s240 + $0x1c38] sm:$0xff]
        %v1202 = vld [vmem:[%s240 + $0x1c40] sm:$0xff]
        %v1203 = vld [vmem:[%s240 + $0x1c48] sm:$0xff]
        %v1204 = vld [vmem:[%s240 + $0x1c50] sm:$0xff]
        %v1205 = vld [vmem:[%s240 + $0x1c58] sm:$0xff]
        %v1206 = vld [vmem:[%s240 + $0x1c60] sm:$0xff]
        %v1207 = vld [vmem:[%s240 + $0x1c68] sm:$0xff]
        %v1208 = vld [vmem:[%s240 + $0x1c70] sm:$0xff]
        %v1209 = vld [vmem:[%s240 + $0x1c78] sm:$0xff]
        %v1210 = vld [vmem:[%s240 + $0x1c80] sm:$0xff]
        %v1211 = vld [vmem:[%s240 + $0x1c88] sm:$0xff]
        %v1212 = vld [vmem:[%s240 + $0x1c90] sm:$0xff]
        %v1213 = vld [vmem:[%s240 + $0x1c98] sm:$0xff]
        %v1214 = vld [vmem:[%s240 + $0x1ca0] sm:$0xff]
        %v1215 = vld [vmem:[%s240 + $0x1ca8] sm:$0xff]
        %v1216 = vld [vmem:[%s240 + $0x1cb0] sm:$0xff]
        %v1217 = vld [vmem:[%s240 + $0x1cb8] sm:$0xff]
        %v1218 = vld [vmem:[%s240 + $0x1cc0] sm:$0xff]
        %v1219 = vld [vmem:[%s240 + $0x1cc8] sm:$0xff]
        %v1220 = vld [vmem:[%s240 + $0x1cd0] sm:$0xff]
        %v1221 = vld [vmem:[%s240 + $0x1cd8] sm:$0xff]
        %v1222 = vld [vmem:[%s240 + $0x1ce0] sm:$0xff]
        %v1223 = vld [vmem:[%s240 + $0x1ce8] sm:$0xff]
        %v1224 = vld [vmem:[%s240 + $0x1cf0] sm:$0xff]
        %v1225 = vld [vmem:[%s240 + $0x1cf8] sm:$0xff]
        %v1226 = vld [vmem:[%s240 + $0x1d00] sm:$0xff]
        %v1227 = vld [vmem:[%s240 + $0x1d08] sm:$0xff]
        %v1228 = vld [vmem:[%s240 + $0x1d10] sm:$0xff]
        %v1229 = vld [vmem:[%s240 + $0x1d18] sm:$0xff]
        %v1230 = vld [vmem:[%s240 + $0x1d20] sm:$0xff]
        %v1231 = vld [vmem:[%s240 + $0x1d28] sm:$0xff]
        %v1232 = vld [vmem:[%s240 + $0x1d30] sm:$0xff]
        %v1233 = vld [vmem:[%s240 + $0x1d38] sm:$0xff]
        %v1234 = vld [vmem:[%s240 + $0x1d40] sm:$0xff]
        %v1235 = vld [vmem:[%s240 + $0x1d48] sm:$0xff]
        %v1236 = vld [vmem:[%s240 + $0x1d50] sm:$0xff]
        %v1237 = vld [vmem:[%s240 + $0x1d58] sm:$0xff]
        %v1238 = vld [vmem:[%s240 + $0x1d60] sm:$0xff]
        %v1239 = vld [vmem:[%s240 + $0x1d68] sm:$0xff]
        %v1240 = vld [vmem:[%s240 + $0x1d70] sm:$0xff]
        %v1241 = vld [vmem:[%s240 + $0x1d78] sm:$0xff]
        %v1242 = vld [vmem:[%s240 + $0x1d80] sm:$0xff]
        %v1243 = vld [vmem:[%s240 + $0x1d88] sm:$0xff]
        %v1244 = vld [vmem:[%s240 + $0x1d90] sm:$0xff]
        %v1245 = vld [vmem:[%s240 + $0x1d98] sm:$0xff]
        %v1246 = vld [vmem:[%s240 + $0x1da0] sm:$0xff]
        %v1247 = vld [vmem:[%s240 + $0x1da8] sm:$0xff]
        %v1248 = vld [vmem:[%s240 + $0x1db0] sm:$0xff]
        %v1249 = vld [vmem:[%s240 + $0x1db8] sm:$0xff]
        %v1250 = vld [vmem:[%s240 + $0x1dc0] sm:$0xff]
        %v1251 = vld [vmem:[%s240 + $0x1dc8] sm:$0xff]
        %v1252 = vld [vmem:[%s240 + $0x1dd0] sm:$0xff]
        %v1253 = vld [vmem:[%s240 + $0x1dd8] sm:$0xff]
        %v1254 = vld [vmem:[%s240 + $0x1de0] sm:$0xff]
        %v1255 = vld [vmem:[%s240 + $0x1de8] sm:$0xff]
        %v1256 = vld [vmem:[%s240 + $0x1df0] sm:$0xff]
        %v1257 = vld [vmem:[%s240 + $0x1df8] sm:$0xff]
        %v1258 = vld [vmem:[%s240 + $0x1e00] sm:$0xff]
        %v1259 = vld [vmem:[%s240 + $0x1e08] sm:$0xff]
        %v1260 = vld [vmem:[%s240 + $0x1e10] sm:$0xff]
        %v1261 = vld [vmem:[%s240 + $0x1e18] sm:$0xff]
        %v1262 = vld [vmem:[%s240 + $0x1e20] sm:$0xff]
        %v1263 = vld [vmem:[%s240 + $0x1e28] sm:$0xff]
        %v1264 = vld [vmem:[%s240 + $0x1e30] sm:$0xff]
        %v1265 = vld [vmem:[%s240 + $0x1e38] sm:$0xff]
        %v1266 = vld [vmem:[%s240 + $0x1e40] sm:$0xff]
        %v1267 = vld [vmem:[%s240 + $0x1e48] sm:$0xff]
        %v1268 = vld [vmem:[%s240 + $0x1e50] sm:$0xff]
        %v1269 = vld [vmem:[%s240 + $0x1e58] sm:$0xff]
        %v1270 = vld [vmem:[%s240 + $0x1e60] sm:$0xff]
        %v1271 = vld [vmem:[%s240 + $0x1e68] sm:$0xff]
        %v1272 = vld [vmem:[%s240 + $0x1e70] sm:$0xff]
        %v1273 = vld [vmem:[%s240 + $0x1e78] sm:$0xff]
        %v1274 = vld [vmem:[%s240 + $0x1e80] sm:$0xff]
        %v1275 = vld [vmem:[%s240 + $0x1e88] sm:$0xff]
        %v1276 = vld [vmem:[%s240 + $0x1e90] sm:$0xff]
        %v1277 = vld [vmem:[%s240 + $0x1e98] sm:$0xff]
        %v1278 = vld [vmem:[%s240 + $0x1ea0] sm:$0xff]
        %v1279 = vld [vmem:[%s240 + $0x1ea8] sm:$0xff]
        %v1280 = vld [vmem:[%s240 + $0x1eb0] sm:$0xff]
        %v1281 = vld [vmem:[%s240 + $0x1eb8] sm:$0xff]
        %v1282 = vld [vmem:[%s240 + $0x1ec0] sm:$0xff]
        %v1283 = vld [vmem:[%s240 + $0x1ec8] sm:$0xff]
        %v1284 = vld [vmem:[%s240 + $0x1ed0] sm:$0xff]
        %v1285 = vld [vmem:[%s240 + $0x1ed8] sm:$0xff]
        %v1286 = vld [vmem:[%s240 + $0x1ee0] sm:$0xff]
        %v1287 = vld [vmem:[%s240 + $0x1ee8] sm:$0xff]
        %v1288 = vld [vmem:[%s240 + $0x1ef0] sm:$0xff]
        %v1289 = vld [vmem:[%s240 + $0x1ef8] sm:$0xff]
        %v1290 = vld [vmem:[%s240 + $0x1f00] sm:$0xff]
        %v1291 = vld [vmem:[%s240 + $0x1f08] sm:$0xff]
        %v1292 = vld [vmem:[%s240 + $0x1f10] sm:$0xff]
        %v1293 = vld [vmem:[%s240 + $0x1f18] sm:$0xff]
        %v1294 = vld [vmem:[%s240 + $0x1f20] sm:$0xff]
        %v1295 = vld [vmem:[%s240 + $0x1f28] sm:$0xff]
        %v1296 = vld [vmem:[%s240 + $0x1f30] sm:$0xff]
        %v1297 = vld [vmem:[%s240 + $0x1f38] sm:$0xff]
        %v1298 = vld [vmem:[%s240 + $0x1f40] sm:$0xff]
        %v1299 = vld [vmem:[%s240 + $0x1f48] sm:$0xff]
        %v1300 = vld [vmem:[%s240 + $0x1f50] sm:$0xff]
        %v1301 = vld [vmem:[%s240 + $0x1f58] sm:$0xff]
        %v1302 = vld [vmem:[%s240 + $0x1f60] sm:$0xff]
        %v1303 = vld [vmem:[%s240 + $0x1f68] sm:$0xff]
        %v1304 = vld [vmem:[%s240 + $0x1f70] sm:$0xff]
        %v1305 = vld [vmem:[%s240 + $0x1f78] sm:$0xff]
        %v1306 = vld [vmem:[%s240 + $0x1f80] sm:$0xff]
        %v1307 = vld [vmem:[%s240 + $0x1f88] sm:$0xff]
        %v1308 = vld [vmem:[%s240 + $0x1f90] sm:$0xff]
        %v1309 = vld [vmem:[%s240 + $0x1f98] sm:$0xff]
        %v1310 = vld [vmem:[%s240 + $0x1fa0] sm:$0xff]
        %v1311 = vld [vmem:[%s240 + $0x1fa8] sm:$0xff]
        %v1312 = vld [vmem:[%s240 + $0x1fb0] sm:$0xff]
        %v1313 = vld [vmem:[%s240 + $0x1fb8] sm:$0xff]
        %v1314 = vld [vmem:[%s240 + $0x1fc0] sm:$0xff]
        %v1315 = vld [vmem:[%s240 + $0x1fc8] sm:$0xff]
        %v1316 = vld [vmem:[%s240 + $0x1fd0] sm:$0xff]
        %v1317 = vld [vmem:[%s240 + $0x1fd8] sm:$0xff]
        %v1318 = vld [vmem:[%s240 + $0x1fe0] sm:$0xff]
        %v1319 = vld [vmem:[%s240 + $0x1fe8] sm:$0xff]
        %v1320 = vld [vmem:[%s240 + $0x1ff0] sm:$0xff]
        %v1321 = vld [vmem:[%s240 + $0x1ff8] sm:$0xff]
        %v1322 = vld [vmem:[%s240 + $0x2000] sm:$0xff]
        %v1323 = vld [vmem:[%s240 + $0x2008] sm:$0xff]
        %v1324 = vld [vmem:[%s240 + $0x2010] sm:$0xff]
        %v1325 = vld [vmem:[%s240 + $0x2018] sm:$0xff]
        %v1326 = vld [vmem:[%s240 + $0x2020] sm:$0xff]
        %v1327 = vld [vmem:[%s240 + $0x2028] sm:$0xff]
        %v1328 = vld [vmem:[%s240 + $0x2030] sm:$0xff]
        %v1329 = vld [vmem:[%s240 + $0x2038] sm:$0xff]
        %v1330 = vld [vmem:[%s240 + $0x2040] sm:$0xff]
        %v1331 = vld [vmem:[%s240 + $0x2048] sm:$0xff]
        %v1332 = vld [vmem:[%s240 + $0x2050] sm:$0xff]
        %v1333 = vld [vmem:[%s240 + $0x2058] sm:$0xff]
        %v1334 = vld [vmem:[%s240 + $0x2060] sm:$0xff]
        %v1335 = vld [vmem:[%s240 + $0x2068] sm:$0xff]
        %v1336 = vld [vmem:[%s240 + $0x2070] sm:$0xff]
        %v1337 = vld [vmem:[%s240 + $0x2078] sm:$0xff]
        %v1338 = vld [vmem:[%s240 + $0x2080] sm:$0xff]
        %v1339 = vld [vmem:[%s240 + $0x2088] sm:$0xff]
        %v1340 = vld [vmem:[%s240 + $0x2090] sm:$0xff]
        %v1341 = vld [vmem:[%s240 + $0x2098] sm:$0xff]
        %v1342 = vld [vmem:[%s240 + $0x20a0] sm:$0xff]
        %v1343 = vld [vmem:[%s240 + $0x20a8] sm:$0xff]
        %v1344 = vld [vmem:[%s240 + $0x20b0] sm:$0xff]
        %v1345 = vld [vmem:[%s240 + $0x20b8] sm:$0xff]
        %v1346 = vld [vmem:[%s240 + $0x20c0] sm:$0xff]
        %v1347 = vld [vmem:[%s240 + $0x20c8] sm:$0xff]
        %v1348 = vld [vmem:[%s240 + $0x20d0] sm:$0xff]
        %v1349 = vld [vmem:[%s240 + $0x20d8] sm:$0xff]
        %v1350 = vld [vmem:[%s240 + $0x20e0] sm:$0xff]
        %v1351 = vld [vmem:[%s240 + $0x20e8] sm:$0xff]
        %v1352 = vld [vmem:[%s240 + $0x20f0] sm:$0xff]
        %v1353 = vld [vmem:[%s240 + $0x20f8] sm:$0xff]
        %v1354 = vld [vmem:[%s240 + $0x2100] sm:$0xff]
        %v1355 = vld [vmem:[%s240 + $0x2108] sm:$0xff]
        %v1356 = vld [vmem:[%s240 + $0x2110] sm:$0xff]
        %v1357 = vld [vmem:[%s240 + $0x2118] sm:$0xff]
        %v1358 = vld [vmem:[%s240 + $0x2120] sm:$0xff]
        %v1359 = vld [vmem:[%s240 + $0x2128] sm:$0xff]
        %v1360 = vld [vmem:[%s240 + $0x2130] sm:$0xff]
        %v1361 = vld [vmem:[%s240 + $0x2138] sm:$0xff]
        %v1362 = vld [vmem:[%s240 + $0x2140] sm:$0xff]
        %v1363 = vld [vmem:[%s240 + $0x2148] sm:$0xff]
        %v1364 = vld [vmem:[%s240 + $0x2150] sm:$0xff]
        %v1365 = vld [vmem:[%s240 + $0x2158] sm:$0xff]
        %v1366 = vld [vmem:[%s240 + $0x2160] sm:$0xff]
        %v1367 = vld [vmem:[%s240 + $0x2168] sm:$0xff]
        %v1368 = vld [vmem:[%s240 + $0x2170] sm:$0xff]
        %v1369 = vld [vmem:[%s240 + $0x2178] sm:$0xff]
        %v1370 = vld [vmem:[%s240 + $0x2180] sm:$0xff]
        %v1371 = vld [vmem:[%s240 + $0x2188] sm:$0xff]
        %v1372 = vld [vmem:[%s240 + $0x2190] sm:$0xff]
        %v1373 = vld [vmem:[%s240 + $0x2198] sm:$0xff]
        %v1374 = vld [vmem:[%s240 + $0x21a0] sm:$0xff]
        %v1375 = vld [vmem:[%s240 + $0x21a8] sm:$0xff]
        %v1376 = vld [vmem:[%s240 + $0x21b0] sm:$0xff]
        %v1377 = vld [vmem:[%s240 + $0x21b8] sm:$0xff]
        %v1378 = vld [vmem:[%s240 + $0x21c0] sm:$0xff]
        %v1379 = vld [vmem:[%s240 + $0x21c8] sm:$0xff]
        %v1380 = vld [vmem:[%s240 + $0x21d0] sm:$0xff]
        %v1381 = vld [vmem:[%s240 + $0x21d8] sm:$0xff]
        %v1382 = vld [vmem:[%s240 + $0x21e0] sm:$0xff]
        %v1383 = vld [vmem:[%s240 + $0x21e8] sm:$0xff]
        %v1384 = vld [vmem:[%s240 + $0x21f0] sm:$0xff]
        %v1385 = vld [vmem:[%s240 + $0x21f8] sm:$0xff]
        %v1386 = vld [vmem:[%s240 + $0x2200] sm:$0xff]
        %v1387 = vld [vmem:[%s240 + $0x2208] sm:$0xff]
        %v1388 = vld [vmem:[%s240 + $0x2210] sm:$0xff]
        %v1389 = vld [vmem:[%s240 + $0x2218] sm:$0xff]
        %v1390 = vld [vmem:[%s240 + $0x2220] sm:$0xff]
        %v1391 = vld [vmem:[%s240 + $0x2228] sm:$0xff]
        %v1392 = vld [vmem:[%s240 + $0x2230] sm:$0xff]
        %v1393 = vld [vmem:[%s240 + $0x2238] sm:$0xff]
        %v1394 = vld [vmem:[%s240 + $0x2240] sm:$0xff]
        %v1395 = vld [vmem:[%s240 + $0x2248] sm:$0xff]
        %v1396 = vld [vmem:[%s240 + $0x2250] sm:$0xff]
        %v1397 = vld [vmem:[%s240 + $0x2258] sm:$0xff]
        %v1398 = vld [vmem:[%s240 + $0x2260] sm:$0xff]
        %v1399 = vld [vmem:[%s240 + $0x2268] sm:$0xff]
        %v1400 = vld [vmem:[%s240 + $0x2270] sm:$0xff]
        %v1401 = vld [vmem:[%s240 + $0x2278] sm:$0xff]
        %v1402 = vld [vmem:[%s240 + $0x2280] sm:$0xff]
        %v1403 = vld [vmem:[%s240 + $0x2288] sm:$0xff]
        %v1404 = vld [vmem:[%s240 + $0x2290] sm:$0xff]
        %v1405 = vld [vmem:[%s240 + $0x2298] sm:$0xff]
        %v1406 = vld [vmem:[%s240 + $0x22a0] sm:$0xff]
        %v1407 = vld [vmem:[%s240 + $0x22a8] sm:$0xff]
        %v1408 = vld [vmem:[%s240 + $0x22b0] sm:$0xff]
        %v1409 = vld [vmem:[%s240 + $0x22b8] sm:$0xff]
        %v1410 = vld [vmem:[%s240 + $0x22c0] sm:$0xff]
        %v1411 = vld [vmem:[%s240 + $0x22c8] sm:$0xff]
        %v1412 = vld [vmem:[%s240 + $0x22d0] sm:$0xff]
        %v1413 = vld [vmem:[%s240 + $0x22d8] sm:$0xff]
        %v1414 = vld [vmem:[%s240 + $0x22e0] sm:$0xff]
        %v1415 = vld [vmem:[%s240 + $0x22e8] sm:$0xff]
        %v1416 = vld [vmem:[%s240 + $0x22f0] sm:$0xff]
        %v1417 = vld [vmem:[%s240 + $0x22f8] sm:$0xff]
        %v1418 = vld [vmem:[%s240 + $0x2300] sm:$0xff]
        %v1419 = vld [vmem:[%s240 + $0x2308] sm:$0xff]
        %v1420 = vld [vmem:[%s240 + $0x2310] sm:$0xff]
        %v1421 = vld [vmem:[%s240 + $0x2318] sm:$0xff]
        %v1422 = vld [vmem:[%s240 + $0x2320] sm:$0xff]
        %v1423 = vld [vmem:[%s240 + $0x2328] sm:$0xff]
        %v1424 = vld [vmem:[%s240 + $0x2330] sm:$0xff]
        %v1425 = vld [vmem:[%s240 + $0x2338] sm:$0xff]
        %v1426 = vld [vmem:[%s240 + $0x2340] sm:$0xff]
        %v1427 = vld [vmem:[%s240 + $0x2348] sm:$0xff]
        %v1428 = vld [vmem:[%s240 + $0x2350] sm:$0xff]
        %v1429 = vld [vmem:[%s240 + $0x2358] sm:$0xff]
        %v1430 = vld [vmem:[%s240 + $0x2360] sm:$0xff]
        %v1431 = vld [vmem:[%s240 + $0x2368] sm:$0xff]
        %v1432 = vld [vmem:[%s240 + $0x2370] sm:$0xff]
        %v1433 = vld [vmem:[%s240 + $0x2378] sm:$0xff]
        %v1434 = vld [vmem:[%s240 + $0x2380] sm:$0xff]
        %v1435 = vld [vmem:[%s240 + $0x2388] sm:$0xff]
        %v1436 = vld [vmem:[%s240 + $0x2390] sm:$0xff]
        %v1437 = vld [vmem:[%s240 + $0x2398] sm:$0xff]
        %v1438 = vld [vmem:[%s240 + $0x23a0] sm:$0xff]
        %v1439 = vld [vmem:[%s240 + $0x23a8] sm:$0xff]
        %v1440 = vld [vmem:[%s240 + $0x23b0] sm:$0xff]
        %v1441 = vld [vmem:[%s240 + $0x23b8] sm:$0xff]
        %v1442 = vld [vmem:[%s240 + $0x23c0] sm:$0xff]
        %v1443 = vld [vmem:[%s240 + $0x23c8] sm:$0xff]
        %v1444 = vld [vmem:[%s240 + $0x23d0] sm:$0xff]
        %v1445 = vld [vmem:[%s240 + $0x23d8] sm:$0xff]
        %v1446 = vld [vmem:[%s240 + $0x23e0] sm:$0xff]
        %v1447 = vld [vmem:[%s240 + $0x23e8] sm:$0xff]
        %v1448 = vld [vmem:[%s240 + $0x23f0] sm:$0xff]
        %v1449 = vld [vmem:[%s240 + $0x23f8] sm:$0xff]
        %v1450 = vld [vmem:[%s249] sm:$0xff]
        %v1451 = vld [vmem:[%s249 + $0x8] sm:$0xf]
        %v1454 = vlaneseq
        %v1455 = vshrl.u32 %v1454, 7
        %v1456 = vsub.s32 0, %v1455
        %v1457 = vrot.slane %v1450, %v1456
        %v1458 = vlaneseq
        %v1459 = vshrl.u32 %v1458, 7
        %v1460 = vsub.s32 1, %v1459
        %v1461 = vrot.slane %v1450, %v1460
        %v1462 = vlaneseq
        %v1463 = vshrl.u32 %v1462, 7
        %v1464 = vsub.s32 2, %v1463
        %v1465 = vrot.slane %v1450, %v1464
        %v1466 = vlaneseq
        %v1467 = vshrl.u32 %v1466, 7
        %v1468 = vsub.s32 3, %v1467
        %v1469 = vrot.slane %v1450, %v1468
        %v1470 = vlaneseq
        %v1471 = vshrl.u32 %v1470, 7
        %v1472 = vsub.s32 4, %v1471
        %v1473 = vrot.slane %v1450, %v1472
        %v1474 = vlaneseq
        %v1475 = vshrl.u32 %v1474, 7
        %v1476 = vsub.s32 5, %v1475
        %v1477 = vrot.slane %v1450, %v1476
        %v1478 = vlaneseq
        %v1479 = vshrl.u32 %v1478, 7
        %v1480 = vsub.s32 6, %v1479
        %v1481 = vrot.slane %v1450, %v1480
        %v1482 = vlaneseq
        %v1483 = vshrl.u32 %v1482, 7
        %v1484 = vsub.s32 7, %v1483
        %v1485 = vrot.slane %v1450, %v1484
        %v1486 = vlaneseq
        %v1487 = vshrl.u32 %v1486, 7
        %v1488 = vsub.s32 0, %v1487
        %v1489 = vrot.slane %v1451, %v1488
        %v1490 = vlaneseq
        %v1491 = vshrl.u32 %v1490, 7
        %v1492 = vsub.s32 1, %v1491
        %v1493 = vrot.slane %v1451, %v1492
        %v1494 = vlaneseq
        %v1495 = vshrl.u32 %v1494, 7
        %v1496 = vsub.s32 2, %v1495
        %v1497 = vrot.slane %v1451, %v1496
        %v1498 = vlaneseq
        %v1499 = vshrl.u32 %v1498, 7
        %v1500 = vsub.s32 3, %v1499
        %v1501 = vrot.slane %v1451, %v1500
        %1514 = vmatprep.subr.mxu0 %v479
        %1515 = vmatpush1.msra.mxu0 %v478
        %1516 = vmatprep.subr.mxu0 %v467
        %1517 = vmatpush1.msra.mxu0 %v466
        %1518 = vmatprep.subr.mxu0 %v455
        %1519 = vmatpush1.msra.mxu0 %v454
        %1520 = vmatprep.subr.mxu0 %v443
        %1521 = vmatpush1.msra.mxu0 %v442
        %1522 = vmatprep.subr.mxu0 %v431
        %1523 = vmatpush1.msra.mxu0 %v430
        %1524 = vmatprep.subr.mxu0 %v419
        %1525 = vmatpush1.msra.mxu0 %v418
        %1526 = vmatprep.subr.mxu0 %v407
        %1527 = vmatpush1.msra.mxu0 %v406
        %1528 = vmatprep.subr.mxu0 %v395
        %1529 = vmatpush1.msra.mxu0 %v394
        %1530 = vmatprep.subr.mxu0 %v383
        %1531 = vmatpush1.msra.mxu0 %v382
        %1532 = vmatprep.subr.mxu0 %v371
        %1533 = vmatpush1.msra.mxu0 %v370
        %1534 = vmatprep.subr.mxu0 %v359
        %1535 = vmatpush1.msra.mxu0 %v358
        %1536 = vmatprep.subr.mxu0 %v347
        %1537 = vmatpush1.msra.mxu0 %v346
        %1538 = vmatprep.subr.mxu0 %v335
        %1539 = vmatpush1.msra.mxu0 %v334
        %1540 = vmatprep.subr.mxu0 %v323
        %1541 = vmatpush1.msra.mxu0 %v322
        %1542 = vmatprep.subr.mxu0 %v311
        %1543 = vmatpush1.msra.mxu0 %v310
        %1544 = vmatprep.subr.mxu0 %v299
        %1545 = vmatpush1.msra.mxu0 %v298
        %1546 = vmatprep.subr.mxu0 %v671
        %1547 = vmatpush2.msra.mxu0 %v670
        %1548 = vmatprep.subr.mxu0 %v659
        %1549 = vmatpush2.msra.mxu0 %v658
        %1550 = vmatprep.subr.mxu0 %v647
        %1551 = vmatpush2.msra.mxu0 %v646
        %1552 = vmatprep.subr.mxu0 %v635
        %1553 = vmatpush2.msra.mxu0 %v634
        %1554 = vmatprep.subr.mxu0 %v623
        %1555 = vmatpush2.msra.mxu0 %v622
        %1556 = vmatprep.subr.mxu0 %v611
        %1557 = vmatpush2.msra.mxu0 %v610
        %1558 = vmatprep.subr.mxu0 %v599
        %1559 = vmatpush2.msra.mxu0 %v598
        %1560 = vmatprep.subr.mxu0 %v587
        %1561 = vmatpush2.msra.mxu0 %v586
        %1562 = vmatprep.subr.mxu0 %v575
        %1563 = vmatpush2.msra.mxu0 %v574
        %1564 = vmatprep.subr.mxu0 %v563
        %1565 = vmatpush2.msra.mxu0 %v562
        %1566 = vmatprep.subr.mxu0 %v551
        %1567 = vmatpush2.msra.mxu0 %v550
        %1568 = vmatprep.subr.mxu0 %v539
        %1569 = vmatpush2.msra.mxu0 %v538
        %1570 = vmatprep.subr.mxu0 %v527
        %1571 = vmatpush2.msra.mxu0 %v526
        %1572 = vmatprep.subr.mxu0 %v515
        %1573 = vmatpush2.msra.mxu0 %v514
        %1574 = vmatprep.subr.mxu0 %v503
        %1575 = vmatpush2.msra.mxu0 %v502
        %1576 = vmatprep.subr.mxu0 %v491
        %1577 = vmatpush2.msra.mxu0 %v490
        %1578 = vmatprep.mubr.f32.mxu0 %v293
        %1579 = vmatmul.mubr.f32.gmra.mxu0 %v292
        %v1580 = vpop.f32.mrf.mxu0
        %v1581 = vadd.f32 %v1457, %v1580
        %v1582 = vpop.f32.mrf.mxu0
        %v1583 = vadd.f32 %v1461, %v1582
        %1584 = vdwg.mxu0
        %1585 = vmatprep.subr.mxu0 %v863
        %1586 = vmatpush1.msra.mxu0 %v862
        %1587 = vmatprep.subr.mxu0 %v851
        %1588 = vmatpush1.msra.mxu0 %v850
        %1589 = vmatprep.subr.mxu0 %v839
        %1590 = vmatpush1.msra.mxu0 %v838
        %1591 = vmatprep.subr.mxu0 %v827
        %1592 = vmatpush1.msra.mxu0 %v826
        %1593 = vmatprep.subr.mxu0 %v815
        %1594 = vmatpush1.msra.mxu0 %v814
        %1595 = vmatprep.subr.mxu0 %v803
        %1596 = vmatpush1.msra.mxu0 %v802
        %1597 = vmatprep.subr.mxu0 %v791
        %1598 = vmatpush1.msra.mxu0 %v790
        %1599 = vmatprep.subr.mxu0 %v779
        %1600 = vmatpush1.msra.mxu0 %v778
        %1601 = vmatprep.subr.mxu0 %v767
        %1602 = vmatpush1.msra.mxu0 %v766
        %1603 = vmatprep.subr.mxu0 %v755
        %1604 = vmatpush1.msra.mxu0 %v754
        %1605 = vmatprep.subr.mxu0 %v743
        %1606 = vmatpush1.msra.mxu0 %v742
        %1607 = vmatprep.subr.mxu0 %v731
        %1608 = vmatpush1.msra.mxu0 %v730
        %1609 = vmatprep.subr.mxu0 %v719
        %1610 = vmatpush1.msra.mxu0 %v718
        %1611 = vmatprep.subr.mxu0 %v707
        %1612 = vmatpush1.msra.mxu0 %v706
        %1613 = vmatprep.subr.mxu0 %v695
        %1614 = vmatpush1.msra.mxu0 %v694
        %1615 = vmatprep.subr.mxu0 %v683
        %1616 = vmatpush1.msra.mxu0 %v682
        %1617 = vmatprep.subr.mxu0 %v1055
        %1618 = vmatpush2.msra.mxu0 %v1054
        %1619 = vmatprep.subr.mxu0 %v1043
        %1620 = vmatpush2.msra.mxu0 %v1042
        %1621 = vmatprep.subr.mxu0 %v1031
        %1622 = vmatpush2.msra.mxu0 %v1030
        %1623 = vmatprep.subr.mxu0 %v1019
        %1624 = vmatpush2.msra.mxu0 %v1018
        %1625 = vmatprep.subr.mxu0 %v1007
        %1626 = vmatpush2.msra.mxu0 %v1006
        %1627 = vmatprep.subr.mxu0 %v995
        %1628 = vmatpush2.msra.mxu0 %v994
        %1629 = vmatprep.subr.mxu0 %v983
        %1630 = vmatpush2.msra.mxu0 %v982
        %1631 = vmatprep.subr.mxu0 %v971
        %1632 = vmatpush2.msra.mxu0 %v970
        %1633 = vmatprep.subr.mxu0 %v959
        %1634 = vmatpush2.msra.mxu0 %v958
        %1635 = vmatprep.subr.mxu0 %v947
        %1636 = vmatpush2.msra.mxu0 %v946
        %1637 = vmatprep.subr.mxu0 %v935
        %1638 = vmatpush2.msra.mxu0 %v934
        %1639 = vmatprep.subr.mxu0 %v923
        %1640 = vmatpush2.msra.mxu0 %v922
        %1641 = vmatprep.subr.mxu0 %v911
        %1642 = vmatpush2.msra.mxu0 %v910
        %1643 = vmatprep.subr.mxu0 %v899
        %1644 = vmatpush2.msra.mxu0 %v898
        %1645 = vmatprep.subr.mxu0 %v887
        %1646 = vmatpush2.msra.mxu0 %v886
        %1647 = vmatprep.subr.mxu0 %v875
        %1648 = vmatpush2.msra.mxu0 %v874
        %1649 = vmatprep.mubr.f32.mxu0 %v295
        %1650 = vmatmul.mubr.f32.gmra.mxu0 %v294
        %v1651 = vpop.f32.mrf.mxu0
        %v1652 = vadd.f32 %v1581, %v1651
        %v1653 = vpop.f32.mrf.mxu0
        %v1654 = vadd.f32 %v1583, %v1653
        %1655 = vdwg.mxu0
        %1656 = vmatprep.subr.mxu0 %v1247
        %1657 = vmatpush1.msra.mxu0 %v1246
        %1658 = vmatprep.subr.mxu0 %v1235
        %1659 = vmatpush1.msra.mxu0 %v1234
        %1660 = vmatprep.subr.mxu0 %v1223
        %1661 = vmatpush1.msra.mxu0 %v1222
        %1662 = vmatprep.subr.mxu0 %v1211
        %1663 = vmatpush1.msra.mxu0 %v1210
        %1664 = vmatprep.subr.mxu0 %v1199
        %1665 = vmatpush1.msra.mxu0 %v1198
        %1666 = vmatprep.subr.mxu0 %v1187
        %1667 = vmatpush1.msra.mxu0 %v1186
        %1668 = vmatprep.subr.mxu0 %v1175
        %1669 = vmatpush1.msra.mxu0 %v1174
        %1670 = vmatprep.subr.mxu0 %v1163
        %1671 = vmatpush1.msra.mxu0 %v1162
        %1672 = vmatprep.subr.mxu0 %v1151
        %1673 = vmatpush1.msra.mxu0 %v1150
        %1674 = vmatprep.subr.mxu0 %v1139
        %1675 = vmatpush1.msra.mxu0 %v1138
        %1676 = vmatprep.subr.mxu0 %v1127
        %1677 = vmatpush1.msra.mxu0 %v1126
        %1678 = vmatprep.subr.mxu0 %v1115
        %1679 = vmatpush1.msra.mxu0 %v1114
        %1680 = vmatprep.subr.mxu0 %v1103
        %1681 = vmatpush1.msra.mxu0 %v1102
        %1682 = vmatprep.subr.mxu0 %v1091
        %1683 = vmatpush1.msra.mxu0 %v1090
        %1684 = vmatprep.subr.mxu0 %v1079
        %1685 = vmatpush1.msra.mxu0 %v1078
        %1686 = vmatprep.subr.mxu0 %v1067
        %1687 = vmatpush1.msra.mxu0 %v1066
        %1688 = vmatprep.subr.mxu0 %v1439
        %1689 = vmatpush2.msra.mxu0 %v1438
        %1690 = vmatprep.subr.mxu0 %v1427
        %1691 = vmatpush2.msra.mxu0 %v1426
        %1692 = vmatprep.subr.mxu0 %v1415
        %1693 = vmatpush2.msra.mxu0 %v1414
        %1694 = vmatprep.subr.mxu0 %v1403
        %1695 = vmatpush2.msra.mxu0 %v1402
        %1696 = vmatprep.subr.mxu0 %v1391
        %1697 = vmatpush2.msra.mxu0 %v1390
        %1698 = vmatprep.subr.mxu0 %v1379
        %1699 = vmatpush2.msra.mxu0 %v1378
        %1700 = vmatprep.subr.mxu0 %v1367
        %1701 = vmatpush2.msra.mxu0 %v1366
        %1702 = vmatprep.subr.mxu0 %v1355
        %1703 = vmatpush2.msra.mxu0 %v1354
        %1704 = vmatprep.subr.mxu0 %v1343
        %1705 = vmatpush2.msra.mxu0 %v1342
        %1706 = vmatprep.subr.mxu0 %v1331
        %1707 = vmatpush2.msra.mxu0 %v1330
        %1708 = vmatprep.subr.mxu0 %v1319
        %1709 = vmatpush2.msra.mxu0 %v1318
        %1710 = vmatprep.subr.mxu0 %v1307
        %1711 = vmatpush2.msra.mxu0 %v1306
        %1712 = vmatprep.subr.mxu0 %v1295
        %1713 = vmatpush2.msra.mxu0 %v1294
        %1714 = vmatprep.subr.mxu0 %v1283
        %1715 = vmatpush2.msra.mxu0 %v1282
        %1716 = vmatprep.subr.mxu0 %v1271
        %1717 = vmatpush2.msra.mxu0 %v1270
        %1718 = vmatprep.subr.mxu0 %v1259
        %1719 = vmatpush2.msra.mxu0 %v1258
        %1720 = vmatprep.mubr.f32.mxu0 %v297
        %1721 = vmatmul.mubr.f32.gmra.mxu0 %v296
        %v1722 = vpop.f32.mrf.mxu0
        %v1723 = vadd.f32 %v1652, %v1722
        %v1724 = vpop.f32.mrf.mxu0
        %v1725 = vadd.f32 %v1654, %v1724
        %1726 = vdwg.mxu0
        %1727 = vmatprep.subr.mxu0 %v481
        %1728 = vmatpush1.msra.mxu0 %v480
        %1729 = vmatprep.subr.mxu0 %v469
        %1730 = vmatpush1.msra.mxu0 %v468
        %1731 = vmatprep.subr.mxu0 %v457
        %1732 = vmatpush1.msra.mxu0 %v456
        %1733 = vmatprep.subr.mxu0 %v445
        %1734 = vmatpush1.msra.mxu0 %v444
        %1735 = vmatprep.subr.mxu0 %v433
        %1736 = vmatpush1.msra.mxu0 %v432
        %1737 = vmatprep.subr.mxu0 %v421
        %1738 = vmatpush1.msra.mxu0 %v420
        %1739 = vmatprep.subr.mxu0 %v409
        %1740 = vmatpush1.msra.mxu0 %v408
        %1741 = vmatprep.subr.mxu0 %v397
        %1742 = vmatpush1.msra.mxu0 %v396
        %1743 = vmatprep.subr.mxu0 %v385
        %1744 = vmatpush1.msra.mxu0 %v384
        %1745 = vmatprep.subr.mxu0 %v373
        %1746 = vmatpush1.msra.mxu0 %v372
        %1747 = vmatprep.subr.mxu0 %v361
        %1748 = vmatpush1.msra.mxu0 %v360
        %1749 = vmatprep.subr.mxu0 %v349
        %1750 = vmatpush1.msra.mxu0 %v348
        %1751 = vmatprep.subr.mxu0 %v337
        %1752 = vmatpush1.msra.mxu0 %v336
        %1753 = vmatprep.subr.mxu0 %v325
        %1754 = vmatpush1.msra.mxu0 %v324
        %1755 = vmatprep.subr.mxu0 %v313
        %1756 = vmatpush1.msra.mxu0 %v312
        %1757 = vmatprep.subr.mxu0 %v301
        %1758 = vmatpush1.msra.mxu0 %v300
        %1759 = vmatprep.subr.mxu0 %v673
        %1760 = vmatpush2.msra.mxu0 %v672
        %1761 = vmatprep.subr.mxu0 %v661
        %1762 = vmatpush2.msra.mxu0 %v660
        %1763 = vmatprep.subr.mxu0 %v649
        %1764 = vmatpush2.msra.mxu0 %v648
        %1765 = vmatprep.subr.mxu0 %v637
        %1766 = vmatpush2.msra.mxu0 %v636
        %1767 = vmatprep.subr.mxu0 %v625
        %1768 = vmatpush2.msra.mxu0 %v624
        %1769 = vmatprep.subr.mxu0 %v613
        %1770 = vmatpush2.msra.mxu0 %v612
        %1771 = vmatprep.subr.mxu0 %v601
        %1772 = vmatpush2.msra.mxu0 %v600
        %1773 = vmatprep.subr.mxu0 %v589
        %1774 = vmatpush2.msra.mxu0 %v588
        %1775 = vmatprep.subr.mxu0 %v577
        %1776 = vmatpush2.msra.mxu0 %v576
        %1777 = vmatprep.subr.mxu0 %v565
        %1778 = vmatpush2.msra.mxu0 %v564
        %1779 = vmatprep.subr.mxu0 %v553
        %1780 = vmatpush2.msra.mxu0 %v552
        %1781 = vmatprep.subr.mxu0 %v541
        %1782 = vmatpush2.msra.mxu0 %v540
        %1783 = vmatprep.subr.mxu0 %v529
        %1784 = vmatpush2.msra.mxu0 %v528
        %1785 = vmatprep.subr.mxu0 %v517
        %1786 = vmatpush2.msra.mxu0 %v516
        %1787 = vmatprep.subr.mxu0 %v505
        %1788 = vmatpush2.msra.mxu0 %v504
        %1789 = vmatprep.subr.mxu0 %v493
        %1790 = vmatpush2.msra.mxu0 %v492
        %1791 = vmatprep.mubr.f32.mxu0 %v293
        %1792 = vmatmul.mubr.f32.gmra.mxu0 %v292
        %v1793 = vpop.f32.mrf.mxu0
        %v1794 = vadd.f32 %v1465, %v1793
        %v1795 = vpop.f32.mrf.mxu0
        %v1796 = vadd.f32 %v1469, %v1795
        %1797 = vdwg.mxu0
        %1798 = vmatprep.subr.mxu0 %v865
        %1799 = vmatpush1.msra.mxu0 %v864
        %1800 = vmatprep.subr.mxu0 %v853
        %1801 = vmatpush1.msra.mxu0 %v852
        %1802 = vmatprep.subr.mxu0 %v841
        %1803 = vmatpush1.msra.mxu0 %v840
        %1804 = vmatprep.subr.mxu0 %v829
        %1805 = vmatpush1.msra.mxu0 %v828
        %1806 = vmatprep.subr.mxu0 %v817
        %1807 = vmatpush1.msra.mxu0 %v816
        %1808 = vmatprep.subr.mxu0 %v805
        %1809 = vmatpush1.msra.mxu0 %v804
        %1810 = vmatprep.subr.mxu0 %v793
        %1811 = vmatpush1.msra.mxu0 %v792
        %1812 = vmatprep.subr.mxu0 %v781
        %1813 = vmatpush1.msra.mxu0 %v780
        %1814 = vmatprep.subr.mxu0 %v769
        %1815 = vmatpush1.msra.mxu0 %v768
        %1816 = vmatprep.subr.mxu0 %v757
        %1817 = vmatpush1.msra.mxu0 %v756
        %1818 = vmatprep.subr.mxu0 %v745
        %1819 = vmatpush1.msra.mxu0 %v744
        %1820 = vmatprep.subr.mxu0 %v733
        %1821 = vmatpush1.msra.mxu0 %v732
        %1822 = vmatprep.subr.mxu0 %v721
        %1823 = vmatpush1.msra.mxu0 %v720
        %1824 = vmatprep.subr.mxu0 %v709
        %1825 = vmatpush1.msra.mxu0 %v708
        %1826 = vmatprep.subr.mxu0 %v697
        %1827 = vmatpush1.msra.mxu0 %v696
        %1828 = vmatprep.subr.mxu0 %v685
        %1829 = vmatpush1.msra.mxu0 %v684
        %1830 = vmatprep.subr.mxu0 %v1057
        %1831 = vmatpush2.msra.mxu0 %v1056
        %1832 = vmatprep.subr.mxu0 %v1045
        %1833 = vmatpush2.msra.mxu0 %v1044
        %1834 = vmatprep.subr.mxu0 %v1033
        %1835 = vmatpush2.msra.mxu0 %v1032
        %1836 = vmatprep.subr.mxu0 %v1021
        %1837 = vmatpush2.msra.mxu0 %v1020
        %1838 = vmatprep.subr.mxu0 %v1009
        %1839 = vmatpush2.msra.mxu0 %v1008
        %1840 = vmatprep.subr.mxu0 %v997
        %1841 = vmatpush2.msra.mxu0 %v996
        %1842 = vmatprep.subr.mxu0 %v985
        %1843 = vmatpush2.msra.mxu0 %v984
        %1844 = vmatprep.subr.mxu0 %v973
        %1845 = vmatpush2.msra.mxu0 %v972
        %1846 = vmatprep.subr.mxu0 %v961
        %1847 = vmatpush2.msra.mxu0 %v960
        %1848 = vmatprep.subr.mxu0 %v949
        %1849 = vmatpush2.msra.mxu0 %v948
        %1850 = vmatprep.subr.mxu0 %v937
        %1851 = vmatpush2.msra.mxu0 %v936
        %1852 = vmatprep.subr.mxu0 %v925
        %1853 = vmatpush2.msra.mxu0 %v924
        %1854 = vmatprep.subr.mxu0 %v913
        %1855 = vmatpush2.msra.mxu0 %v912
        %1856 = vmatprep.subr.mxu0 %v901
        %1857 = vmatpush2.msra.mxu0 %v900
        %1858 = vmatprep.subr.mxu0 %v889
        %1859 = vmatpush2.msra.mxu0 %v888
        %1860 = vmatprep.subr.mxu0 %v877
        %1861 = vmatpush2.msra.mxu0 %v876
        %1862 = vmatprep.mubr.f32.mxu0 %v295
        %1863 = vmatmul.mubr.f32.gmra.mxu0 %v294
        %v1864 = vpop.f32.mrf.mxu0
        %v1865 = vadd.f32 %v1794, %v1864
        %v1866 = vpop.f32.mrf.mxu0
        %v1867 = vadd.f32 %v1796, %v1866
        %1868 = vdwg.mxu0
        %1869 = vmatprep.subr.mxu0 %v1249
        %1870 = vmatpush1.msra.mxu0 %v1248
        %1871 = vmatprep.subr.mxu0 %v1237
        %1872 = vmatpush1.msra.mxu0 %v1236
        %1873 = vmatprep.subr.mxu0 %v1225
        %1874 = vmatpush1.msra.mxu0 %v1224
        %1875 = vmatprep.subr.mxu0 %v1213
        %1876 = vmatpush1.msra.mxu0 %v1212
        %1877 = vmatprep.subr.mxu0 %v1201
        %1878 = vmatpush1.msra.mxu0 %v1200
        %1879 = vmatprep.subr.mxu0 %v1189
        %1880 = vmatpush1.msra.mxu0 %v1188
        %1881 = vmatprep.subr.mxu0 %v1177
        %1882 = vmatpush1.msra.mxu0 %v1176
        %1883 = vmatprep.subr.mxu0 %v1165
        %1884 = vmatpush1.msra.mxu0 %v1164
        %1885 = vmatprep.subr.mxu0 %v1153
        %1886 = vmatpush1.msra.mxu0 %v1152
        %1887 = vmatprep.subr.mxu0 %v1141
        %1888 = vmatpush1.msra.mxu0 %v1140
        %1889 = vmatprep.subr.mxu0 %v1129
        %1890 = vmatpush1.msra.mxu0 %v1128
        %1891 = vmatprep.subr.mxu0 %v1117
        %1892 = vmatpush1.msra.mxu0 %v1116
        %1893 = vmatprep.subr.mxu0 %v1105
        %1894 = vmatpush1.msra.mxu0 %v1104
        %1895 = vmatprep.subr.mxu0 %v1093
        %1896 = vmatpush1.msra.mxu0 %v1092
        %1897 = vmatprep.subr.mxu0 %v1081
        %1898 = vmatpush1.msra.mxu0 %v1080
        %1899 = vmatprep.subr.mxu0 %v1069
        %1900 = vmatpush1.msra.mxu0 %v1068
        %1901 = vmatprep.subr.mxu0 %v1441
        %1902 = vmatpush2.msra.mxu0 %v1440
        %1903 = vmatprep.subr.mxu0 %v1429
        %1904 = vmatpush2.msra.mxu0 %v1428
        %1905 = vmatprep.subr.mxu0 %v1417
        %1906 = vmatpush2.msra.mxu0 %v1416
        %1907 = vmatprep.subr.mxu0 %v1405
        %1908 = vmatpush2.msra.mxu0 %v1404
        %1909 = vmatprep.subr.mxu0 %v1393
        %1910 = vmatpush2.msra.mxu0 %v1392
        %1911 = vmatprep.subr.mxu0 %v1381
        %1912 = vmatpush2.msra.mxu0 %v1380
        %1913 = vmatprep.subr.mxu0 %v1369
        %1914 = vmatpush2.msra.mxu0 %v1368
        %1915 = vmatprep.subr.mxu0 %v1357
        %1916 = vmatpush2.msra.mxu0 %v1356
        %1917 = vmatprep.subr.mxu0 %v1345
        %1918 = vmatpush2.msra.mxu0 %v1344
        %1919 = vmatprep.subr.mxu0 %v1333
        %1920 = vmatpush2.msra.mxu0 %v1332
        %1921 = vmatprep.subr.mxu0 %v1321
        %1922 = vmatpush2.msra.mxu0 %v1320
        %1923 = vmatprep.subr.mxu0 %v1309
        %1924 = vmatpush2.msra.mxu0 %v1308
        %1925 = vmatprep.subr.mxu0 %v1297
        %1926 = vmatpush2.msra.mxu0 %v1296
        %1927 = vmatprep.subr.mxu0 %v1285
        %1928 = vmatpush2.msra.mxu0 %v1284
        %1929 = vmatprep.subr.mxu0 %v1273
        %1930 = vmatpush2.msra.mxu0 %v1272
        %1931 = vmatprep.subr.mxu0 %v1261
        %1932 = vmatpush2.msra.mxu0 %v1260
        %1933 = vmatprep.mubr.f32.mxu0 %v297
        %1934 = vmatmul.mubr.f32.gmra.mxu0 %v296
        %v1935 = vpop.f32.mrf.mxu0
        %v1936 = vadd.f32 %v1865, %v1935
        %v1937 = vpop.f32.mrf.mxu0
        %v1938 = vadd.f32 %v1867, %v1937
        %1939 = vdwg.mxu0
        %1940 = vmatprep.subr.mxu0 %v483
        %1941 = vmatpush1.msra.mxu0 %v482
        %1942 = vmatprep.subr.mxu0 %v471
        %1943 = vmatpush1.msra.mxu0 %v470
        %1944 = vmatprep.subr.mxu0 %v459
        %1945 = vmatpush1.msra.mxu0 %v458
        %1946 = vmatprep.subr.mxu0 %v447
        %1947 = vmatpush1.msra.mxu0 %v446
        %1948 = vmatprep.subr.mxu0 %v435
        %1949 = vmatpush1.msra.mxu0 %v434
        %1950 = vmatprep.subr.mxu0 %v423
        %1951 = vmatpush1.msra.mxu0 %v422
        %1952 = vmatprep.subr.mxu0 %v411
        %1953 = vmatpush1.msra.mxu0 %v410
        %1954 = vmatprep.subr.mxu0 %v399
        %1955 = vmatpush1.msra.mxu0 %v398
        %1956 = vmatprep.subr.mxu0 %v387
        %1957 = vmatpush1.msra.mxu0 %v386
        %1958 = vmatprep.subr.mxu0 %v375
        %1959 = vmatpush1.msra.mxu0 %v374
        %1960 = vmatprep.subr.mxu0 %v363
        %1961 = vmatpush1.msra.mxu0 %v362
        %1962 = vmatprep.subr.mxu0 %v351
        %1963 = vmatpush1.msra.mxu0 %v350
        %1964 = vmatprep.subr.mxu0 %v339
        %1965 = vmatpush1.msra.mxu0 %v338
        %1966 = vmatprep.subr.mxu0 %v327
        %1967 = vmatpush1.msra.mxu0 %v326
        %1968 = vmatprep.subr.mxu0 %v315
        %1969 = vmatpush1.msra.mxu0 %v314
        %1970 = vmatprep.subr.mxu0 %v303
        %1971 = vmatpush1.msra.mxu0 %v302
        %1972 = vmatprep.subr.mxu0 %v675
        %1973 = vmatpush2.msra.mxu0 %v674
        %1974 = vmatprep.subr.mxu0 %v663
        %1975 = vmatpush2.msra.mxu0 %v662
        %1976 = vmatprep.subr.mxu0 %v651
        %1977 = vmatpush2.msra.mxu0 %v650
        %1978 = vmatprep.subr.mxu0 %v639
        %1979 = vmatpush2.msra.mxu0 %v638
        %1980 = vmatprep.subr.mxu0 %v627
        %1981 = vmatpush2.msra.mxu0 %v626
        %1982 = vmatprep.subr.mxu0 %v615
        %1983 = vmatpush2.msra.mxu0 %v614
        %1984 = vmatprep.subr.mxu0 %v603
        %1985 = vmatpush2.msra.mxu0 %v602
        %1986 = vmatprep.subr.mxu0 %v591
        %1987 = vmatpush2.msra.mxu0 %v590
        %1988 = vmatprep.subr.mxu0 %v579
        %1989 = vmatpush2.msra.mxu0 %v578
        %1990 = vmatprep.subr.mxu0 %v567
        %1991 = vmatpush2.msra.mxu0 %v566
        %1992 = vmatprep.subr.mxu0 %v555
        %1993 = vmatpush2.msra.mxu0 %v554
        %1994 = vmatprep.subr.mxu0 %v543
        %1995 = vmatpush2.msra.mxu0 %v542
        %1996 = vmatprep.subr.mxu0 %v531
        %1997 = vmatpush2.msra.mxu0 %v530
        %1998 = vmatprep.subr.mxu0 %v519
        %1999 = vmatpush2.msra.mxu0 %v518
        %2000 = vmatprep.subr.mxu0 %v507
        %2001 = vmatpush2.msra.mxu0 %v506
        %2002 = vmatprep.subr.mxu0 %v495
        %2003 = vmatpush2.msra.mxu0 %v494
        %2004 = vmatprep.mubr.f32.mxu0 %v293
        %2005 = vmatmul.mubr.f32.gmra.mxu0 %v292
        %v2006 = vpop.f32.mrf.mxu0
        %v2007 = vadd.f32 %v1473, %v2006
        %v2008 = vpop.f32.mrf.mxu0
        %v2009 = vadd.f32 %v1477, %v2008
        %2010 = vdwg.mxu0
        %2011 = vmatprep.subr.mxu0 %v867
        %2012 = vmatpush1.msra.mxu0 %v866
        %2013 = vmatprep.subr.mxu0 %v855
        %2014 = vmatpush1.msra.mxu0 %v854
        %2015 = vmatprep.subr.mxu0 %v843
        %2016 = vmatpush1.msra.mxu0 %v842
        %2017 = vmatprep.subr.mxu0 %v831
        %2018 = vmatpush1.msra.mxu0 %v830
        %2019 = vmatprep.subr.mxu0 %v819
        %2020 = vmatpush1.msra.mxu0 %v818
        %2021 = vmatprep.subr.mxu0 %v807
        %2022 = vmatpush1.msra.mxu0 %v806
        %2023 = vmatprep.subr.mxu0 %v795
        %2024 = vmatpush1.msra.mxu0 %v794
        %2025 = vmatprep.subr.mxu0 %v783
        %2026 = vmatpush1.msra.mxu0 %v782
        %2027 = vmatprep.subr.mxu0 %v771
        %2028 = vmatpush1.msra.mxu0 %v770
        %2029 = vmatprep.subr.mxu0 %v759
        %2030 = vmatpush1.msra.mxu0 %v758
        %2031 = vmatprep.subr.mxu0 %v747
        %2032 = vmatpush1.msra.mxu0 %v746
        %2033 = vmatprep.subr.mxu0 %v735
        %2034 = vmatpush1.msra.mxu0 %v734
        %2035 = vmatprep.subr.mxu0 %v723
        %2036 = vmatpush1.msra.mxu0 %v722
        %2037 = vmatprep.subr.mxu0 %v711
        %2038 = vmatpush1.msra.mxu0 %v710
        %2039 = vmatprep.subr.mxu0 %v699
        %2040 = vmatpush1.msra.mxu0 %v698
        %2041 = vmatprep.subr.mxu0 %v687
        %2042 = vmatpush1.msra.mxu0 %v686
        %2043 = vmatprep.subr.mxu0 %v1059
        %2044 = vmatpush2.msra.mxu0 %v1058
        %2045 = vmatprep.subr.mxu0 %v1047
        %2046 = vmatpush2.msra.mxu0 %v1046
        %2047 = vmatprep.subr.mxu0 %v1035
        %2048 = vmatpush2.msra.mxu0 %v1034
        %2049 = vmatprep.subr.mxu0 %v1023
        %2050 = vmatpush2.msra.mxu0 %v1022
        %2051 = vmatprep.subr.mxu0 %v1011
        %2052 = vmatpush2.msra.mxu0 %v1010
        %2053 = vmatprep.subr.mxu0 %v999
        %2054 = vmatpush2.msra.mxu0 %v998
        %2055 = vmatprep.subr.mxu0 %v987
        %2056 = vmatpush2.msra.mxu0 %v986
        %2057 = vmatprep.subr.mxu0 %v975
        %2058 = vmatpush2.msra.mxu0 %v974
        %2059 = vmatprep.subr.mxu0 %v963
        %2060 = vmatpush2.msra.mxu0 %v962
        %2061 = vmatprep.subr.mxu0 %v951
        %2062 = vmatpush2.msra.mxu0 %v950
        %2063 = vmatprep.subr.mxu0 %v939
        %2064 = vmatpush2.msra.mxu0 %v938
        %2065 = vmatprep.subr.mxu0 %v927
        %2066 = vmatpush2.msra.mxu0 %v926
        %2067 = vmatprep.subr.mxu0 %v915
        %2068 = vmatpush2.msra.mxu0 %v914
        %2069 = vmatprep.subr.mxu0 %v903
        %2070 = vmatpush2.msra.mxu0 %v902
        %2071 = vmatprep.subr.mxu0 %v891
        %2072 = vmatpush2.msra.mxu0 %v890
        %2073 = vmatprep.subr.mxu0 %v879
        %2074 = vmatpush2.msra.mxu0 %v878
        %2075 = vmatprep.mubr.f32.mxu0 %v295
        %2076 = vmatmul.mubr.f32.gmra.mxu0 %v294
        %v2077 = vpop.f32.mrf.mxu0
        %v2078 = vadd.f32 %v2007, %v2077
        %v2079 = vpop.f32.mrf.mxu0
        %v2080 = vadd.f32 %v2009, %v2079
        %2081 = vdwg.mxu0
        %2082 = vmatprep.subr.mxu0 %v1251
        %2083 = vmatpush1.msra.mxu0 %v1250
        %2084 = vmatprep.subr.mxu0 %v1239
        %2085 = vmatpush1.msra.mxu0 %v1238
        %2086 = vmatprep.subr.mxu0 %v1227
        %2087 = vmatpush1.msra.mxu0 %v1226
        %2088 = vmatprep.subr.mxu0 %v1215
        %2089 = vmatpush1.msra.mxu0 %v1214
        %2090 = vmatprep.subr.mxu0 %v1203
        %2091 = vmatpush1.msra.mxu0 %v1202
        %2092 = vmatprep.subr.mxu0 %v1191
        %2093 = vmatpush1.msra.mxu0 %v1190
        %2094 = vmatprep.subr.mxu0 %v1179
        %2095 = vmatpush1.msra.mxu0 %v1178
        %2096 = vmatprep.subr.mxu0 %v1167
        %2097 = vmatpush1.msra.mxu0 %v1166
        %2098 = vmatprep.subr.mxu0 %v1155
        %2099 = vmatpush1.msra.mxu0 %v1154
        %2100 = vmatprep.subr.mxu0 %v1143
        %2101 = vmatpush1.msra.mxu0 %v1142
        %2102 = vmatprep.subr.mxu0 %v1131
        %2103 = vmatpush1.msra.mxu0 %v1130
        %2104 = vmatprep.subr.mxu0 %v1119
        %2105 = vmatpush1.msra.mxu0 %v1118
        %2106 = vmatprep.subr.mxu0 %v1107
        %2107 = vmatpush1.msra.mxu0 %v1106
        %2108 = vmatprep.subr.mxu0 %v1095
        %2109 = vmatpush1.msra.mxu0 %v1094
        %2110 = vmatprep.subr.mxu0 %v1083
        %2111 = vmatpush1.msra.mxu0 %v1082
        %2112 = vmatprep.subr.mxu0 %v1071
        %2113 = vmatpush1.msra.mxu0 %v1070
        %2114 = vmatprep.subr.mxu0 %v1443
        %2115 = vmatpush2.msra.mxu0 %v1442
        %2116 = vmatprep.subr.mxu0 %v1431
        %2117 = vmatpush2.msra.mxu0 %v1430
        %2118 = vmatprep.subr.mxu0 %v1419
        %2119 = vmatpush2.msra.mxu0 %v1418
        %2120 = vmatprep.subr.mxu0 %v1407
        %2121 = vmatpush2.msra.mxu0 %v1406
        %2122 = vmatprep.subr.mxu0 %v1395
        %2123 = vmatpush2.msra.mxu0 %v1394
        %2124 = vmatprep.subr.mxu0 %v1383
        %2125 = vmatpush2.msra.mxu0 %v1382
        %2126 = vmatprep.subr.mxu0 %v1371
        %2127 = vmatpush2.msra.mxu0 %v1370
        %2128 = vmatprep.subr.mxu0 %v1359
        %2129 = vmatpush2.msra.mxu0 %v1358
        %2130 = vmatprep.subr.mxu0 %v1347
        %2131 = vmatpush2.msra.mxu0 %v1346
        %2132 = vmatprep.subr.mxu0 %v1335
        %2133 = vmatpush2.msra.mxu0 %v1334
        %2134 = vmatprep.subr.mxu0 %v1323
        %2135 = vmatpush2.msra.mxu0 %v1322
        %2136 = vmatprep.subr.mxu0 %v1311
        %2137 = vmatpush2.msra.mxu0 %v1310
        %2138 = vmatprep.subr.mxu0 %v1299
        %2139 = vmatpush2.msra.mxu0 %v1298
        %2140 = vmatprep.subr.mxu0 %v1287
        %2141 = vmatpush2.msra.mxu0 %v1286
        %2142 = vmatprep.subr.mxu0 %v1275
        %2143 = vmatpush2.msra.mxu0 %v1274
        %2144 = vmatprep.subr.mxu0 %v1263
        %2145 = vmatpush2.msra.mxu0 %v1262
        %2146 = vmatprep.mubr.f32.mxu0 %v297
        %2147 = vmatmul.mubr.f32.gmra.mxu0 %v296
        %v2148 = vpop.f32.mrf.mxu0
        %v2149 = vadd.f32 %v2078, %v2148
        %v2150 = vpop.f32.mrf.mxu0
        %v2151 = vadd.f32 %v2080, %v2150
        %2152 = vdwg.mxu0
        %2153 = vmatprep.subr.mxu0 %v485
        %2154 = vmatpush1.msra.mxu0 %v484
        %2155 = vmatprep.subr.mxu0 %v473
        %2156 = vmatpush1.msra.mxu0 %v472
        %2157 = vmatprep.subr.mxu0 %v461
        %2158 = vmatpush1.msra.mxu0 %v460
        %2159 = vmatprep.subr.mxu0 %v449
        %2160 = vmatpush1.msra.mxu0 %v448
        %2161 = vmatprep.subr.mxu0 %v437
        %2162 = vmatpush1.msra.mxu0 %v436
        %2163 = vmatprep.subr.mxu0 %v425
        %2164 = vmatpush1.msra.mxu0 %v424
        %2165 = vmatprep.subr.mxu0 %v413
        %2166 = vmatpush1.msra.mxu0 %v412
        %2167 = vmatprep.subr.mxu0 %v401
        %2168 = vmatpush1.msra.mxu0 %v400
        %2169 = vmatprep.subr.mxu0 %v389
        %2170 = vmatpush1.msra.mxu0 %v388
        %2171 = vmatprep.subr.mxu0 %v377
        %2172 = vmatpush1.msra.mxu0 %v376
        %2173 = vmatprep.subr.mxu0 %v365
        %2174 = vmatpush1.msra.mxu0 %v364
        %2175 = vmatprep.subr.mxu0 %v353
        %2176 = vmatpush1.msra.mxu0 %v352
        %2177 = vmatprep.subr.mxu0 %v341
        %2178 = vmatpush1.msra.mxu0 %v340
        %2179 = vmatprep.subr.mxu0 %v329
        %2180 = vmatpush1.msra.mxu0 %v328
        %2181 = vmatprep.subr.mxu0 %v317
        %2182 = vmatpush1.msra.mxu0 %v316
        %2183 = vmatprep.subr.mxu0 %v305
        %2184 = vmatpush1.msra.mxu0 %v304
        %2185 = vmatprep.subr.mxu0 %v677
        %2186 = vmatpush2.msra.mxu0 %v676
        %2187 = vmatprep.subr.mxu0 %v665
        %2188 = vmatpush2.msra.mxu0 %v664
        %2189 = vmatprep.subr.mxu0 %v653
        %2190 = vmatpush2.msra.mxu0 %v652
        %2191 = vmatprep.subr.mxu0 %v641
        %2192 = vmatpush2.msra.mxu0 %v640
        %2193 = vmatprep.subr.mxu0 %v629
        %2194 = vmatpush2.msra.mxu0 %v628
        %2195 = vmatprep.subr.mxu0 %v617
        %2196 = vmatpush2.msra.mxu0 %v616
        %2197 = vmatprep.subr.mxu0 %v605
        %2198 = vmatpush2.msra.mxu0 %v604
        %2199 = vmatprep.subr.mxu0 %v593
        %2200 = vmatpush2.msra.mxu0 %v592
        %2201 = vmatprep.subr.mxu0 %v581
        %2202 = vmatpush2.msra.mxu0 %v580
        %2203 = vmatprep.subr.mxu0 %v569
        %2204 = vmatpush2.msra.mxu0 %v568
        %2205 = vmatprep.subr.mxu0 %v557
        %2206 = vmatpush2.msra.mxu0 %v556
        %2207 = vmatprep.subr.mxu0 %v545
        %2208 = vmatpush2.msra.mxu0 %v544
        %2209 = vmatprep.subr.mxu0 %v533
        %2210 = vmatpush2.msra.mxu0 %v532
        %2211 = vmatprep.subr.mxu0 %v521
        %2212 = vmatpush2.msra.mxu0 %v520
        %2213 = vmatprep.subr.mxu0 %v509
        %2214 = vmatpush2.msra.mxu0 %v508
        %2215 = vmatprep.subr.mxu0 %v497
        %2216 = vmatpush2.msra.mxu0 %v496
        %2217 = vmatprep.mubr.f32.mxu0 %v293
        %2218 = vmatmul.mubr.f32.gmra.mxu0 %v292
        %v2219 = vpop.f32.mrf.mxu0
        %v2220 = vadd.f32 %v1481, %v2219
        %v2221 = vpop.f32.mrf.mxu0
        %v2222 = vadd.f32 %v1485, %v2221
        %2223 = vdwg.mxu0
        %2224 = vmatprep.subr.mxu0 %v869
        %2225 = vmatpush1.msra.mxu0 %v868
        %2226 = vmatprep.subr.mxu0 %v857
        %2227 = vmatpush1.msra.mxu0 %v856
        %2228 = vmatprep.subr.mxu0 %v845
        %2229 = vmatpush1.msra.mxu0 %v844
        %2230 = vmatprep.subr.mxu0 %v833
        %2231 = vmatpush1.msra.mxu0 %v832
        %2232 = vmatprep.subr.mxu0 %v821
        %2233 = vmatpush1.msra.mxu0 %v820
        %2234 = vmatprep.subr.mxu0 %v809
        %2235 = vmatpush1.msra.mxu0 %v808
        %2236 = vmatprep.subr.mxu0 %v797
        %2237 = vmatpush1.msra.mxu0 %v796
        %2238 = vmatprep.subr.mxu0 %v785
        %2239 = vmatpush1.msra.mxu0 %v784
        %2240 = vmatprep.subr.mxu0 %v773
        %2241 = vmatpush1.msra.mxu0 %v772
        %2242 = vmatprep.subr.mxu0 %v761
        %2243 = vmatpush1.msra.mxu0 %v760
        %2244 = vmatprep.subr.mxu0 %v749
        %2245 = vmatpush1.msra.mxu0 %v748
        %2246 = vmatprep.subr.mxu0 %v737
        %2247 = vmatpush1.msra.mxu0 %v736
        %2248 = vmatprep.subr.mxu0 %v725
        %2249 = vmatpush1.msra.mxu0 %v724
        %2250 = vmatprep.subr.mxu0 %v713
        %2251 = vmatpush1.msra.mxu0 %v712
        %2252 = vmatprep.subr.mxu0 %v701
        %2253 = vmatpush1.msra.mxu0 %v700
        %2254 = vmatprep.subr.mxu0 %v689
        %2255 = vmatpush1.msra.mxu0 %v688
        %2256 = vmatprep.subr.mxu0 %v1061
        %2257 = vmatpush2.msra.mxu0 %v1060
        %2258 = vmatprep.subr.mxu0 %v1049
        %2259 = vmatpush2.msra.mxu0 %v1048
        %2260 = vmatprep.subr.mxu0 %v1037
        %2261 = vmatpush2.msra.mxu0 %v1036
        %2262 = vmatprep.subr.mxu0 %v1025
        %2263 = vmatpush2.msra.mxu0 %v1024
        %2264 = vmatprep.subr.mxu0 %v1013
        %2265 = vmatpush2.msra.mxu0 %v1012
        %2266 = vmatprep.subr.mxu0 %v1001
        %2267 = vmatpush2.msra.mxu0 %v1000
        %2268 = vmatprep.subr.mxu0 %v989
        %2269 = vmatpush2.msra.mxu0 %v988
        %2270 = vmatprep.subr.mxu0 %v977
        %2271 = vmatpush2.msra.mxu0 %v976
        %2272 = vmatprep.subr.mxu0 %v965
        %2273 = vmatpush2.msra.mxu0 %v964
        %2274 = vmatprep.subr.mxu0 %v953
        %2275 = vmatpush2.msra.mxu0 %v952
        %2276 = vmatprep.subr.mxu0 %v941
        %2277 = vmatpush2.msra.mxu0 %v940
        %2278 = vmatprep.subr.mxu0 %v929
        %2279 = vmatpush2.msra.mxu0 %v928
        %2280 = vmatprep.subr.mxu0 %v917
        %2281 = vmatpush2.msra.mxu0 %v916
        %2282 = vmatprep.subr.mxu0 %v905
        %2283 = vmatpush2.msra.mxu0 %v904
        %2284 = vmatprep.subr.mxu0 %v893
        %2285 = vmatpush2.msra.mxu0 %v892
        %2286 = vmatprep.subr.mxu0 %v881
        %2287 = vmatpush2.msra.mxu0 %v880
        %2288 = vmatprep.mubr.f32.mxu0 %v295
        %2289 = vmatmul.mubr.f32.gmra.mxu0 %v294
        %v2290 = vpop.f32.mrf.mxu0
        %v2291 = vadd.f32 %v2220, %v2290
        %v2292 = vpop.f32.mrf.mxu0
        %v2293 = vadd.f32 %v2222, %v2292
        %2294 = vdwg.mxu0
        %2295 = vmatprep.subr.mxu0 %v1253
        %2296 = vmatpush1.msra.mxu0 %v1252
        %2297 = vmatprep.subr.mxu0 %v1241
        %2298 = vmatpush1.msra.mxu0 %v1240
        %2299 = vmatprep.subr.mxu0 %v1229
        %2300 = vmatpush1.msra.mxu0 %v1228
        %2301 = vmatprep.subr.mxu0 %v1217
        %2302 = vmatpush1.msra.mxu0 %v1216
        %2303 = vmatprep.subr.mxu0 %v1205
        %2304 = vmatpush1.msra.mxu0 %v1204
        %2305 = vmatprep.subr.mxu0 %v1193
        %2306 = vmatpush1.msra.mxu0 %v1192
        %2307 = vmatprep.subr.mxu0 %v1181
        %2308 = vmatpush1.msra.mxu0 %v1180
        %2309 = vmatprep.subr.mxu0 %v1169
        %2310 = vmatpush1.msra.mxu0 %v1168
        %2311 = vmatprep.subr.mxu0 %v1157
        %2312 = vmatpush1.msra.mxu0 %v1156
        %2313 = vmatprep.subr.mxu0 %v1145
        %2314 = vmatpush1.msra.mxu0 %v1144
        %2315 = vmatprep.subr.mxu0 %v1133
        %2316 = vmatpush1.msra.mxu0 %v1132
        %2317 = vmatprep.subr.mxu0 %v1121
        %2318 = vmatpush1.msra.mxu0 %v1120
        %2319 = vmatprep.subr.mxu0 %v1109
        %2320 = vmatpush1.msra.mxu0 %v1108
        %2321 = vmatprep.subr.mxu0 %v1097
        %2322 = vmatpush1.msra.mxu0 %v1096
        %2323 = vmatprep.subr.mxu0 %v1085
        %2324 = vmatpush1.msra.mxu0 %v1084
        %2325 = vmatprep.subr.mxu0 %v1073
        %2326 = vmatpush1.msra.mxu0 %v1072
        %2327 = vmatprep.subr.mxu0 %v1445
        %2328 = vmatpush2.msra.mxu0 %v1444
        %2329 = vmatprep.subr.mxu0 %v1433
        %2330 = vmatpush2.msra.mxu0 %v1432
        %2331 = vmatprep.subr.mxu0 %v1421
        %2332 = vmatpush2.msra.mxu0 %v1420
        %2333 = vmatprep.subr.mxu0 %v1409
        %2334 = vmatpush2.msra.mxu0 %v1408
        %2335 = vmatprep.subr.mxu0 %v1397
        %2336 = vmatpush2.msra.mxu0 %v1396
        %2337 = vmatprep.subr.mxu0 %v1385
        %2338 = vmatpush2.msra.mxu0 %v1384
        %2339 = vmatprep.subr.mxu0 %v1373
        %2340 = vmatpush2.msra.mxu0 %v1372
        %2341 = vmatprep.subr.mxu0 %v1361
        %2342 = vmatpush2.msra.mxu0 %v1360
        %2343 = vmatprep.subr.mxu0 %v1349
        %2344 = vmatpush2.msra.mxu0 %v1348
        %2345 = vmatprep.subr.mxu0 %v1337
        %2346 = vmatpush2.msra.mxu0 %v1336
        %2347 = vmatprep.subr.mxu0 %v1325
        %2348 = vmatpush2.msra.mxu0 %v1324
        %2349 = vmatprep.subr.mxu0 %v1313
        %2350 = vmatpush2.msra.mxu0 %v1312
        %2351 = vmatprep.subr.mxu0 %v1301
        %2352 = vmatpush2.msra.mxu0 %v1300
        %2353 = vmatprep.subr.mxu0 %v1289
        %2354 = vmatpush2.msra.mxu0 %v1288
        %2355 = vmatprep.subr.mxu0 %v1277
        %2356 = vmatpush2.msra.mxu0 %v1276
        %2357 = vmatprep.subr.mxu0 %v1265
        %2358 = vmatpush2.msra.mxu0 %v1264
        %2359 = vmatprep.mubr.f32.mxu0 %v297
        %2360 = vmatmul.mubr.f32.gmra.mxu0 %v296
        %v2361 = vpop.f32.mrf.mxu0
        %v2362 = vadd.f32 %v2291, %v2361
        %v2363 = vpop.f32.mrf.mxu0
        %v2364 = vadd.f32 %v2293, %v2363
        %2365 = vdwg.mxu0
        %2366 = vmatprep.subr.mxu0 %v487
        %2367 = vmatpush1.msra.mxu0 %v486
        %2368 = vmatprep.subr.mxu0 %v475
        %2369 = vmatpush1.msra.mxu0 %v474
        %2370 = vmatprep.subr.mxu0 %v463
        %2371 = vmatpush1.msra.mxu0 %v462
        %2372 = vmatprep.subr.mxu0 %v451
        %2373 = vmatpush1.msra.mxu0 %v450
        %2374 = vmatprep.subr.mxu0 %v439
        %2375 = vmatpush1.msra.mxu0 %v438
        %2376 = vmatprep.subr.mxu0 %v427
        %2377 = vmatpush1.msra.mxu0 %v426
        %2378 = vmatprep.subr.mxu0 %v415
        %2379 = vmatpush1.msra.mxu0 %v414
        %2380 = vmatprep.subr.mxu0 %v403
        %2381 = vmatpush1.msra.mxu0 %v402
        %2382 = vmatprep.subr.mxu0 %v391
        %2383 = vmatpush1.msra.mxu0 %v390
        %2384 = vmatprep.subr.mxu0 %v379
        %2385 = vmatpush1.msra.mxu0 %v378
        %2386 = vmatprep.subr.mxu0 %v367
        %2387 = vmatpush1.msra.mxu0 %v366
        %2388 = vmatprep.subr.mxu0 %v355
        %2389 = vmatpush1.msra.mxu0 %v354
        %2390 = vmatprep.subr.mxu0 %v343
        %2391 = vmatpush1.msra.mxu0 %v342
        %2392 = vmatprep.subr.mxu0 %v331
        %2393 = vmatpush1.msra.mxu0 %v330
        %2394 = vmatprep.subr.mxu0 %v319
        %2395 = vmatpush1.msra.mxu0 %v318
        %2396 = vmatprep.subr.mxu0 %v307
        %2397 = vmatpush1.msra.mxu0 %v306
        %2398 = vmatprep.subr.mxu0 %v679
        %2399 = vmatpush2.msra.mxu0 %v678
        %2400 = vmatprep.subr.mxu0 %v667
        %2401 = vmatpush2.msra.mxu0 %v666
        %2402 = vmatprep.subr.mxu0 %v655
        %2403 = vmatpush2.msra.mxu0 %v654
        %2404 = vmatprep.subr.mxu0 %v643
        %2405 = vmatpush2.msra.mxu0 %v642
        %2406 = vmatprep.subr.mxu0 %v631
        %2407 = vmatpush2.msra.mxu0 %v630
        %2408 = vmatprep.subr.mxu0 %v619
        %2409 = vmatpush2.msra.mxu0 %v618
        %2410 = vmatprep.subr.mxu0 %v607
        %2411 = vmatpush2.msra.mxu0 %v606
        %2412 = vmatprep.subr.mxu0 %v595
        %2413 = vmatpush2.msra.mxu0 %v594
        %2414 = vmatprep.subr.mxu0 %v583
        %2415 = vmatpush2.msra.mxu0 %v582
        %2416 = vmatprep.subr.mxu0 %v571
        %2417 = vmatpush2.msra.mxu0 %v570
        %2418 = vmatprep.subr.mxu0 %v559
        %2419 = vmatpush2.msra.mxu0 %v558
        %2420 = vmatprep.subr.mxu0 %v547
        %2421 = vmatpush2.msra.mxu0 %v546
        %2422 = vmatprep.subr.mxu0 %v535
        %2423 = vmatpush2.msra.mxu0 %v534
        %2424 = vmatprep.subr.mxu0 %v523
        %2425 = vmatpush2.msra.mxu0 %v522
        %2426 = vmatprep.subr.mxu0 %v511
        %2427 = vmatpush2.msra.mxu0 %v510
        %2428 = vmatprep.subr.mxu0 %v499
        %2429 = vmatpush2.msra.mxu0 %v498
        %2430 = vmatprep.mubr.f32.mxu0 %v293
        %2431 = vmatmul.mubr.f32.gmra.mxu0 %v292
        %v2432 = vpop.f32.mrf.mxu0
        %v2433 = vadd.f32 %v1489, %v2432
        %v2434 = vpop.f32.mrf.mxu0
        %v2435 = vadd.f32 %v1493, %v2434
        %2436 = vdwg.mxu0
        %2437 = vmatprep.subr.mxu0 %v871
        %2438 = vmatpush1.msra.mxu0 %v870
        %2439 = vmatprep.subr.mxu0 %v859
        %2440 = vmatpush1.msra.mxu0 %v858
        %2441 = vmatprep.subr.mxu0 %v847
        %2442 = vmatpush1.msra.mxu0 %v846
        %2443 = vmatprep.subr.mxu0 %v835
        %2444 = vmatpush1.msra.mxu0 %v834
        %2445 = vmatprep.subr.mxu0 %v823
        %2446 = vmatpush1.msra.mxu0 %v822
        %2447 = vmatprep.subr.mxu0 %v811
        %2448 = vmatpush1.msra.mxu0 %v810
        %2449 = vmatprep.subr.mxu0 %v799
        %2450 = vmatpush1.msra.mxu0 %v798
        %2451 = vmatprep.subr.mxu0 %v787
        %2452 = vmatpush1.msra.mxu0 %v786
        %2453 = vmatprep.subr.mxu0 %v775
        %2454 = vmatpush1.msra.mxu0 %v774
        %2455 = vmatprep.subr.mxu0 %v763
        %2456 = vmatpush1.msra.mxu0 %v762
        %2457 = vmatprep.subr.mxu0 %v751
        %2458 = vmatpush1.msra.mxu0 %v750
        %2459 = vmatprep.subr.mxu0 %v739
        %2460 = vmatpush1.msra.mxu0 %v738
        %2461 = vmatprep.subr.mxu0 %v727
        %2462 = vmatpush1.msra.mxu0 %v726
        %2463 = vmatprep.subr.mxu0 %v715
        %2464 = vmatpush1.msra.mxu0 %v714
        %2465 = vmatprep.subr.mxu0 %v703
        %2466 = vmatpush1.msra.mxu0 %v702
        %2467 = vmatprep.subr.mxu0 %v691
        %2468 = vmatpush1.msra.mxu0 %v690
        %2469 = vmatprep.subr.mxu0 %v1063
        %2470 = vmatpush2.msra.mxu0 %v1062
        %2471 = vmatprep.subr.mxu0 %v1051
        %2472 = vmatpush2.msra.mxu0 %v1050
        %2473 = vmatprep.subr.mxu0 %v1039
        %2474 = vmatpush2.msra.mxu0 %v1038
        %2475 = vmatprep.subr.mxu0 %v1027
        %2476 = vmatpush2.msra.mxu0 %v1026
        %2477 = vmatprep.subr.mxu0 %v1015
        %2478 = vmatpush2.msra.mxu0 %v1014
        %2479 = vmatprep.subr.mxu0 %v1003
        %2480 = vmatpush2.msra.mxu0 %v1002
        %2481 = vmatprep.subr.mxu0 %v991
        %2482 = vmatpush2.msra.mxu0 %v990
        %2483 = vmatprep.subr.mxu0 %v979
        %2484 = vmatpush2.msra.mxu0 %v978
        %2485 = vmatprep.subr.mxu0 %v967
        %2486 = vmatpush2.msra.mxu0 %v966
        %2487 = vmatprep.subr.mxu0 %v955
        %2488 = vmatpush2.msra.mxu0 %v954
        %2489 = vmatprep.subr.mxu0 %v943
        %2490 = vmatpush2.msra.mxu0 %v942
        %2491 = vmatprep.subr.mxu0 %v931
        %2492 = vmatpush2.msra.mxu0 %v930
        %2493 = vmatprep.subr.mxu0 %v919
        %2494 = vmatpush2.msra.mxu0 %v918
        %2495 = vmatprep.subr.mxu0 %v907
        %2496 = vmatpush2.msra.mxu0 %v906
        %2497 = vmatprep.subr.mxu0 %v895
        %2498 = vmatpush2.msra.mxu0 %v894
        %2499 = vmatprep.subr.mxu0 %v883
        %2500 = vmatpush2.msra.mxu0 %v882
        %2501 = vmatprep.mubr.f32.mxu0 %v295
        %2502 = vmatmul.mubr.f32.gmra.mxu0 %v294
        %v2503 = vpop.f32.mrf.mxu0
        %v2504 = vadd.f32 %v2433, %v2503
        %v2505 = vpop.f32.mrf.mxu0
        %v2506 = vadd.f32 %v2435, %v2505
        %2507 = vdwg.mxu0
        %2508 = vmatprep.subr.mxu0 %v1255
        %2509 = vmatpush1.msra.mxu0 %v1254
        %2510 = vmatprep.subr.mxu0 %v1243
        %2511 = vmatpush1.msra.mxu0 %v1242
        %2512 = vmatprep.subr.mxu0 %v1231
        %2513 = vmatpush1.msra.mxu0 %v1230
        %2514 = vmatprep.subr.mxu0 %v1219
        %2515 = vmatpush1.msra.mxu0 %v1218
        %2516 = vmatprep.subr.mxu0 %v1207
        %2517 = vmatpush1.msra.mxu0 %v1206
        %2518 = vmatprep.subr.mxu0 %v1195
        %2519 = vmatpush1.msra.mxu0 %v1194
        %2520 = vmatprep.subr.mxu0 %v1183
        %2521 = vmatpush1.msra.mxu0 %v1182
        %2522 = vmatprep.subr.mxu0 %v1171
        %2523 = vmatpush1.msra.mxu0 %v1170
        %2524 = vmatprep.subr.mxu0 %v1159
        %2525 = vmatpush1.msra.mxu0 %v1158
        %2526 = vmatprep.subr.mxu0 %v1147
        %2527 = vmatpush1.msra.mxu0 %v1146
        %2528 = vmatprep.subr.mxu0 %v1135
        %2529 = vmatpush1.msra.mxu0 %v1134
        %2530 = vmatprep.subr.mxu0 %v1123
        %2531 = vmatpush1.msra.mxu0 %v1122
        %2532 = vmatprep.subr.mxu0 %v1111
        %2533 = vmatpush1.msra.mxu0 %v1110
        %2534 = vmatprep.subr.mxu0 %v1099
        %2535 = vmatpush1.msra.mxu0 %v1098
        %2536 = vmatprep.subr.mxu0 %v1087
        %2537 = vmatpush1.msra.mxu0 %v1086
        %2538 = vmatprep.subr.mxu0 %v1075
        %2539 = vmatpush1.msra.mxu0 %v1074
        %2540 = vmatprep.subr.mxu0 %v1447
        %2541 = vmatpush2.msra.mxu0 %v1446
        %2542 = vmatprep.subr.mxu0 %v1435
        %2543 = vmatpush2.msra.mxu0 %v1434
        %2544 = vmatprep.subr.mxu0 %v1423
        %2545 = vmatpush2.msra.mxu0 %v1422
        %2546 = vmatprep.subr.mxu0 %v1411
        %2547 = vmatpush2.msra.mxu0 %v1410
        %2548 = vmatprep.subr.mxu0 %v1399
        %2549 = vmatpush2.msra.mxu0 %v1398
        %2550 = vmatprep.subr.mxu0 %v1387
        %2551 = vmatpush2.msra.mxu0 %v1386
        %2552 = vmatprep.subr.mxu0 %v1375
        %2553 = vmatpush2.msra.mxu0 %v1374
        %2554 = vmatprep.subr.mxu0 %v1363
        %2555 = vmatpush2.msra.mxu0 %v1362
        %2556 = vmatprep.subr.mxu0 %v1351
        %2557 = vmatpush2.msra.mxu0 %v1350
        %2558 = vmatprep.subr.mxu0 %v1339
        %2559 = vmatpush2.msra.mxu0 %v1338
        %2560 = vmatprep.subr.mxu0 %v1327
        %2561 = vmatpush2.msra.mxu0 %v1326
        %2562 = vmatprep.subr.mxu0 %v1315
        %2563 = vmatpush2.msra.mxu0 %v1314
        %2564 = vmatprep.subr.mxu0 %v1303
        %2565 = vmatpush2.msra.mxu0 %v1302
        %2566 = vmatprep.subr.mxu0 %v1291
        %2567 = vmatpush2.msra.mxu0 %v1290
        %2568 = vmatprep.subr.mxu0 %v1279
        %2569 = vmatpush2.msra.mxu0 %v1278
        %2570 = vmatprep.subr.mxu0 %v1267
        %2571 = vmatpush2.msra.mxu0 %v1266
        %2572 = vmatprep.mubr.f32.mxu0 %v297
        %2573 = vmatmul.mubr.f32.gmra.mxu0 %v296
        %v2574 = vpop.f32.mrf.mxu0
        %v2575 = vadd.f32 %v2504, %v2574
        %v2576 = vpop.f32.mrf.mxu0
        %v2577 = vadd.f32 %v2506, %v2576
        %2578 = vdwg.mxu0
        %2579 = vmatprep.subr.mxu0 %v489
        %2580 = vmatpush1.msra.mxu0 %v488
        %2581 = vmatprep.subr.mxu0 %v477
        %2582 = vmatpush1.msra.mxu0 %v476
        %2583 = vmatprep.subr.mxu0 %v465
        %2584 = vmatpush1.msra.mxu0 %v464
        %2585 = vmatprep.subr.mxu0 %v453
        %2586 = vmatpush1.msra.mxu0 %v452
        %2587 = vmatprep.subr.mxu0 %v441
        %2588 = vmatpush1.msra.mxu0 %v440
        %2589 = vmatprep.subr.mxu0 %v429
        %2590 = vmatpush1.msra.mxu0 %v428
        %2591 = vmatprep.subr.mxu0 %v417
        %2592 = vmatpush1.msra.mxu0 %v416
        %2593 = vmatprep.subr.mxu0 %v405
        %2594 = vmatpush1.msra.mxu0 %v404
        %2595 = vmatprep.subr.mxu0 %v393
        %2596 = vmatpush1.msra.mxu0 %v392
        %2597 = vmatprep.subr.mxu0 %v381
        %2598 = vmatpush1.msra.mxu0 %v380
        %2599 = vmatprep.subr.mxu0 %v369
        %2600 = vmatpush1.msra.mxu0 %v368
        %2601 = vmatprep.subr.mxu0 %v357
        %2602 = vmatpush1.msra.mxu0 %v356
        %2603 = vmatprep.subr.mxu0 %v345
        %2604 = vmatpush1.msra.mxu0 %v344
        %2605 = vmatprep.subr.mxu0 %v333
        %2606 = vmatpush1.msra.mxu0 %v332
        %2607 = vmatprep.subr.mxu0 %v321
        %2608 = vmatpush1.msra.mxu0 %v320
        %2609 = vmatprep.subr.mxu0 %v309
        %2610 = vmatpush1.msra.mxu0 %v308
        %2611 = vmatprep.subr.mxu0 %v681
        %2612 = vmatpush2.msra.mxu0 %v680
        %2613 = vmatprep.subr.mxu0 %v669
        %2614 = vmatpush2.msra.mxu0 %v668
        %2615 = vmatprep.subr.mxu0 %v657
        %2616 = vmatpush2.msra.mxu0 %v656
        %2617 = vmatprep.subr.mxu0 %v645
        %2618 = vmatpush2.msra.mxu0 %v644
        %2619 = vmatprep.subr.mxu0 %v633
        %2620 = vmatpush2.msra.mxu0 %v632
        %2621 = vmatprep.subr.mxu0 %v621
        %2622 = vmatpush2.msra.mxu0 %v620
        %2623 = vmatprep.subr.mxu0 %v609
        %2624 = vmatpush2.msra.mxu0 %v608
        %2625 = vmatprep.subr.mxu0 %v597
        %2626 = vmatpush2.msra.mxu0 %v596
        %2627 = vmatprep.subr.mxu0 %v585
        %2628 = vmatpush2.msra.mxu0 %v584
        %2629 = vmatprep.subr.mxu0 %v573
        %2630 = vmatpush2.msra.mxu0 %v572
        %2631 = vmatprep.subr.mxu0 %v561
        %2632 = vmatpush2.msra.mxu0 %v560
        %2633 = vmatprep.subr.mxu0 %v549
        %2634 = vmatpush2.msra.mxu0 %v548
        %2635 = vmatprep.subr.mxu0 %v537
        %2636 = vmatpush2.msra.mxu0 %v536
        %2637 = vmatprep.subr.mxu0 %v525
        %2638 = vmatpush2.msra.mxu0 %v524
        %2639 = vmatprep.subr.mxu0 %v513
        %2640 = vmatpush2.msra.mxu0 %v512
        %2641 = vmatprep.subr.mxu0 %v501
        %2642 = vmatpush2.msra.mxu0 %v500
        %2643 = vmatprep.mubr.f32.mxu0 %v293
        %2644 = vmatmul.mubr.f32.gmra.mxu0 %v292
        %v2645 = vpop.f32.mrf.mxu0
        %v2646 = vadd.f32 %v1497, %v2645
        %v2647 = vpop.f32.mrf.mxu0
        %v2648 = vadd.f32 %v1501, %v2647
        %2649 = vdwg.mxu0
        %2650 = vmatprep.subr.mxu0 %v873
        %2651 = vmatpush1.msra.mxu0 %v872
        %2652 = vmatprep.subr.mxu0 %v861
        %2653 = vmatpush1.msra.mxu0 %v860
        %2654 = vmatprep.subr.mxu0 %v849
        %2655 = vmatpush1.msra.mxu0 %v848
        %2656 = vmatprep.subr.mxu0 %v837
        %2657 = vmatpush1.msra.mxu0 %v836
        %2658 = vmatprep.subr.mxu0 %v825
        %2659 = vmatpush1.msra.mxu0 %v824
        %2660 = vmatprep.subr.mxu0 %v813
        %2661 = vmatpush1.msra.mxu0 %v812
        %2662 = vmatprep.subr.mxu0 %v801
        %2663 = vmatpush1.msra.mxu0 %v800
        %2664 = vmatprep.subr.mxu0 %v789
        %2665 = vmatpush1.msra.mxu0 %v788
        %2666 = vmatprep.subr.mxu0 %v777
        %2667 = vmatpush1.msra.mxu0 %v776
        %2668 = vmatprep.subr.mxu0 %v765
        %2669 = vmatpush1.msra.mxu0 %v764
        %2670 = vmatprep.subr.mxu0 %v753
        %2671 = vmatpush1.msra.mxu0 %v752
        %2672 = vmatprep.subr.mxu0 %v741
        %2673 = vmatpush1.msra.mxu0 %v740
        %2674 = vmatprep.subr.mxu0 %v729
        %2675 = vmatpush1.msra.mxu0 %v728
        %2676 = vmatprep.subr.mxu0 %v717
        %2677 = vmatpush1.msra.mxu0 %v716
        %2678 = vmatprep.subr.mxu0 %v705
        %2679 = vmatpush1.msra.mxu0 %v704
        %2680 = vmatprep.subr.mxu0 %v693
        %2681 = vmatpush1.msra.mxu0 %v692
        %2682 = vmatprep.subr.mxu0 %v1065
        %2683 = vmatpush2.msra.mxu0 %v1064
        %2684 = vmatprep.subr.mxu0 %v1053
        %2685 = vmatpush2.msra.mxu0 %v1052
        %2686 = vmatprep.subr.mxu0 %v1041
        %2687 = vmatpush2.msra.mxu0 %v1040
        %2688 = vmatprep.subr.mxu0 %v1029
        %2689 = vmatpush2.msra.mxu0 %v1028
        %2690 = vmatprep.subr.mxu0 %v1017
        %2691 = vmatpush2.msra.mxu0 %v1016
        %2692 = vmatprep.subr.mxu0 %v1005
        %2693 = vmatpush2.msra.mxu0 %v1004
        %2694 = vmatprep.subr.mxu0 %v993
        %2695 = vmatpush2.msra.mxu0 %v992
        %2696 = vmatprep.subr.mxu0 %v981
        %2697 = vmatpush2.msra.mxu0 %v980
        %2698 = vmatprep.subr.mxu0 %v969
        %2699 = vmatpush2.msra.mxu0 %v968
        %2700 = vmatprep.subr.mxu0 %v957
        %2701 = vmatpush2.msra.mxu0 %v956
        %2702 = vmatprep.subr.mxu0 %v945
        %2703 = vmatpush2.msra.mxu0 %v944
        %2704 = vmatprep.subr.mxu0 %v933
        %2705 = vmatpush2.msra.mxu0 %v932
        %2706 = vmatprep.subr.mxu0 %v921
        %2707 = vmatpush2.msra.mxu0 %v920
        %2708 = vmatprep.subr.mxu0 %v909
        %2709 = vmatpush2.msra.mxu0 %v908
        %2710 = vmatprep.subr.mxu0 %v897
        %2711 = vmatpush2.msra.mxu0 %v896
        %2712 = vmatprep.subr.mxu0 %v885
        %2713 = vmatpush2.msra.mxu0 %v884
        %2714 = vmatprep.mubr.f32.mxu0 %v295
        %2715 = vmatmul.mubr.f32.gmra.mxu0 %v294
        %v2716 = vpop.f32.mrf.mxu0
        %v2717 = vadd.f32 %v2646, %v2716
        %v2718 = vpop.f32.mrf.mxu0
        %v2719 = vadd.f32 %v2648, %v2718
        %2720 = vdwg.mxu0
        %2721 = vmatprep.subr.mxu0 %v1257
        %2722 = vmatpush1.msra.mxu0 %v1256
        %2723 = vmatprep.subr.mxu0 %v1245
        %2724 = vmatpush1.msra.mxu0 %v1244
        %2725 = vmatprep.subr.mxu0 %v1233
        %2726 = vmatpush1.msra.mxu0 %v1232
        %2727 = vmatprep.subr.mxu0 %v1221
        %2728 = vmatpush1.msra.mxu0 %v1220
        %2729 = vmatprep.subr.mxu0 %v1209
        %2730 = vmatpush1.msra.mxu0 %v1208
        %2731 = vmatprep.subr.mxu0 %v1197
        %2732 = vmatpush1.msra.mxu0 %v1196
        %2733 = vmatprep.subr.mxu0 %v1185
        %2734 = vmatpush1.msra.mxu0 %v1184
        %2735 = vmatprep.subr.mxu0 %v1173
        %2736 = vmatpush1.msra.mxu0 %v1172
        %2737 = vmatprep.subr.mxu0 %v1161
        %2738 = vmatpush1.msra.mxu0 %v1160
        %2739 = vmatprep.subr.mxu0 %v1149
        %2740 = vmatpush1.msra.mxu0 %v1148
        %2741 = vmatprep.subr.mxu0 %v1137
        %2742 = vmatpush1.msra.mxu0 %v1136
        %2743 = vmatprep.subr.mxu0 %v1125
        %2744 = vmatpush1.msra.mxu0 %v1124
        %2745 = vmatprep.subr.mxu0 %v1113
        %2746 = vmatpush1.msra.mxu0 %v1112
        %2747 = vmatprep.subr.mxu0 %v1101
        %2748 = vmatpush1.msra.mxu0 %v1100
        %2749 = vmatprep.subr.mxu0 %v1089
        %2750 = vmatpush1.msra.mxu0 %v1088
        %2751 = vmatprep.subr.mxu0 %v1077
        %2752 = vmatpush1.msra.mxu0 %v1076
        %2753 = vmatprep.subr.mxu0 %v1449
        %2754 = vmatpush2.msra.mxu0 %v1448
        %2755 = vmatprep.subr.mxu0 %v1437
        %2756 = vmatpush2.msra.mxu0 %v1436
        %2757 = vmatprep.subr.mxu0 %v1425
        %2758 = vmatpush2.msra.mxu0 %v1424
        %2759 = vmatprep.subr.mxu0 %v1413
        %2760 = vmatpush2.msra.mxu0 %v1412
        %2761 = vmatprep.subr.mxu0 %v1401
        %2762 = vmatpush2.msra.mxu0 %v1400
        %2763 = vmatprep.subr.mxu0 %v1389
        %2764 = vmatpush2.msra.mxu0 %v1388
        %2765 = vmatprep.subr.mxu0 %v1377
        %2766 = vmatpush2.msra.mxu0 %v1376
        %2767 = vmatprep.subr.mxu0 %v1365
        %2768 = vmatpush2.msra.mxu0 %v1364
        %2769 = vmatprep.subr.mxu0 %v1353
        %2770 = vmatpush2.msra.mxu0 %v1352
        %2771 = vmatprep.subr.mxu0 %v1341
        %2772 = vmatpush2.msra.mxu0 %v1340
        %2773 = vmatprep.subr.mxu0 %v1329
        %2774 = vmatpush2.msra.mxu0 %v1328
        %2775 = vmatprep.subr.mxu0 %v1317
        %2776 = vmatpush2.msra.mxu0 %v1316
        %2777 = vmatprep.subr.mxu0 %v1305
        %2778 = vmatpush2.msra.mxu0 %v1304
        %2779 = vmatprep.subr.mxu0 %v1293
        %2780 = vmatpush2.msra.mxu0 %v1292
        %2781 = vmatprep.subr.mxu0 %v1281
        %2782 = vmatpush2.msra.mxu0 %v1280
        %2783 = vmatprep.subr.mxu0 %v1269
        %2784 = vmatpush2.msra.mxu0 %v1268
        %2785 = vmatprep.mubr.f32.mxu0 %v297
        %2786 = vmatmul.mubr.f32.gmra.mxu0 %v296
        %v2787 = vpop.f32.mrf.mxu0
        %v2788 = vadd.f32 %v2717, %v2787
        %v2789 = vpop.f32.mrf.mxu0
        %v2790 = vadd.f32 %v2719, %v2789
        %2791 = vdwg.mxu0
        %v2792 = vmax.f32 %v1723, 0.0
        %v2793 = vmax.f32 %v1725, 0.0
        %v2794 = vmax.f32 %v1936, 0.0
        %v2795 = vmax.f32 %v1938, 0.0
        %v2796 = vmax.f32 %v2149, 0.0
        %v2797 = vmax.f32 %v2151, 0.0
        %v2798 = vmax.f32 %v2362, 0.0
        %v2799 = vmax.f32 %v2364, 0.0
        %v2800 = vmax.f32 %v2575, 0.0
        %v2801 = vmax.f32 %v2577, 0.0
        %v2802 = vmax.f32 %v2788, 0.0
        %v2803 = vmax.f32 %v2790, 0.0
        %s2804 = sadd.s32 %s23, %s24
        %s2805 = smul.u32 %s2804, 1536
        %v2806 = vld [vmem:[%s285] sm:$0xff]
        %s2807 = scalar_lea.vmem %s3, %s2805
        %v2808 = vld [vmem:[%s2807] sm:$0xff]
        %v2809 = vld [vmem:[%s2807 + $0x8] sm:$0xff]
        %v2810 = vld [vmem:[%s2807 + $0x10] sm:$0xff]
        %v2811 = vld [vmem:[%s2807 + $0x18] sm:$0xff]
        %v2812 = vld [vmem:[%s2807 + $0x20] sm:$0xff]
        %v2813 = vld [vmem:[%s2807 + $0x28] sm:$0xff]
        %v2814 = vld [vmem:[%s2807 + $0x30] sm:$0xff]
        %v2815 = vld [vmem:[%s2807 + $0x38] sm:$0xff]
        %v2816 = vld [vmem:[%s2807 + $0x40] sm:$0xff]
        %v2817 = vld [vmem:[%s2807 + $0x48] sm:$0xff]
        %v2818 = vld [vmem:[%s2807 + $0x50] sm:$0xff]
        %v2819 = vld [vmem:[%s2807 + $0x58] sm:$0xff]
        %v2820 = vld [vmem:[%s2807 + $0x60] sm:$0xff]
        %v2821 = vld [vmem:[%s2807 + $0x68] sm:$0xff]
        %v2822 = vld [vmem:[%s2807 + $0x70] sm:$0xff]
        %v2823 = vld [vmem:[%s2807 + $0x78] sm:$0xff]
        %v2824 = vld [vmem:[%s2807 + $0x80] sm:$0xff]
        %v2825 = vld [vmem:[%s2807 + $0x88] sm:$0xff]
        %v2826 = vld [vmem:[%s2807 + $0x90] sm:$0xff]
        %v2827 = vld [vmem:[%s2807 + $0x98] sm:$0xff]
        %v2828 = vld [vmem:[%s2807 + $0xa0] sm:$0xff]
        %v2829 = vld [vmem:[%s2807 + $0xa8] sm:$0xff]
        %v2830 = vld [vmem:[%s2807 + $0xb0] sm:$0xff]
        %v2831 = vld [vmem:[%s2807 + $0xb8] sm:$0xff]
        %v2832 = vld [vmem:[%s2807 + $0xc0] sm:$0xff]
        %v2833 = vld [vmem:[%s2807 + $0xc8] sm:$0xff]
        %v2834 = vld [vmem:[%s2807 + $0xd0] sm:$0xff]
        %v2835 = vld [vmem:[%s2807 + $0xd8] sm:$0xff]
        %v2836 = vld [vmem:[%s2807 + $0xe0] sm:$0xff]
        %v2837 = vld [vmem:[%s2807 + $0xe8] sm:$0xff]
        %v2838 = vld [vmem:[%s2807 + $0xf0] sm:$0xff]
        %v2839 = vld [vmem:[%s2807 + $0xf8] sm:$0xff]
        %v2840 = vld [vmem:[%s2807 + $0x100] sm:$0xff]
        %v2841 = vld [vmem:[%s2807 + $0x108] sm:$0xff]
        %v2842 = vld [vmem:[%s2807 + $0x110] sm:$0xff]
        %v2843 = vld [vmem:[%s2807 + $0x118] sm:$0xff]
        %v2844 = vld [vmem:[%s2807 + $0x120] sm:$0xff]
        %v2845 = vld [vmem:[%s2807 + $0x128] sm:$0xff]
        %v2846 = vld [vmem:[%s2807 + $0x130] sm:$0xff]
        %v2847 = vld [vmem:[%s2807 + $0x138] sm:$0xff]
        %v2848 = vld [vmem:[%s2807 + $0x140] sm:$0xff]
        %v2849 = vld [vmem:[%s2807 + $0x148] sm:$0xff]
        %v2850 = vld [vmem:[%s2807 + $0x150] sm:$0xff]
        %v2851 = vld [vmem:[%s2807 + $0x158] sm:$0xff]
        %v2852 = vld [vmem:[%s2807 + $0x160] sm:$0xff]
        %v2853 = vld [vmem:[%s2807 + $0x168] sm:$0xff]
        %v2854 = vld [vmem:[%s2807 + $0x170] sm:$0xff]
        %v2855 = vld [vmem:[%s2807 + $0x178] sm:$0xff]
        %v2856 = vld [vmem:[%s2807 + $0x180] sm:$0xff]
        %v2857 = vld [vmem:[%s2807 + $0x188] sm:$0xff]
        %v2858 = vld [vmem:[%s2807 + $0x190] sm:$0xff]
        %v2859 = vld [vmem:[%s2807 + $0x198] sm:$0xff]
        %v2860 = vld [vmem:[%s2807 + $0x1a0] sm:$0xff]
        %v2861 = vld [vmem:[%s2807 + $0x1a8] sm:$0xff]
        %v2862 = vld [vmem:[%s2807 + $0x1b0] sm:$0xff]
        %v2863 = vld [vmem:[%s2807 + $0x1b8] sm:$0xff]
        %v2864 = vld [vmem:[%s2807 + $0x1c0] sm:$0xff]
        %v2865 = vld [vmem:[%s2807 + $0x1c8] sm:$0xff]
        %v2866 = vld [vmem:[%s2807 + $0x1d0] sm:$0xff]
        %v2867 = vld [vmem:[%s2807 + $0x1d8] sm:$0xff]
        %v2868 = vld [vmem:[%s2807 + $0x1e0] sm:$0xff]
        %v2869 = vld [vmem:[%s2807 + $0x1e8] sm:$0xff]
        %v2870 = vld [vmem:[%s2807 + $0x1f0] sm:$0xff]
        %v2871 = vld [vmem:[%s2807 + $0x1f8] sm:$0xff]
        %v2872 = vld [vmem:[%s2807 + $0x200] sm:$0xff]
        %v2873 = vld [vmem:[%s2807 + $0x208] sm:$0xff]
        %v2874 = vld [vmem:[%s2807 + $0x210] sm:$0xff]
        %v2875 = vld [vmem:[%s2807 + $0x218] sm:$0xff]
        %v2876 = vld [vmem:[%s2807 + $0x220] sm:$0xff]
        %v2877 = vld [vmem:[%s2807 + $0x228] sm:$0xff]
        %v2878 = vld [vmem:[%s2807 + $0x230] sm:$0xff]
        %v2879 = vld [vmem:[%s2807 + $0x238] sm:$0xff]
        %v2880 = vld [vmem:[%s2807 + $0x240] sm:$0xff]
        %v2881 = vld [vmem:[%s2807 + $0x248] sm:$0xff]
        %v2882 = vld [vmem:[%s2807 + $0x250] sm:$0xff]
        %v2883 = vld [vmem:[%s2807 + $0x258] sm:$0xff]
        %v2884 = vld [vmem:[%s2807 + $0x260] sm:$0xff]
        %v2885 = vld [vmem:[%s2807 + $0x268] sm:$0xff]
        %v2886 = vld [vmem:[%s2807 + $0x270] sm:$0xff]
        %v2887 = vld [vmem:[%s2807 + $0x278] sm:$0xff]
        %v2888 = vld [vmem:[%s2807 + $0x280] sm:$0xff]
        %v2889 = vld [vmem:[%s2807 + $0x288] sm:$0xff]
        %v2890 = vld [vmem:[%s2807 + $0x290] sm:$0xff]
        %v2891 = vld [vmem:[%s2807 + $0x298] sm:$0xff]
        %v2892 = vld [vmem:[%s2807 + $0x2a0] sm:$0xff]
        %v2893 = vld [vmem:[%s2807 + $0x2a8] sm:$0xff]
        %v2894 = vld [vmem:[%s2807 + $0x2b0] sm:$0xff]
        %v2895 = vld [vmem:[%s2807 + $0x2b8] sm:$0xff]
        %v2896 = vld [vmem:[%s2807 + $0x2c0] sm:$0xff]
        %v2897 = vld [vmem:[%s2807 + $0x2c8] sm:$0xff]
        %v2898 = vld [vmem:[%s2807 + $0x2d0] sm:$0xff]
        %v2899 = vld [vmem:[%s2807 + $0x2d8] sm:$0xff]
        %v2900 = vld [vmem:[%s2807 + $0x2e0] sm:$0xff]
        %v2901 = vld [vmem:[%s2807 + $0x2e8] sm:$0xff]
        %v2902 = vld [vmem:[%s2807 + $0x2f0] sm:$0xff]
        %v2903 = vld [vmem:[%s2807 + $0x2f8] sm:$0xff]
        %v2904 = vld [vmem:[%s2807 + $0x300] sm:$0xff]
        %v2905 = vld [vmem:[%s2807 + $0x308] sm:$0xff]
        %v2906 = vld [vmem:[%s2807 + $0x310] sm:$0xff]
        %v2907 = vld [vmem:[%s2807 + $0x318] sm:$0xff]
        %v2908 = vld [vmem:[%s2807 + $0x320] sm:$0xff]
        %v2909 = vld [vmem:[%s2807 + $0x328] sm:$0xff]
        %v2910 = vld [vmem:[%s2807 + $0x330] sm:$0xff]
        %v2911 = vld [vmem:[%s2807 + $0x338] sm:$0xff]
        %v2912 = vld [vmem:[%s2807 + $0x340] sm:$0xff]
        %v2913 = vld [vmem:[%s2807 + $0x348] sm:$0xff]
        %v2914 = vld [vmem:[%s2807 + $0x350] sm:$0xff]
        %v2915 = vld [vmem:[%s2807 + $0x358] sm:$0xff]
        %v2916 = vld [vmem:[%s2807 + $0x360] sm:$0xff]
        %v2917 = vld [vmem:[%s2807 + $0x368] sm:$0xff]
        %v2918 = vld [vmem:[%s2807 + $0x370] sm:$0xff]
        %v2919 = vld [vmem:[%s2807 + $0x378] sm:$0xff]
        %v2920 = vld [vmem:[%s2807 + $0x380] sm:$0xff]
        %v2921 = vld [vmem:[%s2807 + $0x388] sm:$0xff]
        %v2922 = vld [vmem:[%s2807 + $0x390] sm:$0xff]
        %v2923 = vld [vmem:[%s2807 + $0x398] sm:$0xff]
        %v2924 = vld [vmem:[%s2807 + $0x3a0] sm:$0xff]
        %v2925 = vld [vmem:[%s2807 + $0x3a8] sm:$0xff]
        %v2926 = vld [vmem:[%s2807 + $0x3b0] sm:$0xff]
        %v2927 = vld [vmem:[%s2807 + $0x3b8] sm:$0xff]
        %v2928 = vld [vmem:[%s2807 + $0x3c0] sm:$0xff]
        %v2929 = vld [vmem:[%s2807 + $0x3c8] sm:$0xff]
        %v2930 = vld [vmem:[%s2807 + $0x3d0] sm:$0xff]
        %v2931 = vld [vmem:[%s2807 + $0x3d8] sm:$0xff]
        %v2932 = vld [vmem:[%s2807 + $0x3e0] sm:$0xff]
        %v2933 = vld [vmem:[%s2807 + $0x3e8] sm:$0xff]
        %v2934 = vld [vmem:[%s2807 + $0x3f0] sm:$0xff]
        %v2935 = vld [vmem:[%s2807 + $0x3f8] sm:$0xff]
        %v2936 = vld [vmem:[%s2807 + $0x400] sm:$0xff]
        %v2937 = vld [vmem:[%s2807 + $0x408] sm:$0xff]
        %v2938 = vld [vmem:[%s2807 + $0x410] sm:$0xff]
        %v2939 = vld [vmem:[%s2807 + $0x418] sm:$0xff]
        %v2940 = vld [vmem:[%s2807 + $0x420] sm:$0xff]
        %v2941 = vld [vmem:[%s2807 + $0x428] sm:$0xff]
        %v2942 = vld [vmem:[%s2807 + $0x430] sm:$0xff]
        %v2943 = vld [vmem:[%s2807 + $0x438] sm:$0xff]
        %v2944 = vld [vmem:[%s2807 + $0x440] sm:$0xff]
        %v2945 = vld [vmem:[%s2807 + $0x448] sm:$0xff]
        %v2946 = vld [vmem:[%s2807 + $0x450] sm:$0xff]
        %v2947 = vld [vmem:[%s2807 + $0x458] sm:$0xff]
        %v2948 = vld [vmem:[%s2807 + $0x460] sm:$0xff]
        %v2949 = vld [vmem:[%s2807 + $0x468] sm:$0xff]
        %v2950 = vld [vmem:[%s2807 + $0x470] sm:$0xff]
        %v2951 = vld [vmem:[%s2807 + $0x478] sm:$0xff]
        %v2952 = vld [vmem:[%s2807 + $0x480] sm:$0xff]
        %v2953 = vld [vmem:[%s2807 + $0x488] sm:$0xff]
        %v2954 = vld [vmem:[%s2807 + $0x490] sm:$0xff]
        %v2955 = vld [vmem:[%s2807 + $0x498] sm:$0xff]
        %v2956 = vld [vmem:[%s2807 + $0x4a0] sm:$0xff]
        %v2957 = vld [vmem:[%s2807 + $0x4a8] sm:$0xff]
        %v2958 = vld [vmem:[%s2807 + $0x4b0] sm:$0xff]
        %v2959 = vld [vmem:[%s2807 + $0x4b8] sm:$0xff]
        %v2960 = vld [vmem:[%s2807 + $0x4c0] sm:$0xff]
        %v2961 = vld [vmem:[%s2807 + $0x4c8] sm:$0xff]
        %v2962 = vld [vmem:[%s2807 + $0x4d0] sm:$0xff]
        %v2963 = vld [vmem:[%s2807 + $0x4d8] sm:$0xff]
        %v2964 = vld [vmem:[%s2807 + $0x4e0] sm:$0xff]
        %v2965 = vld [vmem:[%s2807 + $0x4e8] sm:$0xff]
        %v2966 = vld [vmem:[%s2807 + $0x4f0] sm:$0xff]
        %v2967 = vld [vmem:[%s2807 + $0x4f8] sm:$0xff]
        %v2968 = vld [vmem:[%s2807 + $0x500] sm:$0xff]
        %v2969 = vld [vmem:[%s2807 + $0x508] sm:$0xff]
        %v2970 = vld [vmem:[%s2807 + $0x510] sm:$0xff]
        %v2971 = vld [vmem:[%s2807 + $0x518] sm:$0xff]
        %v2972 = vld [vmem:[%s2807 + $0x520] sm:$0xff]
        %v2973 = vld [vmem:[%s2807 + $0x528] sm:$0xff]
        %v2974 = vld [vmem:[%s2807 + $0x530] sm:$0xff]
        %v2975 = vld [vmem:[%s2807 + $0x538] sm:$0xff]
        %v2976 = vld [vmem:[%s2807 + $0x540] sm:$0xff]
        %v2977 = vld [vmem:[%s2807 + $0x548] sm:$0xff]
        %v2978 = vld [vmem:[%s2807 + $0x550] sm:$0xff]
        %v2979 = vld [vmem:[%s2807 + $0x558] sm:$0xff]
        %v2980 = vld [vmem:[%s2807 + $0x560] sm:$0xff]
        %v2981 = vld [vmem:[%s2807 + $0x568] sm:$0xff]
        %v2982 = vld [vmem:[%s2807 + $0x570] sm:$0xff]
        %v2983 = vld [vmem:[%s2807 + $0x578] sm:$0xff]
        %v2984 = vld [vmem:[%s2807 + $0x580] sm:$0xff]
        %v2985 = vld [vmem:[%s2807 + $0x588] sm:$0xff]
        %v2986 = vld [vmem:[%s2807 + $0x590] sm:$0xff]
        %v2987 = vld [vmem:[%s2807 + $0x598] sm:$0xff]
        %v2988 = vld [vmem:[%s2807 + $0x5a0] sm:$0xff]
        %v2989 = vld [vmem:[%s2807 + $0x5a8] sm:$0xff]
        %v2990 = vld [vmem:[%s2807 + $0x5b0] sm:$0xff]
        %v2991 = vld [vmem:[%s2807 + $0x5b8] sm:$0xff]
        %v2992 = vld [vmem:[%s2807 + $0x5c0] sm:$0xff]
        %v2993 = vld [vmem:[%s2807 + $0x5c8] sm:$0xff]
        %v2994 = vld [vmem:[%s2807 + $0x5d0] sm:$0xff]
        %v2995 = vld [vmem:[%s2807 + $0x5d8] sm:$0xff]
        %v2996 = vld [vmem:[%s2807 + $0x5e0] sm:$0xff]
        %v2997 = vld [vmem:[%s2807 + $0x5e8] sm:$0xff]
        %v2998 = vld [vmem:[%s2807 + $0x5f0] sm:$0xff]
        %v2999 = vld [vmem:[%s2807 + $0x5f8] sm:$0xff]
        %3000 = vmatprep.subr.mxu0 0.0
        %3001 = vmatpush1.msra.mxu0 %v2823
        %3002 = vmatprep.subr.mxu0 0.0
        %3003 = vmatpush1.msra.mxu0 %v2822
        %3004 = vmatprep.subr.mxu0 0.0
        %3005 = vmatpush1.msra.mxu0 %v2821
        %3006 = vmatprep.subr.mxu0 0.0
        %3007 = vmatpush1.msra.mxu0 %v2820
        %3008 = vmatprep.subr.mxu0 0.0
        %3009 = vmatpush1.msra.mxu0 %v2819
        %3010 = vmatprep.subr.mxu0 0.0
        %3011 = vmatpush1.msra.mxu0 %v2818
        %3012 = vmatprep.subr.mxu0 0.0
        %3013 = vmatpush1.msra.mxu0 %v2817
        %3014 = vmatprep.subr.mxu0 0.0
        %3015 = vmatpush1.msra.mxu0 %v2816
        %3016 = vmatprep.subr.mxu0 0.0
        %3017 = vmatpush1.msra.mxu0 %v2815
        %3018 = vmatprep.subr.mxu0 0.0
        %3019 = vmatpush1.msra.mxu0 %v2814
        %3020 = vmatprep.subr.mxu0 0.0
        %3021 = vmatpush1.msra.mxu0 %v2813
        %3022 = vmatprep.subr.mxu0 0.0
        %3023 = vmatpush1.msra.mxu0 %v2812
        %3024 = vmatprep.subr.mxu0 0.0
        %3025 = vmatpush1.msra.mxu0 %v2811
        %3026 = vmatprep.subr.mxu0 0.0
        %3027 = vmatpush1.msra.mxu0 %v2810
        %3028 = vmatprep.subr.mxu0 0.0
        %3029 = vmatpush1.msra.mxu0 %v2809
        %3030 = vmatprep.subr.mxu0 0.0
        %3031 = vmatpush1.msra.mxu0 %v2808
        %3032 = vmatprep.subr.mxu0 0.0
        %3033 = vmatpush2.msra.mxu0 %v2839
        %3034 = vmatprep.subr.mxu0 0.0
        %3035 = vmatpush2.msra.mxu0 %v2838
        %3036 = vmatprep.subr.mxu0 0.0
        %3037 = vmatpush2.msra.mxu0 %v2837
        %3038 = vmatprep.subr.mxu0 0.0
        %3039 = vmatpush2.msra.mxu0 %v2836
        %3040 = vmatprep.subr.mxu0 0.0
        %3041 = vmatpush2.msra.mxu0 %v2835
        %3042 = vmatprep.subr.mxu0 0.0
        %3043 = vmatpush2.msra.mxu0 %v2834
        %3044 = vmatprep.subr.mxu0 0.0
        %3045 = vmatpush2.msra.mxu0 %v2833
        %3046 = vmatprep.subr.mxu0 0.0
        %3047 = vmatpush2.msra.mxu0 %v2832
        %3048 = vmatprep.subr.mxu0 0.0
        %3049 = vmatpush2.msra.mxu0 %v2831
        %3050 = vmatprep.subr.mxu0 0.0
        %3051 = vmatpush2.msra.mxu0 %v2830
        %3052 = vmatprep.subr.mxu0 0.0
        %3053 = vmatpush2.msra.mxu0 %v2829
        %3054 = vmatprep.subr.mxu0 0.0
        %3055 = vmatpush2.msra.mxu0 %v2828
        %3056 = vmatprep.subr.mxu0 0.0
        %3057 = vmatpush2.msra.mxu0 %v2827
        %3058 = vmatprep.subr.mxu0 0.0
        %3059 = vmatpush2.msra.mxu0 %v2826
        %3060 = vmatprep.subr.mxu0 0.0
        %3061 = vmatpush2.msra.mxu0 %v2825
        %3062 = vmatprep.subr.mxu0 0.0
        %3063 = vmatpush2.msra.mxu0 %v2824
        %3064 = vmatprep.mubr.f32.mxu0 %v2793
        %3065 = vmatmul.mubr.f32.gmra.mxu0 %v2792
        %v3066 = vpop.f32.mrf.mxu0
        %v3067 = vadd.f32 0.0, %v3066
        %v3068 = vpop.f32.mrf.mxu0
        %3069 = vdwg.mxu0
        %3070 = vmatprep.subr.mxu0 0.0
        %3071 = vmatpush1.msra.mxu0 %v2855
        %3072 = vmatprep.subr.mxu0 0.0
        %3073 = vmatpush1.msra.mxu0 %v2854
        %3074 = vmatprep.subr.mxu0 0.0
        %3075 = vmatpush1.msra.mxu0 %v2853
        %3076 = vmatprep.subr.mxu0 0.0
        %3077 = vmatpush1.msra.mxu0 %v2852
        %3078 = vmatprep.subr.mxu0 0.0
        %3079 = vmatpush1.msra.mxu0 %v2851
        %3080 = vmatprep.subr.mxu0 0.0
        %3081 = vmatpush1.msra.mxu0 %v2850
        %3082 = vmatprep.subr.mxu0 0.0
        %3083 = vmatpush1.msra.mxu0 %v2849
        %3084 = vmatprep.subr.mxu0 0.0
        %3085 = vmatpush1.msra.mxu0 %v2848
        %3086 = vmatprep.subr.mxu0 0.0
        %3087 = vmatpush1.msra.mxu0 %v2847
        %3088 = vmatprep.subr.mxu0 0.0
        %3089 = vmatpush1.msra.mxu0 %v2846
        %3090 = vmatprep.subr.mxu0 0.0
        %3091 = vmatpush1.msra.mxu0 %v2845
        %3092 = vmatprep.subr.mxu0 0.0
        %3093 = vmatpush1.msra.mxu0 %v2844
        %3094 = vmatprep.subr.mxu0 0.0
        %3095 = vmatpush1.msra.mxu0 %v2843
        %3096 = vmatprep.subr.mxu0 0.0
        %3097 = vmatpush1.msra.mxu0 %v2842
        %3098 = vmatprep.subr.mxu0 0.0
        %3099 = vmatpush1.msra.mxu0 %v2841
        %3100 = vmatprep.subr.mxu0 0.0
        %3101 = vmatpush1.msra.mxu0 %v2840
        %3102 = vmatprep.subr.mxu0 0.0
        %3103 = vmatpush2.msra.mxu0 %v2871
        %3104 = vmatprep.subr.mxu0 0.0
        %3105 = vmatpush2.msra.mxu0 %v2870
        %3106 = vmatprep.subr.mxu0 0.0
        %3107 = vmatpush2.msra.mxu0 %v2869
        %3108 = vmatprep.subr.mxu0 0.0
        %3109 = vmatpush2.msra.mxu0 %v2868
        %3110 = vmatprep.subr.mxu0 0.0
        %3111 = vmatpush2.msra.mxu0 %v2867
        %3112 = vmatprep.subr.mxu0 0.0
        %3113 = vmatpush2.msra.mxu0 %v2866
        %3114 = vmatprep.subr.mxu0 0.0
        %3115 = vmatpush2.msra.mxu0 %v2865
        %3116 = vmatprep.subr.mxu0 0.0
        %3117 = vmatpush2.msra.mxu0 %v2864
        %3118 = vmatprep.subr.mxu0 0.0
        %3119 = vmatpush2.msra.mxu0 %v2863
        %3120 = vmatprep.subr.mxu0 0.0
        %3121 = vmatpush2.msra.mxu0 %v2862
        %3122 = vmatprep.subr.mxu0 0.0
        %3123 = vmatpush2.msra.mxu0 %v2861
        %3124 = vmatprep.subr.mxu0 0.0
        %3125 = vmatpush2.msra.mxu0 %v2860
        %3126 = vmatprep.subr.mxu0 0.0
        %3127 = vmatpush2.msra.mxu0 %v2859
        %3128 = vmatprep.subr.mxu0 0.0
        %3129 = vmatpush2.msra.mxu0 %v2858
        %3130 = vmatprep.subr.mxu0 0.0
        %3131 = vmatpush2.msra.mxu0 %v2857
        %3132 = vmatprep.subr.mxu0 0.0
        %3133 = vmatpush2.msra.mxu0 %v2856
        %3134 = vmatprep.mubr.f32.mxu0 %v2795
        %3135 = vmatmul.mubr.f32.gmra.mxu0 %v2794
        %v3136 = vpop.f32.mrf.mxu0
        %v3137 = vadd.f32 %v3067, %v3136
        %v3138 = vpop.f32.mrf.mxu0
        %3139 = vdwg.mxu0
        %3140 = vmatprep.subr.mxu0 0.0
        %3141 = vmatpush1.msra.mxu0 %v2887
        %3142 = vmatprep.subr.mxu0 0.0
        %3143 = vmatpush1.msra.mxu0 %v2886
        %3144 = vmatprep.subr.mxu0 0.0
        %3145 = vmatpush1.msra.mxu0 %v2885
        %3146 = vmatprep.subr.mxu0 0.0
        %3147 = vmatpush1.msra.mxu0 %v2884
        %3148 = vmatprep.subr.mxu0 0.0
        %3149 = vmatpush1.msra.mxu0 %v2883
        %3150 = vmatprep.subr.mxu0 0.0
        %3151 = vmatpush1.msra.mxu0 %v2882
        %3152 = vmatprep.subr.mxu0 0.0
        %3153 = vmatpush1.msra.mxu0 %v2881
        %3154 = vmatprep.subr.mxu0 0.0
        %3155 = vmatpush1.msra.mxu0 %v2880
        %3156 = vmatprep.subr.mxu0 0.0
        %3157 = vmatpush1.msra.mxu0 %v2879
        %3158 = vmatprep.subr.mxu0 0.0
        %3159 = vmatpush1.msra.mxu0 %v2878
        %3160 = vmatprep.subr.mxu0 0.0
        %3161 = vmatpush1.msra.mxu0 %v2877
        %3162 = vmatprep.subr.mxu0 0.0
        %3163 = vmatpush1.msra.mxu0 %v2876
        %3164 = vmatprep.subr.mxu0 0.0
        %3165 = vmatpush1.msra.mxu0 %v2875
        %3166 = vmatprep.subr.mxu0 0.0
        %3167 = vmatpush1.msra.mxu0 %v2874
        %3168 = vmatprep.subr.mxu0 0.0
        %3169 = vmatpush1.msra.mxu0 %v2873
        %3170 = vmatprep.subr.mxu0 0.0
        %3171 = vmatpush1.msra.mxu0 %v2872
        %3172 = vmatprep.subr.mxu0 0.0
        %3173 = vmatpush2.msra.mxu0 %v2903
        %3174 = vmatprep.subr.mxu0 0.0
        %3175 = vmatpush2.msra.mxu0 %v2902
        %3176 = vmatprep.subr.mxu0 0.0
        %3177 = vmatpush2.msra.mxu0 %v2901
        %3178 = vmatprep.subr.mxu0 0.0
        %3179 = vmatpush2.msra.mxu0 %v2900
        %3180 = vmatprep.subr.mxu0 0.0
        %3181 = vmatpush2.msra.mxu0 %v2899
        %3182 = vmatprep.subr.mxu0 0.0
        %3183 = vmatpush2.msra.mxu0 %v2898
        %3184 = vmatprep.subr.mxu0 0.0
        %3185 = vmatpush2.msra.mxu0 %v2897
        %3186 = vmatprep.subr.mxu0 0.0
        %3187 = vmatpush2.msra.mxu0 %v2896
        %3188 = vmatprep.subr.mxu0 0.0
        %3189 = vmatpush2.msra.mxu0 %v2895
        %3190 = vmatprep.subr.mxu0 0.0
        %3191 = vmatpush2.msra.mxu0 %v2894
        %3192 = vmatprep.subr.mxu0 0.0
        %3193 = vmatpush2.msra.mxu0 %v2893
        %3194 = vmatprep.subr.mxu0 0.0
        %3195 = vmatpush2.msra.mxu0 %v2892
        %3196 = vmatprep.subr.mxu0 0.0
        %3197 = vmatpush2.msra.mxu0 %v2891
        %3198 = vmatprep.subr.mxu0 0.0
        %3199 = vmatpush2.msra.mxu0 %v2890
        %3200 = vmatprep.subr.mxu0 0.0
        %3201 = vmatpush2.msra.mxu0 %v2889
        %3202 = vmatprep.subr.mxu0 0.0
        %3203 = vmatpush2.msra.mxu0 %v2888
        %3204 = vmatprep.mubr.f32.mxu0 %v2797
        %3205 = vmatmul.mubr.f32.gmra.mxu0 %v2796
        %v3206 = vpop.f32.mrf.mxu0
        %v3207 = vadd.f32 %v3137, %v3206
        %v3208 = vpop.f32.mrf.mxu0
        %3209 = vdwg.mxu0
        %3210 = vmatprep.subr.mxu0 0.0
        %3211 = vmatpush1.msra.mxu0 %v2919
        %3212 = vmatprep.subr.mxu0 0.0
        %3213 = vmatpush1.msra.mxu0 %v2918
        %3214 = vmatprep.subr.mxu0 0.0
        %3215 = vmatpush1.msra.mxu0 %v2917
        %3216 = vmatprep.subr.mxu0 0.0
        %3217 = vmatpush1.msra.mxu0 %v2916
        %3218 = vmatprep.subr.mxu0 0.0
        %3219 = vmatpush1.msra.mxu0 %v2915
        %3220 = vmatprep.subr.mxu0 0.0
        %3221 = vmatpush1.msra.mxu0 %v2914
        %3222 = vmatprep.subr.mxu0 0.0
        %3223 = vmatpush1.msra.mxu0 %v2913
        %3224 = vmatprep.subr.mxu0 0.0
        %3225 = vmatpush1.msra.mxu0 %v2912
        %3226 = vmatprep.subr.mxu0 0.0
        %3227 = vmatpush1.msra.mxu0 %v2911
        %3228 = vmatprep.subr.mxu0 0.0
        %3229 = vmatpush1.msra.mxu0 %v2910
        %3230 = vmatprep.subr.mxu0 0.0
        %3231 = vmatpush1.msra.mxu0 %v2909
        %3232 = vmatprep.subr.mxu0 0.0
        %3233 = vmatpush1.msra.mxu0 %v2908
        %3234 = vmatprep.subr.mxu0 0.0
        %3235 = vmatpush1.msra.mxu0 %v2907
        %3236 = vmatprep.subr.mxu0 0.0
        %3237 = vmatpush1.msra.mxu0 %v2906
        %3238 = vmatprep.subr.mxu0 0.0
        %3239 = vmatpush1.msra.mxu0 %v2905
        %3240 = vmatprep.subr.mxu0 0.0
        %3241 = vmatpush1.msra.mxu0 %v2904
        %3242 = vmatprep.subr.mxu0 0.0
        %3243 = vmatpush2.msra.mxu0 %v2935
        %3244 = vmatprep.subr.mxu0 0.0
        %3245 = vmatpush2.msra.mxu0 %v2934
        %3246 = vmatprep.subr.mxu0 0.0
        %3247 = vmatpush2.msra.mxu0 %v2933
        %3248 = vmatprep.subr.mxu0 0.0
        %3249 = vmatpush2.msra.mxu0 %v2932
        %3250 = vmatprep.subr.mxu0 0.0
        %3251 = vmatpush2.msra.mxu0 %v2931
        %3252 = vmatprep.subr.mxu0 0.0
        %3253 = vmatpush2.msra.mxu0 %v2930
        %3254 = vmatprep.subr.mxu0 0.0
        %3255 = vmatpush2.msra.mxu0 %v2929
        %3256 = vmatprep.subr.mxu0 0.0
        %3257 = vmatpush2.msra.mxu0 %v2928
        %3258 = vmatprep.subr.mxu0 0.0
        %3259 = vmatpush2.msra.mxu0 %v2927
        %3260 = vmatprep.subr.mxu0 0.0
        %3261 = vmatpush2.msra.mxu0 %v2926
        %3262 = vmatprep.subr.mxu0 0.0
        %3263 = vmatpush2.msra.mxu0 %v2925
        %3264 = vmatprep.subr.mxu0 0.0
        %3265 = vmatpush2.msra.mxu0 %v2924
        %3266 = vmatprep.subr.mxu0 0.0
        %3267 = vmatpush2.msra.mxu0 %v2923
        %3268 = vmatprep.subr.mxu0 0.0
        %3269 = vmatpush2.msra.mxu0 %v2922
        %3270 = vmatprep.subr.mxu0 0.0
        %3271 = vmatpush2.msra.mxu0 %v2921
        %3272 = vmatprep.subr.mxu0 0.0
        %3273 = vmatpush2.msra.mxu0 %v2920
        %3274 = vmatprep.mubr.f32.mxu0 %v2799
        %3275 = vmatmul.mubr.f32.gmra.mxu0 %v2798
        %v3276 = vpop.f32.mrf.mxu0
        %v3277 = vadd.f32 %v3207, %v3276
        %v3278 = vpop.f32.mrf.mxu0
        %3279 = vdwg.mxu0
        %3280 = vmatprep.subr.mxu0 0.0
        %3281 = vmatpush1.msra.mxu0 %v2951
        %3282 = vmatprep.subr.mxu0 0.0
        %3283 = vmatpush1.msra.mxu0 %v2950
        %3284 = vmatprep.subr.mxu0 0.0
        %3285 = vmatpush1.msra.mxu0 %v2949
        %3286 = vmatprep.subr.mxu0 0.0
        %3287 = vmatpush1.msra.mxu0 %v2948
        %3288 = vmatprep.subr.mxu0 0.0
        %3289 = vmatpush1.msra.mxu0 %v2947
        %3290 = vmatprep.subr.mxu0 0.0
        %3291 = vmatpush1.msra.mxu0 %v2946
        %3292 = vmatprep.subr.mxu0 0.0
        %3293 = vmatpush1.msra.mxu0 %v2945
        %3294 = vmatprep.subr.mxu0 0.0
        %3295 = vmatpush1.msra.mxu0 %v2944
        %3296 = vmatprep.subr.mxu0 0.0
        %3297 = vmatpush1.msra.mxu0 %v2943
        %3298 = vmatprep.subr.mxu0 0.0
        %3299 = vmatpush1.msra.mxu0 %v2942
        %3300 = vmatprep.subr.mxu0 0.0
        %3301 = vmatpush1.msra.mxu0 %v2941
        %3302 = vmatprep.subr.mxu0 0.0
        %3303 = vmatpush1.msra.mxu0 %v2940
        %3304 = vmatprep.subr.mxu0 0.0
        %3305 = vmatpush1.msra.mxu0 %v2939
        %3306 = vmatprep.subr.mxu0 0.0
        %3307 = vmatpush1.msra.mxu0 %v2938
        %3308 = vmatprep.subr.mxu0 0.0
        %3309 = vmatpush1.msra.mxu0 %v2937
        %3310 = vmatprep.subr.mxu0 0.0
        %3311 = vmatpush1.msra.mxu0 %v2936
        %3312 = vmatprep.subr.mxu0 0.0
        %3313 = vmatpush2.msra.mxu0 %v2967
        %3314 = vmatprep.subr.mxu0 0.0
        %3315 = vmatpush2.msra.mxu0 %v2966
        %3316 = vmatprep.subr.mxu0 0.0
        %3317 = vmatpush2.msra.mxu0 %v2965
        %3318 = vmatprep.subr.mxu0 0.0
        %3319 = vmatpush2.msra.mxu0 %v2964
        %3320 = vmatprep.subr.mxu0 0.0
        %3321 = vmatpush2.msra.mxu0 %v2963
        %3322 = vmatprep.subr.mxu0 0.0
        %3323 = vmatpush2.msra.mxu0 %v2962
        %3324 = vmatprep.subr.mxu0 0.0
        %3325 = vmatpush2.msra.mxu0 %v2961
        %3326 = vmatprep.subr.mxu0 0.0
        %3327 = vmatpush2.msra.mxu0 %v2960
        %3328 = vmatprep.subr.mxu0 0.0
        %3329 = vmatpush2.msra.mxu0 %v2959
        %3330 = vmatprep.subr.mxu0 0.0
        %3331 = vmatpush2.msra.mxu0 %v2958
        %3332 = vmatprep.subr.mxu0 0.0
        %3333 = vmatpush2.msra.mxu0 %v2957
        %3334 = vmatprep.subr.mxu0 0.0
        %3335 = vmatpush2.msra.mxu0 %v2956
        %3336 = vmatprep.subr.mxu0 0.0
        %3337 = vmatpush2.msra.mxu0 %v2955
        %3338 = vmatprep.subr.mxu0 0.0
        %3339 = vmatpush2.msra.mxu0 %v2954
        %3340 = vmatprep.subr.mxu0 0.0
        %3341 = vmatpush2.msra.mxu0 %v2953
        %3342 = vmatprep.subr.mxu0 0.0
        %3343 = vmatpush2.msra.mxu0 %v2952
        %3344 = vmatprep.mubr.f32.mxu0 %v2801
        %3345 = vmatmul.mubr.f32.gmra.mxu0 %v2800
        %v3346 = vpop.f32.mrf.mxu0
        %v3347 = vadd.f32 %v3277, %v3346
        %v3348 = vpop.f32.mrf.mxu0
        %3349 = vdwg.mxu0
        %3350 = vmatprep.subr.mxu0 0.0
        %3351 = vmatpush1.msra.mxu0 %v2983
        %3352 = vmatprep.subr.mxu0 0.0
        %3353 = vmatpush1.msra.mxu0 %v2982
        %3354 = vmatprep.subr.mxu0 0.0
        %3355 = vmatpush1.msra.mxu0 %v2981
        %3356 = vmatprep.subr.mxu0 0.0
        %3357 = vmatpush1.msra.mxu0 %v2980
        %3358 = vmatprep.subr.mxu0 0.0
        %3359 = vmatpush1.msra.mxu0 %v2979
        %3360 = vmatprep.subr.mxu0 0.0
        %3361 = vmatpush1.msra.mxu0 %v2978
        %3362 = vmatprep.subr.mxu0 0.0
        %3363 = vmatpush1.msra.mxu0 %v2977
        %3364 = vmatprep.subr.mxu0 0.0
        %3365 = vmatpush1.msra.mxu0 %v2976
        %3366 = vmatprep.subr.mxu0 0.0
        %3367 = vmatpush1.msra.mxu0 %v2975
        %3368 = vmatprep.subr.mxu0 0.0
        %3369 = vmatpush1.msra.mxu0 %v2974
        %3370 = vmatprep.subr.mxu0 0.0
        %3371 = vmatpush1.msra.mxu0 %v2973
        %3372 = vmatprep.subr.mxu0 0.0
        %3373 = vmatpush1.msra.mxu0 %v2972
        %3374 = vmatprep.subr.mxu0 0.0
        %3375 = vmatpush1.msra.mxu0 %v2971
        %3376 = vmatprep.subr.mxu0 0.0
        %3377 = vmatpush1.msra.mxu0 %v2970
        %3378 = vmatprep.subr.mxu0 0.0
        %3379 = vmatpush1.msra.mxu0 %v2969
        %3380 = vmatprep.subr.mxu0 0.0
        %3381 = vmatpush1.msra.mxu0 %v2968
        %3382 = vmatprep.subr.mxu0 0.0
        %3383 = vmatpush2.msra.mxu0 %v2999
        %3384 = vmatprep.subr.mxu0 0.0
        %3385 = vmatpush2.msra.mxu0 %v2998
        %3386 = vmatprep.subr.mxu0 0.0
        %3387 = vmatpush2.msra.mxu0 %v2997
        %3388 = vmatprep.subr.mxu0 0.0
        %3389 = vmatpush2.msra.mxu0 %v2996
        %3390 = vmatprep.subr.mxu0 0.0
        %3391 = vmatpush2.msra.mxu0 %v2995
        %3392 = vmatprep.subr.mxu0 0.0
        %3393 = vmatpush2.msra.mxu0 %v2994
        %3394 = vmatprep.subr.mxu0 0.0
        %3395 = vmatpush2.msra.mxu0 %v2993
        %3396 = vmatprep.subr.mxu0 0.0
        %3397 = vmatpush2.msra.mxu0 %v2992
        %3398 = vmatprep.subr.mxu0 0.0
        %3399 = vmatpush2.msra.mxu0 %v2991
        %3400 = vmatprep.subr.mxu0 0.0
        %3401 = vmatpush2.msra.mxu0 %v2990
        %3402 = vmatprep.subr.mxu0 0.0
        %3403 = vmatpush2.msra.mxu0 %v2989
        %3404 = vmatprep.subr.mxu0 0.0
        %3405 = vmatpush2.msra.mxu0 %v2988
        %3406 = vmatprep.subr.mxu0 0.0
        %3407 = vmatpush2.msra.mxu0 %v2987
        %3408 = vmatprep.subr.mxu0 0.0
        %3409 = vmatpush2.msra.mxu0 %v2986
        %3410 = vmatprep.subr.mxu0 0.0
        %3411 = vmatpush2.msra.mxu0 %v2985
        %3412 = vmatprep.subr.mxu0 0.0
        %3413 = vmatpush2.msra.mxu0 %v2984
        %3414 = vmatprep.mubr.f32.mxu0 %v2803
        %3415 = vmatmul.mubr.f32.gmra.mxu0 %v2802
        %v3416 = vpop.f32.mrf.mxu0
        %v3417 = vadd.f32 %v3347, %v3416
        %v3418 = vpop.f32.mrf.mxu0
        %3419 = vdwg.mxu0
        %v3420 = vadd.f32 %v2806, %v3417
        %vm3421 = vcmask 39936
        %3422 = vst.msk [vmem:[%s285] sm:$0xff] %vm3421, %v3420
        %p3423 = scmp.lt.s32.totalorder %s23, 1
        %s3424 = scalar_select %p3423, %s23, 1
        %s3425 = smul.addr %s3424, 8
        %s3426 = scalar_lea.vmem %s4, %s3425
        // Predicated region
        $region53: #{tpu_custom_call.1} parent=35 // pred_check
          %p3427 = pneg %p147
        $region54: #{tpu_custom_call.1} parent=35 // pred_check_branch
          %3429 = sbr.rel (%p3427) target = $region56
        $region55: #{tpu_custom_call.1} parent=35 // pred_region
          _
        $region56: #{tpu_custom_call.1} parent=35 // pred_fallthru
          _
      $region36: #{tpu_custom_call.1} parent=5 // pred_fallthru
        _
      %p3430 = scmp.le.s32.totalorder 2, %s14
      // Predicated region
      $region57: #{tpu_custom_call.1} parent=5 // pred_check
        %p3431 = pneg %p3430
      $region58: #{tpu_custom_call.1} parent=5 // pred_check_branch
        %3433 = sbr.rel (%p3431) target = $region60
      $region59: #{tpu_custom_call.1} parent=5 // pred_region
        %s3434 = ssub.s32 %s14, 2
        // Predicated region
        $region61: #{tpu_custom_call.1} parent=59 // pred_check
          %p3435 = pneg %p153
        $region62: #{tpu_custom_call.1} parent=59 // pred_check_branch
          %3437 = sbr.rel (%p3435) target = $region64
        $region63: #{tpu_custom_call.1} parent=59 // pred_region
          %p3438 = scmp.lt.s32.totalorder %s25, 1
          %s3439 = scalar_select %p3438, %s25, 1
          %s3440 = smul.addr %s3439, 8
          %s3441 = scalar_lea.vmem %s4, %s3440
        $region64: #{tpu_custom_call.1} parent=59 // pred_fallthru
          _
      $region60: #{tpu_custom_call.1} parent=5 // pred_fallthru
        _
    $region6: #{tpu_custom_call.1} parent=1 // loop_footer
      %s18 = sadd.s32 1, %s14
    $region7: #{tpu_custom_call.1} parent=1 // loop_footer_branch
      %13 = sbr.rel target = $region3
    $region8: #{tpu_custom_call.1} parent=1 // loop_exit
      _
    %3442 = vsyncpa [#allocation3], 1
    %s3443 = scalar_lea.sflag [#allocation3], 1
    %3444 = vsyncpa %s3443, 1
    %3445 = vsyncpa [#allocation5], 1
    %s3446 = scalar_lea.sflag [#allocation5], 1
    %3447 = vsyncpa %s3446, 1

</llo_original>
